<compile_context>
chip_gen: v7x
topology: tpu7x:2x2x1
jax: 0.10.0
libtpu: 0.0.40
codegen_flags: <defaults>
</compile_context>

<pallas_src>
import math

import jax
import jax.numpy as jnp
from jax.experimental import pallas as pl
from jax.experimental.pallas import tpu as pltpu


# ----------------------------------------------------------------------------
# Fused Pallas kernel (one batch element per grid step)
# ----------------------------------------------------------------------------
def make_kernel(layer_blocks, hb, wb, planes):
    p = hb * wb  # flattened output spatial size (8*8 = 64)

    def kernel(xs2d_ref, res0_ref, w1_ref, ws_ref, bias_ref, out_ref, pad_ref):
        # xs2d_ref: (1, hb+1, wb+1, 4*Cin)  space-to-depth input, 1 zero block pad top/left
        # res0_ref: (1, p, planes)          DownsampleA residual for block 0
        # w1_ref:   (4, 4*Cin, planes)      bf16 stride-2 conv weight (BN scale folded)
        # ws_ref:   (2*lb-1, 9, planes, planes) bf16 stride-1 conv weights (BN scale folded)
        # bias_ref: (2*lb, planes)          folded BN biases (conv order)
        # out_ref:  (1, 1, planes)          pooled features for this batch element
        # pad_ref:  (hb+2, wb+2, planes) f32 VMEM halo buffer, reused by every stride-1 conv

        # Zero the halo buffer once; the interior is fully overwritten before each use,
        # the border stays zero (this provides the conv padding).
        pad_ref[...] = jnp.zeros_like(pad_ref)

        # ---- block 0 / conv_a: 3x3 stride-2 conv as 4 space-to-depth matmuls (MXU) ----
        acc = jnp.zeros((p, planes), jnp.float32)
        for bh in range(2):
            for bw in range(2):
                tap = xs2d_ref[0, bh:bh + hb, bw:bw + wb, :]
                tap = tap.reshape(p, tap.shape[-1]).astype(jnp.bfloat16)
                acc = acc + jnp.dot(tap, w1_ref[bh * 2 + bw],
                                    preferred_element_type=jnp.float32)
        h = jnp.maximum(acc + bias_ref[0:1, :], 0.0)          # bn_a (folded) + relu

        def conv3x3_s1(h_in, widx):
            """3x3 stride-1 pad-1 conv + folded-BN bias, on the VMEM-resident activation."""
            pad_ref[1:hb + 1, 1:wb + 1, :] = h_in.reshape(hb, wb, planes)
            a = jnp.zeros((p, planes), jnp.float32)
            for kh in range(3):
                for kw in range(3):
                    tap = pad_ref[kh:kh + hb, kw:kw + wb, :]
                    tap = tap.reshape(p, planes).astype(jnp.bfloat16)
                    a = a + jnp.dot(tap, ws_ref[widx, kh * 3 + kw],
                                    preferred_element_type=jnp.float32)
            return a + bias_ref[widx + 1:widx + 2, :]

        # ---- block 0 / conv_b + DownsampleA residual + relu ----
        x_res = jnp.maximum(conv3x3_s1(h, 0) + res0_ref[0], 0.0)

        # ---- remaining basic blocks (identity residual) ----
        widx = 1
        for _ in range(1, layer_blocks):
            ha = jnp.maximum(conv3x3_s1(x_res, widx), 0.0)
            x_res = jnp.maximum(conv3x3_s1(ha, widx + 1) + x_res, 0.0)
            widx += 2

        # ---- fused AvgPool2d(8): global spatial mean over the p rows ----
        out_ref[0] = jnp.mean(x_res, axis=0, keepdims=True)

    return kernel


# ----------------------------------------------------------------------------
# Parameter preparation (weight layout conversion + BN fold; all done once at init)
# ----------------------------------------------------------------------------
def conv1_weight_s2d(w_oihw, scale):
    """(Cout, Cin, 3, 3) stride-2 conv weight -> space-to-depth form (4, 4*Cin, Cout).

    Tap t = bh*2+bw is the 2x2-block offset in the (top/left padded) block grid;
    the s2d input channel is ordered (ph, pw, cin)."""
    Cout, Cin, _, _ = w_oihw.shape
    wf = w_oihw * scale[:, None, None, None]                     # fold BN scale
    w = jnp.zeros((2, 2, 2, 2, Cin, Cout), jnp.float32)          # (bh, bw, ph, pw, cin, cout)
    for bh in range(2):
        for bw in range(2):
            for ph in range(2):
                for pw in range(2):
                    kh = 2 * bh + ph - 1
                    kw = 2 * bw + pw - 1
                    if 0 <= kh < 3 and 0 <= kw < 3:
                        w = w.at[bh, bw, ph, pw].set(wf[:, :, kh, kw].T)
    return w.reshape(4, 4 * Cin, Cout)


def conv_weight_taps(w_oihw, scale):
    """(Cout, Cin, 3, 3) -> (9, Cin, Cout), tap index kh*3+kw, BN scale folded in."""
    Cout, Cin, _, _ = w_oihw.shape
    wf = w_oihw * scale[:, None, None, None]
    return jnp.transpose(wf, (2, 3, 1, 0)).reshape(9, Cin, Cout)


def init_params(key, depth=14, inplanes=32, planes=64):
    """Mirror the PyTorch module's __init__ (inference-mode BN folded)."""
    layer_blocks = (depth - 2) // 6
    eps = 1e-5
    # BatchNorm eval-mode fold.  Module init: gamma=1, beta=0, running_mean=0, running_var=1.
    gamma = jnp.ones((planes,), jnp.float32)
    beta = jnp.zeros((planes,), jnp.float32)
    running_mean = jnp.zeros((planes,), jnp.float32)
    running_var = jnp.ones((planes,), jnp.float32)
    scale = gamma / jnp.sqrt(running_var + eps)   # folded into conv weight columns
    bias = beta - running_mean * scale            # remains as the epilogue bias

    std = math.sqrt(2.0 / (3 * 3 * planes))       # normal_(0, sqrt(2/n)), n = kh*kw*Cout
    n_convs = 2 * layer_blocks
    keys = jax.random.split(key, n_convs)

    # Block 0 conv_a: inplanes -> planes, stride 2 (space-to-depth form).
    w0 = jax.random.normal(keys[0], (planes, inplanes, 3, 3), jnp.float32) * std
    w1 = conv1_weight_s2d(w0, scale).astype(jnp.bfloat16)

    # Remaining 3x3 stride-1 convs: planes -> planes.
    ws_list, bias_rows = [], [bias]
    for i in range(1, n_convs):
        w = jax.random.normal(keys[i], (planes, planes, 3, 3), jnp.float32) * std
        ws_list.append(conv_weight_taps(w, scale))
        bias_rows.append(bias)
    ws = jnp.stack(ws_list).astype(jnp.bfloat16)    # (2*layer_blocks-1, 9, planes, planes)
    biases = jnp.stack(bias_rows)                   # (2*layer_blocks, planes)
    return dict(w1=w1, ws=ws, bias=biases)


# ----------------------------------------------------------------------------
# Forward pass: tiny XLA glue (layout prep) + one fused pallas_call
# ----------------------------------------------------------------------------
def specialized_resnet_cifar_forward(x_nchw, params):
    """Input NCHW (as in PyTorch); returns flattened features (N, feature_dim)."""
    N, C, H, W = x_nchw.shape
    planes = params["ws"].shape[-1]
    layer_blocks = (params["ws"].shape[0] + 1) // 2
    hb, wb = H // 2, W // 2                               # spatial size after the stride-2 conv
    x = jnp.transpose(x_nchw, (0, 2, 3, 1))               # NCHW -> NHWC

    # Space-to-depth (2x2 spatial blocks -> channels) + one zero block at the top/left:
    # turns the stride-2 3x3 conv into 4 contiguous-slice matmuls inside the kernel.
    s2d = x.reshape(N, hb, 2, wb, 2, C).transpose(0, 1, 3, 2, 4, 5).reshape(N, hb, wb, 4 * C)
    xs2d = jnp.pad(s2d, ((0, 0), (1, 0), (1, 0), (0, 0)))

    # DownsampleA residual for block 0: AvgPool2d(kernel=1, stride=2) + zero-channel concat.
    sub = x[:, ::2, ::2, :]
    res0 = jnp.concatenate([sub, jnp.zeros_like(sub)], axis=-1).reshape(N, hb * wb, planes)

    kernel = make_kernel(layer_blocks, hb, wb, planes)
    out = pl.pallas_call(
        kernel,
        out_shape=jax.ShapeDtypeStruct((N, 1, planes), jnp.float32),
        grid=(N,),
        in_specs=[
            pl.BlockSpec((1, hb + 1, wb + 1, 4 * C), lambda n: (n, 0, 0, 0)),
            pl.BlockSpec((1, hb * wb, planes), lambda n: (n, 0, 0)),
            pl.BlockSpec(params["w1"].shape, lambda n: (0, 0, 0)),
            pl.BlockSpec(params["ws"].shape, lambda n: (0, 0, 0, 0)),
            pl.BlockSpec(params["bias"].shape, lambda n: (0, 0)),
        ],
        out_specs=pl.BlockSpec((1, 1, planes), lambda n: (n, 0, 0)),
        scratch_shapes=[pltpu.VMEM((hb + 2, wb + 2, planes), jnp.float32)],
        compiler_params=pltpu.CompilerParams(dimension_semantics=("parallel",)),
    )(xs2d, res0, params["w1"], params["ws"], params["bias"])
    return out.reshape(N, planes)


# ----------------------------------------------------------------------------
if __name__ == "__main__":
    key = jax.random.PRNGKey(0)
    k_params, k_x = jax.random.split(key)

    depth = 14          # layer_blocks = (14 - 2) // 6 = 2
    inplanes = 32
    params = init_params(k_params, depth=depth, inplanes=inplanes, planes=64)

    # base_feature_map from the generalized blocks: (N, 32, 16, 16) NCHW
    x = jax.random.normal(k_x, (2, inplanes, 16, 16), jnp.float32)

    feats = jax.jit(specialized_resnet_cifar_forward)(x, params)
    feats = jax.block_until_ready(feats)

    assert feats.shape == (2, 64), feats.shape
    assert bool(jnp.all(jnp.isfinite(feats)))
    print("KERNEL_OK")
</pallas_src>

<mosaic_0001>
module attributes {stable_mosaic.version = 11 : i64} {
  func.func @kernel(%arg0: i32, %arg1: memref<1x9x9x128xf32, #tpu.memory_space<vmem>>, %arg2: memref<1x64x64xf32, #tpu.memory_space<vmem>>, %arg3: memref<4x128x64xbf16, #tpu.memory_space<vmem>>, %arg4: memref<3x9x64x64xbf16, #tpu.memory_space<vmem>>, %arg5: memref<4x64xf32, #tpu.memory_space<vmem>>, %arg6: memref<1x1x64xf32, #tpu.memory_space<vmem>>, %arg7: memref<10x10x64xf32, #tpu.memory_space<vmem>>) attributes {dimension_semantics = [#tpu.dimension_semantics<parallel>], iteration_bounds = array<i64: 2>, scalar_prefetch = 0 : i64, scratch_operands = 1 : i64, tpu.core_type = #tpu.core_type<tc>, window_params = [{transform_indices = @transform_0, window_bounds = array<i64: 1, 9, 9, 128>}, {transform_indices = @transform_1, window_bounds = array<i64: 1, 64, 64>}, {pipeline_mode = #tpu.pipeline_mode<synchronous>, transform_indices = @transform_2, window_bounds = array<i64: 4, 128, 64>}, {pipeline_mode = #tpu.pipeline_mode<synchronous>, transform_indices = @transform_3, window_bounds = array<i64: 3, 9, 64, 64>}, {pipeline_mode = #tpu.pipeline_mode<synchronous>, transform_indices = @transform_4, window_bounds = array<i64: 4, 64>}, {transform_indices = @transform_5, window_bounds = array<i64: 1, 1, 64>}]} {
    %cst = arith.constant 0.000000e+00 : f32
    %0 = vector.broadcast %cst : f32 to vector<10x10x64xf32>
    %c0 = arith.constant 0 : index
    %c0_0 = arith.constant 0 : index
    %c0_1 = arith.constant 0 : index
    %1 = vector.load %arg7[%c0, %c0_0, %c0_1] : memref<10x10x64xf32, #tpu.memory_space<vmem>>, vector<10x10x64xf32>
    tpu.vector_store %arg7[%c0, %c0_0, %c0_1], %0 {strides = array<i32>} : memref<10x10x64xf32, #tpu.memory_space<vmem>>, vector<10x10x64xf32>,
    %cst_2 = arith.constant 0.000000e+00 : f32
    %2 = vector.broadcast %cst_2 : f32 to vector<64x64xf32>
    %c0_3 = arith.constant 0 : index
    %c0_4 = arith.constant 0 : index
    %c0_5 = arith.constant 0 : index
    %c0_6 = arith.constant 0 : index
    %3 = vector.load %arg1[%c0_3, %c0_4, %c0_5, %c0_6] : memref<1x9x9x128xf32, #tpu.memory_space<vmem>>, vector<1x8x8x128xf32>
    %4 = vector.shape_cast %3 : vector<1x8x8x128xf32> to vector<8x8x128xf32>
    %5 = vector.shape_cast %4 : vector<8x8x128xf32> to vector<64x128xf32>
    %6 = arith.truncf %5 : vector<64x128xf32> to vector<64x128xbf16>
    %c0_7 = arith.constant 0 : index
    %c0_8 = arith.constant 0 : index
    %c0_9 = arith.constant 0 : index
    %7 = vector.load %arg3[%c0_7, %c0_8, %c0_9] : memref<4x128x64xbf16, #tpu.memory_space<vmem>>, vector<1x128x64xbf16>
    %8 = vector.shape_cast %7 : vector<1x128x64xbf16> to vector<128x64xbf16>
    %cst_10 = arith.constant dense<0.000000e+00> : vector<64x64xf32>
    %9 = tpu.matmul %6, %8, %cst_10 {dimension_numbers = #tpu.dot_dimension_numbers<[1], [0], [0], [1], [0, 0, 1, 1], [], []>} : vector<64x128xbf16>, vector<128x64xbf16>, vector<64x64xf32> -> vector<64x64xf32>
    %10 = arith.addf %2, %9 : vector<64x64xf32>
    %c0_11 = arith.constant 0 : index
    %c0_12 = arith.constant 0 : index
    %c1 = arith.constant 1 : index
    %c0_13 = arith.constant 0 : index
    %11 = vector.load %arg1[%c0_11, %c0_12, %c1, %c0_13] : memref<1x9x9x128xf32, #tpu.memory_space<vmem>>, vector<1x8x8x128xf32>
    %12 = vector.shape_cast %11 : vector<1x8x8x128xf32> to vector<8x8x128xf32>
    %13 = vector.shape_cast %12 : vector<8x8x128xf32> to vector<64x128xf32>
    %14 = arith.truncf %13 : vector<64x128xf32> to vector<64x128xbf16>
    %c1_14 = arith.constant 1 : index
    %c0_15 = arith.constant 0 : index
    %c0_16 = arith.constant 0 : index
    %15 = vector.load %arg3[%c1_14, %c0_15, %c0_16] : memref<4x128x64xbf16, #tpu.memory_space<vmem>>, vector<1x128x64xbf16>
    %16 = vector.shape_cast %15 : vector<1x128x64xbf16> to vector<128x64xbf16>
    %cst_17 = arith.constant dense<0.000000e+00> : vector<64x64xf32>
    %17 = tpu.matmul %14, %16, %cst_17 {dimension_numbers = #tpu.dot_dimension_numbers<[1], [0], [0], [1], [0, 0, 1, 1], [], []>} : vector<64x128xbf16>, vector<128x64xbf16>, vector<64x64xf32> -> vector<64x64xf32>
    %18 = arith.addf %10, %17 : vector<64x64xf32>
    %c0_18 = arith.constant 0 : index
    %c1_19 = arith.constant 1 : index
    %c0_20 = arith.constant 0 : index
    %c0_21 = arith.constant 0 : index
    %19 = vector.load %arg1[%c0_18, %c1_19, %c0_20, %c0_21] : memref<1x9x9x128xf32, #tpu.memory_space<vmem>>, vector<1x8x8x128xf32>
    %20 = vector.shape_cast %19 : vector<1x8x8x128xf32> to vector<8x8x128xf32>
    %21 = vector.shape_cast %20 : vector<8x8x128xf32> to vector<64x128xf32>
    %22 = arith.truncf %21 : vector<64x128xf32> to vector<64x128xbf16>
    %c2 = arith.constant 2 : index
    %c0_22 = arith.constant 0 : index
    %c0_23 = arith.constant 0 : index
    %23 = vector.load %arg3[%c2, %c0_22, %c0_23] : memref<4x128x64xbf16, #tpu.memory_space<vmem>>, vector<1x128x64xbf16>
    %24 = vector.shape_cast %23 : vector<1x128x64xbf16> to vector<128x64xbf16>
    %cst_24 = arith.constant dense<0.000000e+00> : vector<64x64xf32>
    %25 = tpu.matmul %22, %24, %cst_24 {dimension_numbers = #tpu.dot_dimension_numbers<[1], [0], [0], [1], [0, 0, 1, 1], [], []>} : vector<64x128xbf16>, vector<128x64xbf16>, vector<64x64xf32> -> vector<64x64xf32>
    %26 = arith.addf %18, %25 : vector<64x64xf32>
    %c0_25 = arith.constant 0 : index
    %c1_26 = arith.constant 1 : index
    %c1_27 = arith.constant 1 : index
    %c0_28 = arith.constant 0 : index
    %27 = vector.load %arg1[%c0_25, %c1_26, %c1_27, %c0_28] : memref<1x9x9x128xf32, #tpu.memory_space<vmem>>, vector<1x8x8x128xf32>
    %28 = vector.shape_cast %27 : vector<1x8x8x128xf32> to vector<8x8x128xf32>
    %29 = vector.shape_cast %28 : vector<8x8x128xf32> to vector<64x128xf32>
    %30 = arith.truncf %29 : vector<64x128xf32> to vector<64x128xbf16>
    %c3 = arith.constant 3 : index
    %c0_29 = arith.constant 0 : index
    %c0_30 = arith.constant 0 : index
    %31 = vector.load %arg3[%c3, %c0_29, %c0_30] : memref<4x128x64xbf16, #tpu.memory_space<vmem>>, vector<1x128x64xbf16>
    %32 = vector.shape_cast %31 : vector<1x128x64xbf16> to vector<128x64xbf16>
    %cst_31 = arith.constant dense<0.000000e+00> : vector<64x64xf32>
    %33 = tpu.matmul %30, %32, %cst_31 {dimension_numbers = #tpu.dot_dimension_numbers<[1], [0], [0], [1], [0, 0, 1, 1], [], []>} : vector<64x128xbf16>, vector<128x64xbf16>, vector<64x64xf32> -> vector<64x64xf32>
    %34 = arith.addf %26, %33 : vector<64x64xf32>
    %c0_32 = arith.constant 0 : index
    %c0_33 = arith.constant 0 : index
    %35 = vector.load %arg5[%c0_32, %c0_33] : memref<4x64xf32, #tpu.memory_space<vmem>>, vector<1x64xf32>
    %36 = vector.broadcast %35 : vector<1x64xf32> to vector<64x64xf32>
    %37 = arith.addf %34, %36 : vector<64x64xf32>
    %cst_34 = arith.constant 0.000000e+00 : f32
    %38 = vector.broadcast %cst_34 : f32 to vector<64x64xf32>
    %39 = arith.maximumf %37, %38 : vector<64x64xf32>
    %40 = vector.shape_cast %39 : vector<64x64xf32> to vector<8x8x64xf32>
    %c1_35 = arith.constant 1 : index
    %c1_36 = arith.constant 1 : index
    %c0_37 = arith.constant 0 : index
    %41 = vector.load %arg7[%c1_35, %c1_36, %c0_37] : memref<10x10x64xf32, #tpu.memory_space<vmem>>, vector<8x8x64xf32>
    tpu.vector_store %arg7[%c1_35, %c1_36, %c0_37], %40 {strides = array<i32>} : memref<10x10x64xf32, #tpu.memory_space<vmem>>, vector<8x8x64xf32>,
    %cst_38 = arith.constant 0.000000e+00 : f32
    %42 = vector.broadcast %cst_38 : f32 to vector<64x64xf32>
    %c0_39 = arith.constant 0 : index
    %c0_40 = arith.constant 0 : index
    %c0_41 = arith.constant 0 : index
    %43 = vector.load %arg7[%c0_39, %c0_40, %c0_41] : memref<10x10x64xf32, #tpu.memory_space<vmem>>, vector<8x8x64xf32>
    %44 = vector.shape_cast %43 : vector<8x8x64xf32> to vector<64x64xf32>
    %45 = arith.truncf %44 : vector<64x64xf32> to vector<64x64xbf16>
    %c0_42 = arith.constant 0 : index
    %c0_43 = arith.constant 0 : index
    %c0_44 = arith.constant 0 : index
    %c0_45 = arith.constant 0 : index
    %46 = vector.load %arg4[%c0_42, %c0_43, %c0_44, %c0_45] : memref<3x9x64x64xbf16, #tpu.memory_space<vmem>>, vector<1x1x64x64xbf16>
    %47 = vector.shape_cast %46 : vector<1x1x64x64xbf16> to vector<64x64xbf16>
    %cst_46 = arith.constant dense<0.000000e+00> : vector<64x64xf32>
    %48 = tpu.matmul %45, %47, %cst_46 {dimension_numbers = #tpu.dot_dimension_numbers<[1], [0], [0], [1], [0, 0, 1, 1], [], []>} : vector<64x64xbf16>, vector<64x64xbf16>, vector<64x64xf32> -> vector<64x64xf32>
    %49 = arith.addf %42, %48 : vector<64x64xf32>
    %c0_47 = arith.constant 0 : index
    %c1_48 = arith.constant 1 : index
    %c0_49 = arith.constant 0 : index
    %50 = vector.load %arg7[%c0_47, %c1_48, %c0_49] : memref<10x10x64xf32, #tpu.memory_space<vmem>>, vector<8x8x64xf32>
    %51 = vector.shape_cast %50 : vector<8x8x64xf32> to vector<64x64xf32>
    %52 = arith.truncf %51 : vector<64x64xf32> to vector<64x64xbf16>
    %c0_50 = arith.constant 0 : index
    %c1_51 = arith.constant 1 : index
    %c0_52 = arith.constant 0 : index
    %c0_53 = arith.constant 0 : index
    %53 = vector.load %arg4[%c0_50, %c1_51, %c0_52, %c0_53] : memref<3x9x64x64xbf16, #tpu.memory_space<vmem>>, vector<1x1x64x64xbf16>
    %54 = vector.shape_cast %53 : vector<1x1x64x64xbf16> to vector<64x64xbf16>
    %cst_54 = arith.constant dense<0.000000e+00> : vector<64x64xf32>
    %55 = tpu.matmul %52, %54, %cst_54 {dimension_numbers = #tpu.dot_dimension_numbers<[1], [0], [0], [1], [0, 0, 1, 1], [], []>} : vector<64x64xbf16>, vector<64x64xbf16>, vector<64x64xf32> -> vector<64x64xf32>
    %56 = arith.addf %49, %55 : vector<64x64xf32>
    %c0_55 = arith.constant 0 : index
    %c2_56 = arith.constant 2 : index
    %c0_57 = arith.constant 0 : index
    %57 = vector.load %arg7[%c0_55, %c2_56, %c0_57] : memref<10x10x64xf32, #tpu.memory_space<vmem>>, vector<8x8x64xf32>
    %58 = vector.shape_cast %57 : vector<8x8x64xf32> to vector<64x64xf32>
    %59 = arith.truncf %58 : vector<64x64xf32> to vector<64x64xbf16>
    %c0_58 = arith.constant 0 : index
    %c2_59 = arith.constant 2 : index
    %c0_60 = arith.constant 0 : index
    %c0_61 = arith.constant 0 : index
    %60 = vector.load %arg4[%c0_58, %c2_59, %c0_60, %c0_61] : memref<3x9x64x64xbf16, #tpu.memory_space<vmem>>, vector<1x1x64x64xbf16>
    %61 = vector.shape_cast %60 : vector<1x1x64x64xbf16> to vector<64x64xbf16>
    %cst_62 = arith.constant dense<0.000000e+00> : vector<64x64xf32>
    %62 = tpu.matmul %59, %61, %cst_62 {dimension_numbers = #tpu.dot_dimension_numbers<[1], [0], [0], [1], [0, 0, 1, 1], [], []>} : vector<64x64xbf16>, vector<64x64xbf16>, vector<64x64xf32> -> vector<64x64xf32>
    %63 = arith.addf %56, %62 : vector<64x64xf32>
    %c1_63 = arith.constant 1 : index
    %c0_64 = arith.constant 0 : index
    %c0_65 = arith.constant 0 : index
    %64 = vector.load %arg7[%c1_63, %c0_64, %c0_65] : memref<10x10x64xf32, #tpu.memory_space<vmem>>, vector<8x8x64xf32>
    %65 = vector.shape_cast %64 : vector<8x8x64xf32> to vector<64x64xf32>
    %66 = arith.truncf %65 : vector<64x64xf32> to vector<64x64xbf16>
    %c0_66 = arith.constant 0 : index
    %c3_67 = arith.constant 3 : index
    %c0_68 = arith.constant 0 : index
    %c0_69 = arith.constant 0 : index
    %67 = vector.load %arg4[%c0_66, %c3_67, %c0_68, %c0_69] : memref<3x9x64x64xbf16, #tpu.memory_space<vmem>>, vector<1x1x64x64xbf16>
    %68 = vector.shape_cast %67 : vector<1x1x64x64xbf16> to vector<64x64xbf16>
    %cst_70 = arith.constant dense<0.000000e+00> : vector<64x64xf32>
    %69 = tpu.matmul %66, %68, %cst_70 {dimension_numbers = #tpu.dot_dimension_numbers<[1], [0], [0], [1], [0, 0, 1, 1], [], []>} : vector<64x64xbf16>, vector<64x64xbf16>, vector<64x64xf32> -> vector<64x64xf32>
    %70 = arith.addf %63, %69 : vector<64x64xf32>
    %c1_71 = arith.constant 1 : index
    %c1_72 = arith.constant 1 : index
    %c0_73 = arith.constant 0 : index
    %71 = vector.load %arg7[%c1_71, %c1_72, %c0_73] : memref<10x10x64xf32, #tpu.memory_space<vmem>>, vector<8x8x64xf32>
    %72 = vector.shape_cast %71 : vector<8x8x64xf32> to vector<64x64xf32>
    %73 = arith.truncf %72 : vector<64x64xf32> to vector<64x64xbf16>
    %c0_74 = arith.constant 0 : index
    %c4 = arith.constant 4 : index
    %c0_75 = arith.constant 0 : index
    %c0_76 = arith.constant 0 : index
    %74 = vector.load %arg4[%c0_74, %c4, %c0_75, %c0_76] : memref<3x9x64x64xbf16, #tpu.memory_space<vmem>>, vector<1x1x64x64xbf16>
    %75 = vector.shape_cast %74 : vector<1x1x64x64xbf16> to vector<64x64xbf16>
    %cst_77 = arith.constant dense<0.000000e+00> : vector<64x64xf32>
    %76 = tpu.matmul %73, %75, %cst_77 {dimension_numbers = #tpu.dot_dimension_numbers<[1], [0], [0], [1], [0, 0, 1, 1], [], []>} : vector<64x64xbf16>, vector<64x64xbf16>, vector<64x64xf32> -> vector<64x64xf32>
    %77 = arith.addf %70, %76 : vector<64x64xf32>
    %c1_78 = arith.constant 1 : index
    %c2_79 = arith.constant 2 : index
    %c0_80 = arith.constant 0 : index
    %78 = vector.load %arg7[%c1_78, %c2_79, %c0_80] : memref<10x10x64xf32, #tpu.memory_space<vmem>>, vector<8x8x64xf32>
    %79 = vector.shape_cast %78 : vector<8x8x64xf32> to vector<64x64xf32>
    %80 = arith.truncf %79 : vector<64x64xf32> to vector<64x64xbf16>
    %c0_81 = arith.constant 0 : index
    %c5 = arith.constant 5 : index
    %c0_82 = arith.constant 0 : index
    %c0_83 = arith.constant 0 : index
    %81 = vector.load %arg4[%c0_81, %c5, %c0_82, %c0_83] : memref<3x9x64x64xbf16, #tpu.memory_space<vmem>>, vector<1x1x64x64xbf16>
    %82 = vector.shape_cast %81 : vector<1x1x64x64xbf16> to vector<64x64xbf16>
    %cst_84 = arith.constant dense<0.000000e+00> : vector<64x64xf32>
    %83 = tpu.matmul %80, %82, %cst_84 {dimension_numbers = #tpu.dot_dimension_numbers<[1], [0], [0], [1], [0, 0, 1, 1], [], []>} : vector<64x64xbf16>, vector<64x64xbf16>, vector<64x64xf32> -> vector<64x64xf32>
    %84 = arith.addf %77, %83 : vector<64x64xf32>
    %c2_85 = arith.constant 2 : index
    %c0_86 = arith.constant 0 : index
    %c0_87 = arith.constant 0 : index
    %85 = vector.load %arg7[%c2_85, %c0_86, %c0_87] : memref<10x10x64xf32, #tpu.memory_space<vmem>>, vector<8x8x64xf32>
    %86 = vector.shape_cast %85 : vector<8x8x64xf32> to vector<64x64xf32>
    %87 = arith.truncf %86 : vector<64x64xf32> to vector<64x64xbf16>
    %c0_88 = arith.constant 0 : index
    %c6 = arith.constant 6 : index
    %c0_89 = arith.constant 0 : index
    %c0_90 = arith.constant 0 : index
    %88 = vector.load %arg4[%c0_88, %c6, %c0_89, %c0_90] : memref<3x9x64x64xbf16, #tpu.memory_space<vmem>>, vector<1x1x64x64xbf16>
    %89 = vector.shape_cast %88 : vector<1x1x64x64xbf16> to vector<64x64xbf16>
    %cst_91 = arith.constant dense<0.000000e+00> : vector<64x64xf32>
    %90 = tpu.matmul %87, %89, %cst_91 {dimension_numbers = #tpu.dot_dimension_numbers<[1], [0], [0], [1], [0, 0, 1, 1], [], []>} : vector<64x64xbf16>, vector<64x64xbf16>, vector<64x64xf32> -> vector<64x64xf32>
    %91 = arith.addf %84, %90 : vector<64x64xf32>
    %c2_92 = arith.constant 2 : index
    %c1_93 = arith.constant 1 : index
    %c0_94 = arith.constant 0 : index
    %92 = vector.load %arg7[%c2_92, %c1_93, %c0_94] : memref<10x10x64xf32, #tpu.memory_space<vmem>>, vector<8x8x64xf32>
    %93 = vector.shape_cast %92 : vector<8x8x64xf32> to vector<64x64xf32>
    %94 = arith.truncf %93 : vector<64x64xf32> to vector<64x64xbf16>
    %c0_95 = arith.constant 0 : index
    %c7 = arith.constant 7 : index
    %c0_96 = arith.constant 0 : index
    %c0_97 = arith.constant 0 : index
    %95 = vector.load %arg4[%c0_95, %c7, %c0_96, %c0_97] : memref<3x9x64x64xbf16, #tpu.memory_space<vmem>>, vector<1x1x64x64xbf16>
    %96 = vector.shape_cast %95 : vector<1x1x64x64xbf16> to vector<64x64xbf16>
    %cst_98 = arith.constant dense<0.000000e+00> : vector<64x64xf32>
    %97 = tpu.matmul %94, %96, %cst_98 {dimension_numbers = #tpu.dot_dimension_numbers<[1], [0], [0], [1], [0, 0, 1, 1], [], []>} : vector<64x64xbf16>, vector<64x64xbf16>, vector<64x64xf32> -> vector<64x64xf32>
    %98 = arith.addf %91, %97 : vector<64x64xf32>
    %c2_99 = arith.constant 2 : index
    %c2_100 = arith.constant 2 : index
    %c0_101 = arith.constant 0 : index
    %99 = vector.load %arg7[%c2_99, %c2_100, %c0_101] : memref<10x10x64xf32, #tpu.memory_space<vmem>>, vector<8x8x64xf32>
    %100 = vector.shape_cast %99 : vector<8x8x64xf32> to vector<64x64xf32>
    %101 = arith.truncf %100 : vector<64x64xf32> to vector<64x64xbf16>
    %c0_102 = arith.constant 0 : index
    %c8 = arith.constant 8 : index
    %c0_103 = arith.constant 0 : index
    %c0_104 = arith.constant 0 : index
    %102 = vector.load %arg4[%c0_102, %c8, %c0_103, %c0_104] : memref<3x9x64x64xbf16, #tpu.memory_space<vmem>>, vector<1x1x64x64xbf16>
    %103 = vector.shape_cast %102 : vector<1x1x64x64xbf16> to vector<64x64xbf16>
    %cst_105 = arith.constant dense<0.000000e+00> : vector<64x64xf32>
    %104 = tpu.matmul %101, %103, %cst_105 {dimension_numbers = #tpu.dot_dimension_numbers<[1], [0], [0], [1], [0, 0, 1, 1], [], []>} : vector<64x64xbf16>, vector<64x64xbf16>, vector<64x64xf32> -> vector<64x64xf32>
    %105 = arith.addf %98, %104 : vector<64x64xf32>
    %c1_106 = arith.constant 1 : index
    %c0_107 = arith.constant 0 : index
    %106 = vector.load %arg5[%c1_106, %c0_107] : memref<4x64xf32, #tpu.memory_space<vmem>>, vector<1x64xf32>
    %107 = vector.broadcast %106 : vector<1x64xf32> to vector<64x64xf32>
    %108 = arith.addf %105, %107 : vector<64x64xf32>
    %c0_108 = arith.constant 0 : index
    %c0_109 = arith.constant 0 : index
    %c0_110 = arith.constant 0 : index
    %109 = vector.load %arg2[%c0_108, %c0_109, %c0_110] : memref<1x64x64xf32, #tpu.memory_space<vmem>>, vector<1x64x64xf32>
    %110 = vector.shape_cast %109 : vector<1x64x64xf32> to vector<64x64xf32>
    %111 = arith.addf %108, %110 : vector<64x64xf32>
    %cst_111 = arith.constant 0.000000e+00 : f32
    %112 = vector.broadcast %cst_111 : f32 to vector<64x64xf32>
    %113 = arith.maximumf %111, %112 : vector<64x64xf32>
    %114 = vector.shape_cast %113 : vector<64x64xf32> to vector<8x8x64xf32>
    %c1_112 = arith.constant 1 : index
    %c1_113 = arith.constant 1 : index
    %c0_114 = arith.constant 0 : index
    %115 = vector.load %arg7[%c1_112, %c1_113, %c0_114] : memref<10x10x64xf32, #tpu.memory_space<vmem>>, vector<8x8x64xf32>
    tpu.vector_store %arg7[%c1_112, %c1_113, %c0_114], %114 {strides = array<i32>} : memref<10x10x64xf32, #tpu.memory_space<vmem>>, vector<8x8x64xf32>,
    %cst_115 = arith.constant 0.000000e+00 : f32
    %116 = vector.broadcast %cst_115 : f32 to vector<64x64xf32>
    %c0_116 = arith.constant 0 : index
    %c0_117 = arith.constant 0 : index
    %c0_118 = arith.constant 0 : index
    %117 = vector.load %arg7[%c0_116, %c0_117, %c0_118] : memref<10x10x64xf32, #tpu.memory_space<vmem>>, vector<8x8x64xf32>
    %118 = vector.shape_cast %117 : vector<8x8x64xf32> to vector<64x64xf32>
    %119 = arith.truncf %118 : vector<64x64xf32> to vector<64x64xbf16>
    %c1_119 = arith.constant 1 : index
    %c0_120 = arith.constant 0 : index
    %c0_121 = arith.constant 0 : index
    %c0_122 = arith.constant 0 : index
    %120 = vector.load %arg4[%c1_119, %c0_120, %c0_121, %c0_122] : memref<3x9x64x64xbf16, #tpu.memory_space<vmem>>, vector<1x1x64x64xbf16>
    %121 = vector.shape_cast %120 : vector<1x1x64x64xbf16> to vector<64x64xbf16>
    %cst_123 = arith.constant dense<0.000000e+00> : vector<64x64xf32>
    %122 = tpu.matmul %119, %121, %cst_123 {dimension_numbers = #tpu.dot_dimension_numbers<[1], [0], [0], [1], [0, 0, 1, 1], [], []>} : vector<64x64xbf16>, vector<64x64xbf16>, vector<64x64xf32> -> vector<64x64xf32>
    %123 = arith.addf %116, %122 : vector<64x64xf32>
    %c0_124 = arith.constant 0 : index
    %c1_125 = arith.constant 1 : index
    %c0_126 = arith.constant 0 : index
    %124 = vector.load %arg7[%c0_124, %c1_125, %c0_126] : memref<10x10x64xf32, #tpu.memory_space<vmem>>, vector<8x8x64xf32>
    %125 = vector.shape_cast %124 : vector<8x8x64xf32> to vector<64x64xf32>
    %126 = arith.truncf %125 : vector<64x64xf32> to vector<64x64xbf16>
    %c1_127 = arith.constant 1 : index
    %c1_128 = arith.constant 1 : index
    %c0_129 = arith.constant 0 : index
    %c0_130 = arith.constant 0 : index
    %127 = vector.load %arg4[%c1_127, %c1_128, %c0_129, %c0_130] : memref<3x9x64x64xbf16, #tpu.memory_space<vmem>>, vector<1x1x64x64xbf16>
    %128 = vector.shape_cast %127 : vector<1x1x64x64xbf16> to vector<64x64xbf16>
    %cst_131 = arith.constant dense<0.000000e+00> : vector<64x64xf32>
    %129 = tpu.matmul %126, %128, %cst_131 {dimension_numbers = #tpu.dot_dimension_numbers<[1], [0], [0], [1], [0, 0, 1, 1], [], []>} : vector<64x64xbf16>, vector<64x64xbf16>, vector<64x64xf32> -> vector<64x64xf32>
    %130 = arith.addf %123, %129 : vector<64x64xf32>
    %c0_132 = arith.constant 0 : index
    %c2_133 = arith.constant 2 : index
    %c0_134 = arith.constant 0 : index
    %131 = vector.load %arg7[%c0_132, %c2_133, %c0_134] : memref<10x10x64xf32, #tpu.memory_space<vmem>>, vector<8x8x64xf32>
    %132 = vector.shape_cast %131 : vector<8x8x64xf32> to vector<64x64xf32>
    %133 = arith.truncf %132 : vector<64x64xf32> to vector<64x64xbf16>
    %c1_135 = arith.constant 1 : index
    %c2_136 = arith.constant 2 : index
    %c0_137 = arith.constant 0 : index
    %c0_138 = arith.constant 0 : index
    %134 = vector.load %arg4[%c1_135, %c2_136, %c0_137, %c0_138] : memref<3x9x64x64xbf16, #tpu.memory_space<vmem>>, vector<1x1x64x64xbf16>
    %135 = vector.shape_cast %134 : vector<1x1x64x64xbf16> to vector<64x64xbf16>
    %cst_139 = arith.constant dense<0.000000e+00> : vector<64x64xf32>
    %136 = tpu.matmul %133, %135, %cst_139 {dimension_numbers = #tpu.dot_dimension_numbers<[1], [0], [0], [1], [0, 0, 1, 1], [], []>} : vector<64x64xbf16>, vector<64x64xbf16>, vector<64x64xf32> -> vector<64x64xf32>
    %137 = arith.addf %130, %136 : vector<64x64xf32>
    %c1_140 = arith.constant 1 : index
    %c0_141 = arith.constant 0 : index
    %c0_142 = arith.constant 0 : index
    %138 = vector.load %arg7[%c1_140, %c0_141, %c0_142] : memref<10x10x64xf32, #tpu.memory_space<vmem>>, vector<8x8x64xf32>
    %139 = vector.shape_cast %138 : vector<8x8x64xf32> to vector<64x64xf32>
    %140 = arith.truncf %139 : vector<64x64xf32> to vector<64x64xbf16>
    %c1_143 = arith.constant 1 : index
    %c3_144 = arith.constant 3 : index
    %c0_145 = arith.constant 0 : index
    %c0_146 = arith.constant 0 : index
    %141 = vector.load %arg4[%c1_143, %c3_144, %c0_145, %c0_146] : memref<3x9x64x64xbf16, #tpu.memory_space<vmem>>, vector<1x1x64x64xbf16>
    %142 = vector.shape_cast %141 : vector<1x1x64x64xbf16> to vector<64x64xbf16>
    %cst_147 = arith.constant dense<0.000000e+00> : vector<64x64xf32>
    %143 = tpu.matmul %140, %142, %cst_147 {dimension_numbers = #tpu.dot_dimension_numbers<[1], [0], [0], [1], [0, 0, 1, 1], [], []>} : vector<64x64xbf16>, vector<64x64xbf16>, vector<64x64xf32> -> vector<64x64xf32>
    %144 = arith.addf %137, %143 : vector<64x64xf32>
    %c1_148 = arith.constant 1 : index
    %c1_149 = arith.constant 1 : index
    %c0_150 = arith.constant 0 : index
    %145 = vector.load %arg7[%c1_148, %c1_149, %c0_150] : memref<10x10x64xf32, #tpu.memory_space<vmem>>, vector<8x8x64xf32>
    %146 = vector.shape_cast %145 : vector<8x8x64xf32> to vector<64x64xf32>
    %147 = arith.truncf %146 : vector<64x64xf32> to vector<64x64xbf16>
    %c1_151 = arith.constant 1 : index
    %c4_152 = arith.constant 4 : index
    %c0_153 = arith.constant 0 : index
    %c0_154 = arith.constant 0 : index
    %148 = vector.load %arg4[%c1_151, %c4_152, %c0_153, %c0_154] : memref<3x9x64x64xbf16, #tpu.memory_space<vmem>>, vector<1x1x64x64xbf16>
    %149 = vector.shape_cast %148 : vector<1x1x64x64xbf16> to vector<64x64xbf16>
    %cst_155 = arith.constant dense<0.000000e+00> : vector<64x64xf32>
    %150 = tpu.matmul %147, %149, %cst_155 {dimension_numbers = #tpu.dot_dimension_numbers<[1], [0], [0], [1], [0, 0, 1, 1], [], []>} : vector<64x64xbf16>, vector<64x64xbf16>, vector<64x64xf32> -> vector<64x64xf32>
    %151 = arith.addf %144, %150 : vector<64x64xf32>
    %c1_156 = arith.constant 1 : index
    %c2_157 = arith.constant 2 : index
    %c0_158 = arith.constant 0 : index
    %152 = vector.load %arg7[%c1_156, %c2_157, %c0_158] : memref<10x10x64xf32, #tpu.memory_space<vmem>>, vector<8x8x64xf32>
    %153 = vector.shape_cast %152 : vector<8x8x64xf32> to vector<64x64xf32>
    %154 = arith.truncf %153 : vector<64x64xf32> to vector<64x64xbf16>
    %c1_159 = arith.constant 1 : index
    %c5_160 = arith.constant 5 : index
    %c0_161 = arith.constant 0 : index
    %c0_162 = arith.constant 0 : index
    %155 = vector.load %arg4[%c1_159, %c5_160, %c0_161, %c0_162] : memref<3x9x64x64xbf16, #tpu.memory_space<vmem>>, vector<1x1x64x64xbf16>
    %156 = vector.shape_cast %155 : vector<1x1x64x64xbf16> to vector<64x64xbf16>
    %cst_163 = arith.constant dense<0.000000e+00> : vector<64x64xf32>
    %157 = tpu.matmul %154, %156, %cst_163 {dimension_numbers = #tpu.dot_dimension_numbers<[1], [0], [0], [1], [0, 0, 1, 1], [], []>} : vector<64x64xbf16>, vector<64x64xbf16>, vector<64x64xf32> -> vector<64x64xf32>
    %158 = arith.addf %151, %157 : vector<64x64xf32>
    %c2_164 = arith.constant 2 : index
    %c0_165 = arith.constant 0 : index
    %c0_166 = arith.constant 0 : index
    %159 = vector.load %arg7[%c2_164, %c0_165, %c0_166] : memref<10x10x64xf32, #tpu.memory_space<vmem>>, vector<8x8x64xf32>
    %160 = vector.shape_cast %159 : vector<8x8x64xf32> to vector<64x64xf32>
    %161 = arith.truncf %160 : vector<64x64xf32> to vector<64x64xbf16>
    %c1_167 = arith.constant 1 : index
    %c6_168 = arith.constant 6 : index
    %c0_169 = arith.constant 0 : index
    %c0_170 = arith.constant 0 : index
    %162 = vector.load %arg4[%c1_167, %c6_168, %c0_169, %c0_170] : memref<3x9x64x64xbf16, #tpu.memory_space<vmem>>, vector<1x1x64x64xbf16>
    %163 = vector.shape_cast %162 : vector<1x1x64x64xbf16> to vector<64x64xbf16>
    %cst_171 = arith.constant dense<0.000000e+00> : vector<64x64xf32>
    %164 = tpu.matmul %161, %163, %cst_171 {dimension_numbers = #tpu.dot_dimension_numbers<[1], [0], [0], [1], [0, 0, 1, 1], [], []>} : vector<64x64xbf16>, vector<64x64xbf16>, vector<64x64xf32> -> vector<64x64xf32>
    %165 = arith.addf %158, %164 : vector<64x64xf32>
    %c2_172 = arith.constant 2 : index
    %c1_173 = arith.constant 1 : index
    %c0_174 = arith.constant 0 : index
    %166 = vector.load %arg7[%c2_172, %c1_173, %c0_174] : memref<10x10x64xf32, #tpu.memory_space<vmem>>, vector<8x8x64xf32>
    %167 = vector.shape_cast %166 : vector<8x8x64xf32> to vector<64x64xf32>
    %168 = arith.truncf %167 : vector<64x64xf32> to vector<64x64xbf16>
    %c1_175 = arith.constant 1 : index
    %c7_176 = arith.constant 7 : index
    %c0_177 = arith.constant 0 : index
    %c0_178 = arith.constant 0 : index
    %169 = vector.load %arg4[%c1_175, %c7_176, %c0_177, %c0_178] : memref<3x9x64x64xbf16, #tpu.memory_space<vmem>>, vector<1x1x64x64xbf16>
    %170 = vector.shape_cast %169 : vector<1x1x64x64xbf16> to vector<64x64xbf16>
    %cst_179 = arith.constant dense<0.000000e+00> : vector<64x64xf32>
    %171 = tpu.matmul %168, %170, %cst_179 {dimension_numbers = #tpu.dot_dimension_numbers<[1], [0], [0], [1], [0, 0, 1, 1], [], []>} : vector<64x64xbf16>, vector<64x64xbf16>, vector<64x64xf32> -> vector<64x64xf32>
    %172 = arith.addf %165, %171 : vector<64x64xf32>
    %c2_180 = arith.constant 2 : index
    %c2_181 = arith.constant 2 : index
    %c0_182 = arith.constant 0 : index
    %173 = vector.load %arg7[%c2_180, %c2_181, %c0_182] : memref<10x10x64xf32, #tpu.memory_space<vmem>>, vector<8x8x64xf32>
    %174 = vector.shape_cast %173 : vector<8x8x64xf32> to vector<64x64xf32>
    %175 = arith.truncf %174 : vector<64x64xf32> to vector<64x64xbf16>
    %c1_183 = arith.constant 1 : index
    %c8_184 = arith.constant 8 : index
    %c0_185 = arith.constant 0 : index
    %c0_186 = arith.constant 0 : index
    %176 = vector.load %arg4[%c1_183, %c8_184, %c0_185, %c0_186] : memref<3x9x64x64xbf16, #tpu.memory_space<vmem>>, vector<1x1x64x64xbf16>
    %177 = vector.shape_cast %176 : vector<1x1x64x64xbf16> to vector<64x64xbf16>
    %cst_187 = arith.constant dense<0.000000e+00> : vector<64x64xf32>
    %178 = tpu.matmul %175, %177, %cst_187 {dimension_numbers = #tpu.dot_dimension_numbers<[1], [0], [0], [1], [0, 0, 1, 1], [], []>} : vector<64x64xbf16>, vector<64x64xbf16>, vector<64x64xf32> -> vector<64x64xf32>
    %179 = arith.addf %172, %178 : vector<64x64xf32>
    %c2_188 = arith.constant 2 : index
    %c0_189 = arith.constant 0 : index
    %180 = vector.load %arg5[%c2_188, %c0_189] : memref<4x64xf32, #tpu.memory_space<vmem>>, vector<1x64xf32>
    %181 = vector.broadcast %180 : vector<1x64xf32> to vector<64x64xf32>
    %182 = arith.addf %179, %181 : vector<64x64xf32>
    %cst_190 = arith.constant 0.000000e+00 : f32
    %183 = vector.broadcast %cst_190 : f32 to vector<64x64xf32>
    %184 = arith.maximumf %182, %183 : vector<64x64xf32>
    %185 = vector.shape_cast %184 : vector<64x64xf32> to vector<8x8x64xf32>
    %c1_191 = arith.constant 1 : index
    %c1_192 = arith.constant 1 : index
    %c0_193 = arith.constant 0 : index
    %186 = vector.load %arg7[%c1_191, %c1_192, %c0_193] : memref<10x10x64xf32, #tpu.memory_space<vmem>>, vector<8x8x64xf32>
    tpu.vector_store %arg7[%c1_191, %c1_192, %c0_193], %185 {strides = array<i32>} : memref<10x10x64xf32, #tpu.memory_space<vmem>>, vector<8x8x64xf32>,
    %cst_194 = arith.constant 0.000000e+00 : f32
    %187 = vector.broadcast %cst_194 : f32 to vector<64x64xf32>
    %c0_195 = arith.constant 0 : index
    %c0_196 = arith.constant 0 : index
    %c0_197 = arith.constant 0 : index
    %188 = vector.load %arg7[%c0_195, %c0_196, %c0_197] : memref<10x10x64xf32, #tpu.memory_space<vmem>>, vector<8x8x64xf32>
    %189 = vector.shape_cast %188 : vector<8x8x64xf32> to vector<64x64xf32>
    %190 = arith.truncf %189 : vector<64x64xf32> to vector<64x64xbf16>
    %c2_198 = arith.constant 2 : index
    %c0_199 = arith.constant 0 : index
    %c0_200 = arith.constant 0 : index
    %c0_201 = arith.constant 0 : index
    %191 = vector.load %arg4[%c2_198, %c0_199, %c0_200, %c0_201] : memref<3x9x64x64xbf16, #tpu.memory_space<vmem>>, vector<1x1x64x64xbf16>
    %192 = vector.shape_cast %191 : vector<1x1x64x64xbf16> to vector<64x64xbf16>
    %cst_202 = arith.constant dense<0.000000e+00> : vector<64x64xf32>
    %193 = tpu.matmul %190, %192, %cst_202 {dimension_numbers = #tpu.dot_dimension_numbers<[1], [0], [0], [1], [0, 0, 1, 1], [], []>} : vector<64x64xbf16>, vector<64x64xbf16>, vector<64x64xf32> -> vector<64x64xf32>
    %194 = arith.addf %187, %193 : vector<64x64xf32>
    %c0_203 = arith.constant 0 : index
    %c1_204 = arith.constant 1 : index
    %c0_205 = arith.constant 0 : index
    %195 = vector.load %arg7[%c0_203, %c1_204, %c0_205] : memref<10x10x64xf32, #tpu.memory_space<vmem>>, vector<8x8x64xf32>
    %196 = vector.shape_cast %195 : vector<8x8x64xf32> to vector<64x64xf32>
    %197 = arith.truncf %196 : vector<64x64xf32> to vector<64x64xbf16>
    %c2_206 = arith.constant 2 : index
    %c1_207 = arith.constant 1 : index
    %c0_208 = arith.constant 0 : index
    %c0_209 = arith.constant 0 : index
    %198 = vector.load %arg4[%c2_206, %c1_207, %c0_208, %c0_209] : memref<3x9x64x64xbf16, #tpu.memory_space<vmem>>, vector<1x1x64x64xbf16>
    %199 = vector.shape_cast %198 : vector<1x1x64x64xbf16> to vector<64x64xbf16>
    %cst_210 = arith.constant dense<0.000000e+00> : vector<64x64xf32>
    %200 = tpu.matmul %197, %199, %cst_210 {dimension_numbers = #tpu.dot_dimension_numbers<[1], [0], [0], [1], [0, 0, 1, 1], [], []>} : vector<64x64xbf16>, vector<64x64xbf16>, vector<64x64xf32> -> vector<64x64xf32>
    %201 = arith.addf %194, %200 : vector<64x64xf32>
    %c0_211 = arith.constant 0 : index
    %c2_212 = arith.constant 2 : index
    %c0_213 = arith.constant 0 : index
    %202 = vector.load %arg7[%c0_211, %c2_212, %c0_213] : memref<10x10x64xf32, #tpu.memory_space<vmem>>, vector<8x8x64xf32>
    %203 = vector.shape_cast %202 : vector<8x8x64xf32> to vector<64x64xf32>
    %204 = arith.truncf %203 : vector<64x64xf32> to vector<64x64xbf16>
    %c2_214 = arith.constant 2 : index
    %c2_215 = arith.constant 2 : index
    %c0_216 = arith.constant 0 : index
    %c0_217 = arith.constant 0 : index
    %205 = vector.load %arg4[%c2_214, %c2_215, %c0_216, %c0_217] : memref<3x9x64x64xbf16, #tpu.memory_space<vmem>>, vector<1x1x64x64xbf16>
    %206 = vector.shape_cast %205 : vector<1x1x64x64xbf16> to vector<64x64xbf16>
    %cst_218 = arith.constant dense<0.000000e+00> : vector<64x64xf32>
    %207 = tpu.matmul %204, %206, %cst_218 {dimension_numbers = #tpu.dot_dimension_numbers<[1], [0], [0], [1], [0, 0, 1, 1], [], []>} : vector<64x64xbf16>, vector<64x64xbf16>, vector<64x64xf32> -> vector<64x64xf32>
    %208 = arith.addf %201, %207 : vector<64x64xf32>
    %c1_219 = arith.constant 1 : index
    %c0_220 = arith.constant 0 : index
    %c0_221 = arith.constant 0 : index
    %209 = vector.load %arg7[%c1_219, %c0_220, %c0_221] : memref<10x10x64xf32, #tpu.memory_space<vmem>>, vector<8x8x64xf32>
    %210 = vector.shape_cast %209 : vector<8x8x64xf32> to vector<64x64xf32>
    %211 = arith.truncf %210 : vector<64x64xf32> to vector<64x64xbf16>
    %c2_222 = arith.constant 2 : index
    %c3_223 = arith.constant 3 : index
    %c0_224 = arith.constant 0 : index
    %c0_225 = arith.constant 0 : index
    %212 = vector.load %arg4[%c2_222, %c3_223, %c0_224, %c0_225] : memref<3x9x64x64xbf16, #tpu.memory_space<vmem>>, vector<1x1x64x64xbf16>
    %213 = vector.shape_cast %212 : vector<1x1x64x64xbf16> to vector<64x64xbf16>
    %cst_226 = arith.constant dense<0.000000e+00> : vector<64x64xf32>
    %214 = tpu.matmul %211, %213, %cst_226 {dimension_numbers = #tpu.dot_dimension_numbers<[1], [0], [0], [1], [0, 0, 1, 1], [], []>} : vector<64x64xbf16>, vector<64x64xbf16>, vector<64x64xf32> -> vector<64x64xf32>
    %215 = arith.addf %208, %214 : vector<64x64xf32>
    %c1_227 = arith.constant 1 : index
    %c1_228 = arith.constant 1 : index
    %c0_229 = arith.constant 0 : index
    %216 = vector.load %arg7[%c1_227, %c1_228, %c0_229] : memref<10x10x64xf32, #tpu.memory_space<vmem>>, vector<8x8x64xf32>
    %217 = vector.shape_cast %216 : vector<8x8x64xf32> to vector<64x64xf32>
    %218 = arith.truncf %217 : vector<64x64xf32> to vector<64x64xbf16>
    %c2_230 = arith.constant 2 : index
    %c4_231 = arith.constant 4 : index
    %c0_232 = arith.constant 0 : index
    %c0_233 = arith.constant 0 : index
    %219 = vector.load %arg4[%c2_230, %c4_231, %c0_232, %c0_233] : memref<3x9x64x64xbf16, #tpu.memory_space<vmem>>, vector<1x1x64x64xbf16>
    %220 = vector.shape_cast %219 : vector<1x1x64x64xbf16> to vector<64x64xbf16>
    %cst_234 = arith.constant dense<0.000000e+00> : vector<64x64xf32>
    %221 = tpu.matmul %218, %220, %cst_234 {dimension_numbers = #tpu.dot_dimension_numbers<[1], [0], [0], [1], [0, 0, 1, 1], [], []>} : vector<64x64xbf16>, vector<64x64xbf16>, vector<64x64xf32> -> vector<64x64xf32>
    %222 = arith.addf %215, %221 : vector<64x64xf32>
    %c1_235 = arith.constant 1 : index
    %c2_236 = arith.constant 2 : index
    %c0_237 = arith.constant 0 : index
    %223 = vector.load %arg7[%c1_235, %c2_236, %c0_237] : memref<10x10x64xf32, #tpu.memory_space<vmem>>, vector<8x8x64xf32>
    %224 = vector.shape_cast %223 : vector<8x8x64xf32> to vector<64x64xf32>
    %225 = arith.truncf %224 : vector<64x64xf32> to vector<64x64xbf16>
    %c2_238 = arith.constant 2 : index
    %c5_239 = arith.constant 5 : index
    %c0_240 = arith.constant 0 : index
    %c0_241 = arith.constant 0 : index
    %226 = vector.load %arg4[%c2_238, %c5_239, %c0_240, %c0_241] : memref<3x9x64x64xbf16, #tpu.memory_space<vmem>>, vector<1x1x64x64xbf16>
    %227 = vector.shape_cast %226 : vector<1x1x64x64xbf16> to vector<64x64xbf16>
    %cst_242 = arith.constant dense<0.000000e+00> : vector<64x64xf32>
    %228 = tpu.matmul %225, %227, %cst_242 {dimension_numbers = #tpu.dot_dimension_numbers<[1], [0], [0], [1], [0, 0, 1, 1], [], []>} : vector<64x64xbf16>, vector<64x64xbf16>, vector<64x64xf32> -> vector<64x64xf32>
    %229 = arith.addf %222, %228 : vector<64x64xf32>
    %c2_243 = arith.constant 2 : index
    %c0_244 = arith.constant 0 : index
    %c0_245 = arith.constant 0 : index
    %230 = vector.load %arg7[%c2_243, %c0_244, %c0_245] : memref<10x10x64xf32, #tpu.memory_space<vmem>>, vector<8x8x64xf32>
    %231 = vector.shape_cast %230 : vector<8x8x64xf32> to vector<64x64xf32>
    %232 = arith.truncf %231 : vector<64x64xf32> to vector<64x64xbf16>
    %c2_246 = arith.constant 2 : index
    %c6_247 = arith.constant 6 : index
    %c0_248 = arith.constant 0 : index
    %c0_249 = arith.constant 0 : index
    %233 = vector.load %arg4[%c2_246, %c6_247, %c0_248, %c0_249] : memref<3x9x64x64xbf16, #tpu.memory_space<vmem>>, vector<1x1x64x64xbf16>
    %234 = vector.shape_cast %233 : vector<1x1x64x64xbf16> to vector<64x64xbf16>
    %cst_250 = arith.constant dense<0.000000e+00> : vector<64x64xf32>
    %235 = tpu.matmul %232, %234, %cst_250 {dimension_numbers = #tpu.dot_dimension_numbers<[1], [0], [0], [1], [0, 0, 1, 1], [], []>} : vector<64x64xbf16>, vector<64x64xbf16>, vector<64x64xf32> -> vector<64x64xf32>
    %236 = arith.addf %229, %235 : vector<64x64xf32>
    %c2_251 = arith.constant 2 : index
    %c1_252 = arith.constant 1 : index
    %c0_253 = arith.constant 0 : index
    %237 = vector.load %arg7[%c2_251, %c1_252, %c0_253] : memref<10x10x64xf32, #tpu.memory_space<vmem>>, vector<8x8x64xf32>
    %238 = vector.shape_cast %237 : vector<8x8x64xf32> to vector<64x64xf32>
    %239 = arith.truncf %238 : vector<64x64xf32> to vector<64x64xbf16>
    %c2_254 = arith.constant 2 : index
    %c7_255 = arith.constant 7 : index
    %c0_256 = arith.constant 0 : index
    %c0_257 = arith.constant 0 : index
    %240 = vector.load %arg4[%c2_254, %c7_255, %c0_256, %c0_257] : memref<3x9x64x64xbf16, #tpu.memory_space<vmem>>, vector<1x1x64x64xbf16>
    %241 = vector.shape_cast %240 : vector<1x1x64x64xbf16> to vector<64x64xbf16>
    %cst_258 = arith.constant dense<0.000000e+00> : vector<64x64xf32>
    %242 = tpu.matmul %239, %241, %cst_258 {dimension_numbers = #tpu.dot_dimension_numbers<[1], [0], [0], [1], [0, 0, 1, 1], [], []>} : vector<64x64xbf16>, vector<64x64xbf16>, vector<64x64xf32> -> vector<64x64xf32>
    %243 = arith.addf %236, %242 : vector<64x64xf32>
    %c2_259 = arith.constant 2 : index
    %c2_260 = arith.constant 2 : index
    %c0_261 = arith.constant 0 : index
    %244 = vector.load %arg7[%c2_259, %c2_260, %c0_261] : memref<10x10x64xf32, #tpu.memory_space<vmem>>, vector<8x8x64xf32>
    %245 = vector.shape_cast %244 : vector<8x8x64xf32> to vector<64x64xf32>
    %246 = arith.truncf %245 : vector<64x64xf32> to vector<64x64xbf16>
    %c2_262 = arith.constant 2 : index
    %c8_263 = arith.constant 8 : index
    %c0_264 = arith.constant 0 : index
    %c0_265 = arith.constant 0 : index
    %247 = vector.load %arg4[%c2_262, %c8_263, %c0_264, %c0_265] : memref<3x9x64x64xbf16, #tpu.memory_space<vmem>>, vector<1x1x64x64xbf16>
    %248 = vector.shape_cast %247 : vector<1x1x64x64xbf16> to vector<64x64xbf16>
    %cst_266 = arith.constant dense<0.000000e+00> : vector<64x64xf32>
    %249 = tpu.matmul %246, %248, %cst_266 {dimension_numbers = #tpu.dot_dimension_numbers<[1], [0], [0], [1], [0, 0, 1, 1], [], []>} : vector<64x64xbf16>, vector<64x64xbf16>, vector<64x64xf32> -> vector<64x64xf32>
    %250 = arith.addf %243, %249 : vector<64x64xf32>
    %c3_267 = arith.constant 3 : index
    %c0_268 = arith.constant 0 : index
    %251 = vector.load %arg5[%c3_267, %c0_268] : memref<4x64xf32, #tpu.memory_space<vmem>>, vector<1x64xf32>
    %252 = vector.broadcast %251 : vector<1x64xf32> to vector<64x64xf32>
    %253 = arith.addf %250, %252 : vector<64x64xf32>
    %254 = arith.addf %253, %113 : vector<64x64xf32>
    %cst_269 = arith.constant 0.000000e+00 : f32
    %255 = vector.broadcast %cst_269 : f32 to vector<64x64xf32>
    %256 = arith.maximumf %254, %255 : vector<64x64xf32>
    %cst_270 = arith.constant dense<0.000000e+00> : vector<64xf32>
    %257 = vector.multi_reduction <add>, %256, %cst_270 [0] : vector<64x64xf32> to vector<64xf32>
    %258 = vector.shape_cast %257 : vector<64xf32> to vector<1x64xf32>
    %cst_271 = arith.constant 6.400000e+01 : f32
    %259 = vector.broadcast %cst_271 : f32 to vector<1x64xf32>
    %260 = arith.divf %258, %259 : vector<1x64xf32>
    %c0_272 = arith.constant 0 : index
    %c0_273 = arith.constant 0 : index
    %c0_274 = arith.constant 0 : index
    %261 = vector.load %arg6[%c0_272, %c0_273, %c0_274] : memref<1x1x64xf32, #tpu.memory_space<vmem>>, vector<1x1x64xf32>
    %262 = vector.shape_cast %261 : vector<1x1x64xf32> to vector<1x64xf32>
    %263 = vector.shape_cast %260 : vector<1x64xf32> to vector<1x1x64xf32>
    tpu.vector_store %arg6[%c0_272, %c0_273, %c0_274], %263 {strides = array<i32>} : memref<1x1x64xf32, #tpu.memory_space<vmem>>, vector<1x1x64xf32>,
    return
  }
  func.func @transform_0(%arg0: i32) -> (i32, i32, i32, i32) {
    %c0_i32 = arith.constant 0 : i32
    %c0_i32_0 = arith.constant 0 : i32
    %c0_i32_1 = arith.constant 0 : i32
    %c0_i32_2 = arith.constant 0 : i32
    return %arg0, %c0_i32, %c0_i32_0, %c0_i32_1 : i32, i32, i32, i32
  }
  func.func @transform_1(%arg0: i32) -> (i32, i32, i32) {
    %c0_i32 = arith.constant 0 : i32
    %c0_i32_0 = arith.constant 0 : i32
    %c0_i32_1 = arith.constant 0 : i32
    return %arg0, %c0_i32, %c0_i32_0 : i32, i32, i32
  }
  func.func @transform_2(%arg0: i32) -> (i32, i32, i32) {
    %c0_i32 = arith.constant 0 : i32
    %c0_i32_0 = arith.constant 0 : i32
    %c0_i32_1 = arith.constant 0 : i32
    %c0_i32_2 = arith.constant 0 : i32
    return %c0_i32, %c0_i32_0, %c0_i32_1 : i32, i32, i32
  }
  func.func @transform_3(%arg0: i32) -> (i32, i32, i32, i32) {
    %c0_i32 = arith.constant 0 : i32
    %c0_i32_0 = arith.constant 0 : i32
    %c0_i32_1 = arith.constant 0 : i32
    %c0_i32_2 = arith.constant 0 : i32
    %c0_i32_3 = arith.constant 0 : i32
    return %c0_i32, %c0_i32_0, %c0_i32_1, %c0_i32_2 : i32, i32, i32, i32
  }
  func.func @transform_4(%arg0: i32) -> (i32, i32) {
    %c0_i32 = arith.constant 0 : i32
    %c0_i32_0 = arith.constant 0 : i32
    %c0_i32_1 = arith.constant 0 : i32
    return %c0_i32, %c0_i32_0 : i32, i32
  }
  func.func @transform_5(%arg0: i32) -> (i32, i32, i32) {
    %c0_i32 = arith.constant 0 : i32
    %c0_i32_0 = arith.constant 0 : i32
    %c0_i32_1 = arith.constant 0 : i32
    return %arg0, %c0_i32, %c0_i32_0 : i32, i32, i32
  }
}

</mosaic_0001>

<llo_original>
// kernel: specialized_resnet_cifar_forward.1
$region0: #{specialized_resnet_cifar_forward.1}
  #allocation0 [shape = 'u32[]', space=smem, size = 0x4, offset = 0x4, fixed_abs, tag = 'smem constant byte address 0x4 - core index']
  #allocation1 [shape = 'u32[144,128]{1,0:T(1,128)}', space=vmem, size = 0x12000, scoped, tag = 'internal scratch']
  #allocation2 [shape = 'f32[10,10,64]{2,1,0:T(8,128)}', space=vmem, size = 0x14000, scoped, tag = 'scratch operand']
  %s0 = inlined_call_operand.vmem [shape: f32[2,9,9,128], index: 0, kind: input, shape index: {}]
  %s1 = inlined_call_operand.vmem [shape: f32[2,64,64], index: 1, kind: input, shape index: {}]
  %s2 = inlined_call_operand.vmem [shape: bf16[4,128,64], index: 2, kind: input, shape index: {}]
  %s3 = inlined_call_operand.vmem [shape: bf16[3,9,64,64], index: 3, kind: input, shape index: {}]
  %s4 = inlined_call_operand.vmem [shape: f32[4,64], index: 4, kind: input, shape index: {}]
  %s5 = inlined_call_operand.hbm [shape: f32[2,1,64], index: 5, kind: output, shape index: {}]
  %s6 = sld [smem:[#allocation0]]
  $region53: #{specialized_resnet_cifar_forward.1} parent=0
    _
  %s8 = ssub.s32 1, %s6
  %s9 = scalar_select 0, %s8, %s6
  $region1: #{specialized_resnet_cifar_forward.1} parent=0
    #allocation3 [shape = 'u8[1024]{0}', space=vmem, size = 0x400, scoped, tag = 'output window, operand 0']
    #allocation4 [shape = 's32[2]{0}', space=sflag, size = 0x8, scoped, tag = 'scoped memory for specialized_resnet_cifar_forward.1']
    %10 = vsyncpa [#allocation4], 0
    %s11 = scalar_lea.sflag [#allocation4], 1
    %12 = vsyncpa %s11, 0
    loop: start=0, step=1, limit=4
    $region2: #{specialized_resnet_cifar_forward.1} parent=1 // loop_pre_header
      _
    $region3: #{specialized_resnet_cifar_forward.1} parent=1 // loop_header
      %s14 = sphi 0, %s18
      %p15 = scmp.ge.s32.totalorder %s14, 4
      %s24 = sphi 0, %s26
      %s27 = sphi 0, %s24
      %s28 = sphi 0, %s27
      %s44 = sphi 0, %s28
      %s50 = sphi 0, %s52
      %s53 = sphi 0, %s50
      %s54 = sphi 0, %s53
      %s70 = sphi 0, %s54
      %s74 = sphi 0, %s74
      %s76 = sphi 0, %s74
      %s77 = sphi 0, %s76
      %s91 = sphi 0, %s77
      %s95 = sphi 0, %s95
      %s97 = sphi 0, %s95
      %s98 = sphi 0, %s97
      %s112 = sphi 0, %s98
      %s116 = sphi 0, %s116
      %s118 = sphi 0, %s116
      %s119 = sphi 0, %s118
      %s133 = sphi 0, %s119
      %s139 = sphi 0, %s141
      %s142 = sphi 0, %s139
      %s143 = sphi 0, %s142
      %s159 = sphi 0, %s143
    $region4: #{specialized_resnet_cifar_forward.1} parent=1 // loop_header_branch
      %17 = sbr.rel (%p15) target = $region8
    $region5: #{specialized_resnet_cifar_forward.1} parent=1 // loop_body
      %s19 = ssub.s32 %s14, 1
      %s20 = ssub.s32 %s14, 2
      %s21 = sadd.s32 %s14, 1
      %s22 = ssub.s32 %s14, %s21
      %p23 = scmp.eq.s32.totalorder %s22, 0
      %s25 = sadd.s32 %s24, 1
      %s26 = scalar_select %p23, %s24, %s25
      %p29 = pneg %p23
      %p30 = scmp.eq.s32.totalorder %s14, 1
      %p31 = por %p29, %p30
      %p32 = scmp.ne.s32.totalorder %s24, %s27
      %p33 = scmp.eq.s32.totalorder %s14, 0
      %p34 = por %p32, %p33
      %p35 = scmp.ne.s32.totalorder %s24, %s27
      %p36 = scmp.eq.s32.totalorder %s19, 1
      %p37 = por %p35, %p36
      %p38 = scmp.ne.s32.totalorder %s27, %s28
      %p39 = scmp.eq.s32.totalorder %s19, 0
      %p40 = por %p38, %p39
      %p41 = scmp.ne.s32.totalorder %s27, %s28
      %p42 = scmp.eq.s32.totalorder %s20, 1
      %p43 = por %p41, %p42
      %p45 = scmp.ne.s32.totalorder %s28, %s44
      %p46 = scmp.eq.s32.totalorder %s20, 0
      %p47 = por %p45, %p46
      %s48 = ssub.s32 %s14, %s21
      %p49 = scmp.eq.s32.totalorder %s48, 0
      %s51 = sadd.s32 %s50, 1
      %s52 = scalar_select %p49, %s50, %s51
      %p55 = pneg %p49
      %p56 = scmp.eq.s32.totalorder %s14, 1
      %p57 = por %p55, %p56
      %p58 = scmp.ne.s32.totalorder %s50, %s53
      %p59 = scmp.eq.s32.totalorder %s14, 0
      %p60 = por %p58, %p59
      %p61 = scmp.ne.s32.totalorder %s50, %s53
      %p62 = scmp.eq.s32.totalorder %s19, 1
      %p63 = por %p61, %p62
      %p64 = scmp.ne.s32.totalorder %s53, %s54
      %p65 = scmp.eq.s32.totalorder %s19, 0
      %p66 = por %p64, %p65
      %p67 = scmp.ne.s32.totalorder %s53, %s54
      %p68 = scmp.eq.s32.totalorder %s20, 1
      %p69 = por %p67, %p68
      %p71 = scmp.ne.s32.totalorder %s54, %s70
      %p72 = scmp.eq.s32.totalorder %s20, 0
      %p73 = por %p71, %p72
      %s75 = sadd.s32 %s74, 1
      %p78 = scmp.eq.s32.totalorder %s14, 1
      %p79 = scmp.ne.s32.totalorder %s74, %s76
      %p80 = scmp.eq.s32.totalorder %s14, 0
      %p81 = por %p79, %p80
      %p82 = scmp.ne.s32.totalorder %s74, %s76
      %p83 = scmp.eq.s32.totalorder %s19, 1
      %p84 = por %p82, %p83
      %p85 = scmp.ne.s32.totalorder %s76, %s77
      %p86 = scmp.eq.s32.totalorder %s19, 0
      %p87 = por %p85, %p86
      %p88 = scmp.ne.s32.totalorder %s76, %s77
      %p89 = scmp.eq.s32.totalorder %s20, 1
      %p90 = por %p88, %p89
      %p92 = scmp.ne.s32.totalorder %s77, %s91
      %p93 = scmp.eq.s32.totalorder %s20, 0
      %p94 = por %p92, %p93
      %s96 = sadd.s32 %s95, 1
      %p99 = scmp.eq.s32.totalorder %s14, 1
      %p100 = scmp.ne.s32.totalorder %s95, %s97
      %p101 = scmp.eq.s32.totalorder %s14, 0
      %p102 = por %p100, %p101
      %p103 = scmp.ne.s32.totalorder %s95, %s97
      %p104 = scmp.eq.s32.totalorder %s19, 1
      %p105 = por %p103, %p104
      %p106 = scmp.ne.s32.totalorder %s97, %s98
      %p107 = scmp.eq.s32.totalorder %s19, 0
      %p108 = por %p106, %p107
      %p109 = scmp.ne.s32.totalorder %s97, %s98
      %p110 = scmp.eq.s32.totalorder %s20, 1
      %p111 = por %p109, %p110
      %p113 = scmp.ne.s32.totalorder %s98, %s112
      %p114 = scmp.eq.s32.totalorder %s20, 0
      %p115 = por %p113, %p114
      %s117 = sadd.s32 %s116, 1
      %p120 = scmp.eq.s32.totalorder %s14, 1
      %p121 = scmp.ne.s32.totalorder %s116, %s118
      %p122 = scmp.eq.s32.totalorder %s14, 0
      %p123 = por %p121, %p122
      %p124 = scmp.ne.s32.totalorder %s116, %s118
      %p125 = scmp.eq.s32.totalorder %s19, 1
      %p126 = por %p124, %p125
      %p127 = scmp.ne.s32.totalorder %s118, %s119
      %p128 = scmp.eq.s32.totalorder %s19, 0
      %p129 = por %p127, %p128
      %p130 = scmp.ne.s32.totalorder %s118, %s119
      %p131 = scmp.eq.s32.totalorder %s20, 1
      %p132 = por %p130, %p131
      %p134 = scmp.ne.s32.totalorder %s119, %s133
      %p135 = scmp.eq.s32.totalorder %s20, 0
      %p136 = por %p134, %p135
      %s137 = ssub.s32 %s14, %s21
      %p138 = scmp.eq.s32.totalorder %s137, 0
      %s140 = sadd.s32 %s139, 1
      %s141 = scalar_select %p138, %s139, %s140
      %p144 = pneg %p138
      %p145 = scmp.eq.s32.totalorder %s14, 1
      %p146 = por %p144, %p145
      %p147 = scmp.ne.s32.totalorder %s139, %s142
      %p148 = scmp.eq.s32.totalorder %s14, 0
      %p149 = por %p147, %p148
      %p150 = scmp.ne.s32.totalorder %s139, %s142
      %p151 = scmp.eq.s32.totalorder %s19, 1
      %p152 = por %p150, %p151
      %p153 = scmp.ne.s32.totalorder %s142, %s143
      %p154 = scmp.eq.s32.totalorder %s19, 0
      %p155 = por %p153, %p154
      %p156 = scmp.ne.s32.totalorder %s142, %s143
      %p157 = scmp.eq.s32.totalorder %s20, 1
      %p158 = por %p156, %p157
      %p160 = scmp.ne.s32.totalorder %s143, %s159
      %p161 = scmp.eq.s32.totalorder %s20, 0
      %p162 = por %p160, %p161
      %p163 = scmp.le.s32.totalorder 1, %s14
      %p164 = scmp.lt.s32.totalorder %s14, 3
      %p165 = pnand %p163, %p164
      %p166 = pneg %p165
      // Predicated region
      $region9: #{specialized_resnet_cifar_forward.1} parent=5 // pred_check
        _
      $region10: #{specialized_resnet_cifar_forward.1} parent=5 // pred_check_branch
        %168 = sbr.rel (%p165) target = $region12
      $region11: #{specialized_resnet_cifar_forward.1} parent=5 // pred_region
        %s169 = ssub.s32 %s14, 1
        // Predicated region
        $region13: #{specialized_resnet_cifar_forward.1} parent=11 // pred_check
          %p170 = pneg %p87
        $region14: #{specialized_resnet_cifar_forward.1} parent=11 // pred_check_branch
          %172 = sbr.rel (%p170) target = $region16
        $region15: #{specialized_resnet_cifar_forward.1} parent=11 // pred_region
          _
        $region16: #{specialized_resnet_cifar_forward.1} parent=11 // pred_fallthru
          _
        // Predicated region
        $region17: #{specialized_resnet_cifar_forward.1} parent=11 // pred_check
          %p173 = pneg %p108
        $region18: #{specialized_resnet_cifar_forward.1} parent=11 // pred_check_branch
          %175 = sbr.rel (%p173) target = $region20
        $region19: #{specialized_resnet_cifar_forward.1} parent=11 // pred_region
          _
        $region20: #{specialized_resnet_cifar_forward.1} parent=11 // pred_fallthru
          _
        // Predicated region
        $region21: #{specialized_resnet_cifar_forward.1} parent=11 // pred_check
          %p176 = pneg %p129
        $region22: #{specialized_resnet_cifar_forward.1} parent=11 // pred_check_branch
          %178 = sbr.rel (%p176) target = $region24
        $region23: #{specialized_resnet_cifar_forward.1} parent=11 // pred_region
          _
        $region24: #{specialized_resnet_cifar_forward.1} parent=11 // pred_fallthru
          _
      $region12: #{specialized_resnet_cifar_forward.1} parent=5 // pred_fallthru
        _
      %p179 = scmp.lt.s32.totalorder %s14, 2
      // Predicated region
      $region25: #{specialized_resnet_cifar_forward.1} parent=5 // pred_check
        %p180 = pneg %p179
      $region26: #{specialized_resnet_cifar_forward.1} parent=5 // pred_check_branch
        %182 = sbr.rel (%p180) target = $region28
      $region27: #{specialized_resnet_cifar_forward.1} parent=5 // pred_region
        // Predicated region
        $region29: #{specialized_resnet_cifar_forward.1} parent=27 // pred_check
          %p183 = pneg %p34
        $region30: #{specialized_resnet_cifar_forward.1} parent=27 // pred_check_branch
          %185 = sbr.rel (%p183) target = $region32
        $region31: #{specialized_resnet_cifar_forward.1} parent=27 // pred_region
          %p186 = scmp.lt.s32.totalorder %s14, 1
          %s187 = scalar_select %p186, %s14, 1
          %s188 = smul.addr %s187, 18
          %s189 = smul.addr %s188, 8
          %s190 = scalar_lea.vmem %s0, %s189
        $region32: #{specialized_resnet_cifar_forward.1} parent=27 // pred_fallthru
          _
        // Predicated region
        $region33: #{specialized_resnet_cifar_forward.1} parent=27 // pred_check
          %p191 = pneg %p60
        $region34: #{specialized_resnet_cifar_forward.1} parent=27 // pred_check_branch
          %193 = sbr.rel (%p191) target = $region36
        $region35: #{specialized_resnet_cifar_forward.1} parent=27 // pred_region
          %p194 = scmp.lt.s32.totalorder %s14, 1
          %s195 = scalar_select %p194, %s14, 1
          %s196 = smul.addr %s195, 8
          %s197 = smul.addr %s196, 8
          %s198 = scalar_lea.vmem %s1, %s197
        $region36: #{specialized_resnet_cifar_forward.1} parent=27 // pred_fallthru
          _
      $region28: #{specialized_resnet_cifar_forward.1} parent=5 // pred_fallthru
        _
      %p199 = scmp.le.s32.totalorder 1, %s14
      %p200 = scmp.lt.s32.totalorder %s14, 3
      %p201 = pnand %p199, %p200
      %p202 = pneg %p201
      // Predicated region
      $region37: #{specialized_resnet_cifar_forward.1} parent=5 // pred_check
        _
      $region38: #{specialized_resnet_cifar_forward.1} parent=5 // pred_check_branch
        %204 = sbr.rel (%p201) target = $region40
      $region39: #{specialized_resnet_cifar_forward.1} parent=5 // pred_region
        %s205 = ssub.s32 %s14, 1
        %p206 = scmp.lt.s32.totalorder %s19, 1
        %s207 = scalar_select %p206, %s19, 1
        %s208 = smul.addr %s207, 18
        %s209 = smul.addr %s208, 8
        %s210 = scalar_lea.vmem %s0, %s209
        %p211 = pneg %p40
        %p212 = pneg %p37
        %p213 = scmp.lt.s32.totalorder %s19, 1
        %s214 = scalar_select %p213, %s19, 1
        %s215 = smul.addr %s214, 8
        %s216 = smul.addr %s215, 8
        %s217 = scalar_lea.vmem %s1, %s216
        %p218 = pneg %p66
        %p219 = pneg %p63
        %p220 = pneg %p87
        %p221 = pneg %p84
        %p222 = pneg %p108
        %p223 = pneg %p105
        %p224 = pneg %p129
        %p225 = pneg %p126
        %p226 = pneg %p155
        %p227 = pneg %p152
        %s228 = sand.u32 %s142, 1
        %s229 = scalar_lea.sflag [#allocation4], %s228
        %s230 = sand.u32 %s142, 1
        %s231 = scalar_lea.vmem [#allocation3], %s230
        %p232 = scmp.lt.s32.totalorder %s19, 1
        %s233 = scalar_select %p232, %s19, 1
        %s234 = smul.addr %s233, 18
        %s235 = smul.addr %s234, 8
        %s236 = scalar_lea.vmem %s0, %s235
        %p237 = scmp.lt.s32.totalorder %s19, 1
        %s238 = scalar_select %p237, %s19, 1
        %s239 = smul.addr %s238, 8
        %s240 = smul.addr %s239, 8
        %s241 = scalar_lea.vmem %s1, %s240
        %vm243 = vcmask 523264
        %244 = vst.msk [vmem:[#allocation2] sm:$0xff] %vm243, 0.0
        %vm245 = vcmask 517120
        %246 = vst.msk [vmem:[#allocation2 + $0x8] sm:$0x3] %vm245, 0.0
        %247 = vst.msk [vmem:[#allocation2 + $0x10] sm:$0xff] %vm243, 0.0
        %248 = vst.msk [vmem:[#allocation2 + $0x18] sm:$0x3] %vm245, 0.0
        %249 = vst.msk [vmem:[#allocation2 + $0x20] sm:$0xff] %vm243, 0.0
        %250 = vst.msk [vmem:[#allocation2 + $0x28] sm:$0x3] %vm245, 0.0
        %251 = vst.msk [vmem:[#allocation2 + $0x30] sm:$0xff] %vm243, 0.0
        %252 = vst.msk [vmem:[#allocation2 + $0x38] sm:$0x3] %vm245, 0.0
        %253 = vst.msk [vmem:[#allocation2 + $0x40] sm:$0xff] %vm243, 0.0
        %254 = vst.msk [vmem:[#allocation2 + $0x48] sm:$0x3] %vm245, 0.0
        %255 = vst.msk [vmem:[#allocation2 + $0x50] sm:$0xff] %vm243, 0.0
        %256 = vst.msk [vmem:[#allocation2 + $0x58] sm:$0x3] %vm245, 0.0
        %257 = vst.msk [vmem:[#allocation2 + $0x60] sm:$0xff] %vm243, 0.0
        %258 = vst.msk [vmem:[#allocation2 + $0x68] sm:$0x3] %vm245, 0.0
        %259 = vst.msk [vmem:[#allocation2 + $0x70] sm:$0xff] %vm243, 0.0
        %260 = vst.msk [vmem:[#allocation2 + $0x78] sm:$0x3] %vm245, 0.0
        %261 = vst.msk [vmem:[#allocation2 + $0x80] sm:$0xff] %vm243, 0.0
        %262 = vst.msk [vmem:[#allocation2 + $0x88] sm:$0x3] %vm245, 0.0
        %263 = vst.msk [vmem:[#allocation2 + $0x90] sm:$0xff] %vm243, 0.0
        %264 = vst.msk [vmem:[#allocation2 + $0x98] sm:$0x3] %vm245, 0.0
        %v265 = vld [vmem:[%s236] sm:$0xff]
        %v266 = vld [vmem:[%s236 + $0x10] sm:$0xff]
        %v267 = vld [vmem:[%s236 + $0x20] sm:$0xff]
        %v268 = vld [vmem:[%s236 + $0x30] sm:$0xff]
        %v269 = vld [vmem:[%s236 + $0x40] sm:$0xff]
        %v270 = vld [vmem:[%s236 + $0x50] sm:$0xff]
        %v271 = vld [vmem:[%s236 + $0x60] sm:$0xff]
        %v272 = vld [vmem:[%s236 + $0x70] sm:$0xff]
        %v273 = vpack.c.bf16 %v266, %v265
        %v274 = vpack.c.bf16 %v268, %v267
        %v275 = vpack.c.bf16 %v270, %v269
        %v276 = vpack.c.bf16 %v272, %v271
        %v277 = vld [vmem:[%s2] sm:$0xf]
        %v278 = vld [vmem:[%s2 + $0x4] sm:$0xf]
        %v279 = vld [vmem:[%s2 + $0x8] sm:$0xf]
        %v280 = vld [vmem:[%s2 + $0xc] sm:$0xf]
        %v281 = vld [vmem:[%s2 + $0x10] sm:$0xf]
        %v282 = vld [vmem:[%s2 + $0x14] sm:$0xf]
        %v283 = vld [vmem:[%s2 + $0x18] sm:$0xf]
        %v284 = vld [vmem:[%s2 + $0x1c] sm:$0xf]
        %v285 = vld [vmem:[%s2 + $0x20] sm:$0xf]
        %v286 = vld [vmem:[%s2 + $0x24] sm:$0xf]
        %v287 = vld [vmem:[%s2 + $0x28] sm:$0xf]
        %v288 = vld [vmem:[%s2 + $0x2c] sm:$0xf]
        %v289 = vld [vmem:[%s2 + $0x30] sm:$0xf]
        %v290 = vld [vmem:[%s2 + $0x34] sm:$0xf]
        %v291 = vld [vmem:[%s2 + $0x38] sm:$0xf]
        %v292 = vld [vmem:[%s2 + $0x3c] sm:$0xf]
        %v293 = vld [vmem:[%s236 + $0x1] sm:$0xff]
        %v294 = vld [vmem:[%s236 + $0x11] sm:$0xff]
        %v295 = vld [vmem:[%s236 + $0x21] sm:$0xff]
        %v296 = vld [vmem:[%s236 + $0x31] sm:$0xff]
        %v297 = vld [vmem:[%s236 + $0x41] sm:$0xff]
        %v298 = vld [vmem:[%s236 + $0x51] sm:$0xff]
        %v299 = vld [vmem:[%s236 + $0x61] sm:$0xff]
        %v300 = vld [vmem:[%s236 + $0x71] sm:$0xff]
        %v301 = vpack.c.bf16 %v294, %v293
        %v302 = vpack.c.bf16 %v296, %v295
        %v303 = vpack.c.bf16 %v298, %v297
        %v304 = vpack.c.bf16 %v300, %v299
        %s305 = scalar_lea.vmem %s2, 64
        %v306 = vld [vmem:[%s305] sm:$0xf]
        %v307 = vld [vmem:[%s305 + $0x4] sm:$0xf]
        %v308 = vld [vmem:[%s305 + $0x8] sm:$0xf]
        %v309 = vld [vmem:[%s305 + $0xc] sm:$0xf]
        %v310 = vld [vmem:[%s305 + $0x10] sm:$0xf]
        %v311 = vld [vmem:[%s305 + $0x14] sm:$0xf]
        %v312 = vld [vmem:[%s305 + $0x18] sm:$0xf]
        %v313 = vld [vmem:[%s305 + $0x1c] sm:$0xf]
        %v314 = vld [vmem:[%s305 + $0x20] sm:$0xf]
        %v315 = vld [vmem:[%s305 + $0x24] sm:$0xf]
        %v316 = vld [vmem:[%s305 + $0x28] sm:$0xf]
        %v317 = vld [vmem:[%s305 + $0x2c] sm:$0xf]
        %v318 = vld [vmem:[%s305 + $0x30] sm:$0xf]
        %v319 = vld [vmem:[%s305 + $0x34] sm:$0xf]
        %v320 = vld [vmem:[%s305 + $0x38] sm:$0xf]
        %v321 = vld [vmem:[%s305 + $0x3c] sm:$0xf]
        %v338 = vunpack.c.l.b16 %v306
        %v339 = vunpack.c.l.b16 %v307
        %v340 = vunpack.c.l.b16 %v308
        %v341 = vunpack.c.l.b16 %v309
        %v342 = vunpack.c.l.b16 %v310
        %v343 = vunpack.c.l.b16 %v311
        %v344 = vunpack.c.l.b16 %v312
        %v345 = vunpack.c.l.b16 %v313
        %v346 = vunpack.c.l.b16 %v314
        %v347 = vunpack.c.l.b16 %v315
        %v348 = vunpack.c.l.b16 %v316
        %v349 = vunpack.c.l.b16 %v317
        %v350 = vunpack.c.l.b16 %v318
        %v351 = vunpack.c.l.b16 %v319
        %v352 = vunpack.c.l.b16 %v320
        %v353 = vunpack.c.l.b16 %v321
        %v354 = vpack.c.b16 %v339, %v338
        %v355 = vpack.c.b16 %v341, %v340
        %v356 = vpack.c.b16 %v343, %v342
        %v357 = vpack.c.b16 %v345, %v344
        %v358 = vpack.c.b16 %v347, %v346
        %v359 = vpack.c.b16 %v349, %v348
        %v360 = vpack.c.b16 %v351, %v350
        %v361 = vpack.c.b16 %v353, %v352
        %370 = vmatprep.subr.bf16.mxu0 0
        %371 = vmatpush1.bf16.msra.mxu0 %v354
        %372 = vmatprep.subr.bf16.mxu0 0
        %373 = vmatpush1.bf16.msra.mxu0 %v355
        %374 = vmatprep.subr.bf16.mxu0 0
        %375 = vmatpush1.bf16.msra.mxu0 %v356
        %376 = vmatprep.subr.bf16.mxu0 0
        %377 = vmatpush1.bf16.msra.mxu0 %v357
        %378 = vmatprep.subr.bf16.mxu0 0
        %379 = vmatpush1.bf16.msra.mxu0 %v358
        %380 = vmatprep.subr.bf16.mxu0 0
        %381 = vmatpush1.bf16.msra.mxu0 %v359
        %382 = vmatprep.subr.bf16.mxu0 0
        %383 = vmatpush1.bf16.msra.mxu0 %v360
        %384 = vmatprep.subr.bf16.mxu0 0
        %385 = vmatpush1.bf16.msra.mxu0 %v361
        %386 = vmatprep.subr.bf16.mxu0 0
        %387 = vmatpush1.bf16.msra.mxu0 0
        %388 = vmatprep.subr.bf16.mxu0 0
        %389 = vmatpush1.bf16.msra.mxu0 0
        %390 = vmatprep.subr.bf16.mxu0 0
        %391 = vmatpush1.bf16.msra.mxu0 0
        %392 = vmatprep.subr.bf16.mxu0 0
        %393 = vmatpush1.bf16.msra.mxu0 0
        %394 = vmatprep.subr.bf16.mxu0 0
        %395 = vmatpush1.bf16.msra.mxu0 0
        %396 = vmatprep.subr.bf16.mxu0 0
        %397 = vmatpush1.bf16.msra.mxu0 0
        %398 = vmatprep.subr.bf16.mxu0 0
        %399 = vmatpush1.bf16.msra.mxu0 0
        %400 = vmatprep.subr.bf16.mxu0 0
        %401 = vmatpush1.bf16.msra.mxu0 0
        %402 = vmatprep.mubr.bf16.mxu0 0
        %403 = vmatmul.mubr.bf16.gmra.mrb[0].mxu0 %v301
        %v404 = vpop.f32.mrb[0].mxu0
        %v405 = vadd.f32 0.0, %v404
        %v406 = vpop.f32.mrb[0].mxu0
        %v407 = vpop.f32.mrb[0].mxu0
        %v408 = vadd.f32 0.0, %v407
        %v409 = vpop.f32.mrb[0].mxu0
        %410 = vmatprep.mubr.bf16.mxu0 0
        %411 = vmatmul.mubr.bf16.gmra.mrb[0].mxu0 %v302
        %v412 = vpop.f32.mrb[0].mxu0
        %v413 = vadd.f32 0.0, %v412
        %v414 = vpop.f32.mrb[0].mxu0
        %v415 = vpop.f32.mrb[0].mxu0
        %v416 = vadd.f32 0.0, %v415
        %v417 = vpop.f32.mrb[0].mxu0
        %418 = vmatprep.mubr.bf16.mxu0 0
        %419 = vmatmul.mubr.bf16.gmra.mrb[0].mxu0 %v303
        %v420 = vpop.f32.mrb[0].mxu0
        %v421 = vadd.f32 0.0, %v420
        %v422 = vpop.f32.mrb[0].mxu0
        %v423 = vpop.f32.mrb[0].mxu0
        %v424 = vadd.f32 0.0, %v423
        %v425 = vpop.f32.mrb[0].mxu0
        %426 = vmatprep.mubr.bf16.mxu0 0
        %427 = vmatmul.mubr.bf16.gmra.mrb[0].mxu0 %v304
        %v428 = vpop.f32.mrb[0].mxu0
        %v429 = vadd.f32 0.0, %v428
        %v430 = vpop.f32.mrb[0].mxu0
        %v431 = vpop.f32.mrb[0].mxu0
        %v432 = vadd.f32 0.0, %v431
        %v433 = vpop.f32.mrb[0].mxu0
        %434 = vdwg.mxu0
        %v451 = vunpack.c.l.b16 %v277
        %v452 = vunpack.c.l.b16 %v278
        %v453 = vunpack.c.l.b16 %v279
        %v454 = vunpack.c.l.b16 %v280
        %v455 = vunpack.c.l.b16 %v281
        %v456 = vunpack.c.l.b16 %v282
        %v457 = vunpack.c.l.b16 %v283
        %v458 = vunpack.c.l.b16 %v284
        %v459 = vunpack.c.l.b16 %v285
        %v460 = vunpack.c.l.b16 %v286
        %v461 = vunpack.c.l.b16 %v287
        %v462 = vunpack.c.l.b16 %v288
        %v463 = vunpack.c.l.b16 %v289
        %v464 = vunpack.c.l.b16 %v290
        %v465 = vunpack.c.l.b16 %v291
        %v466 = vunpack.c.l.b16 %v292
        %v467 = vpack.c.b16 %v452, %v451
        %v468 = vpack.c.b16 %v454, %v453
        %v469 = vpack.c.b16 %v456, %v455
        %v470 = vpack.c.b16 %v458, %v457
        %v471 = vpack.c.b16 %v460, %v459
        %v472 = vpack.c.b16 %v462, %v461
        %v473 = vpack.c.b16 %v464, %v463
        %v474 = vpack.c.b16 %v466, %v465
        %483 = vmatprep.subr.bf16.mxu0 0
        %484 = vmatpush1.bf16.msra.mxu0 %v467
        %485 = vmatprep.subr.bf16.mxu0 0
        %486 = vmatpush1.bf16.msra.mxu0 %v468
        %487 = vmatprep.subr.bf16.mxu0 0
        %488 = vmatpush1.bf16.msra.mxu0 %v469
        %489 = vmatprep.subr.bf16.mxu0 0
        %490 = vmatpush1.bf16.msra.mxu0 %v470
        %491 = vmatprep.subr.bf16.mxu0 0
        %492 = vmatpush1.bf16.msra.mxu0 %v471
        %493 = vmatprep.subr.bf16.mxu0 0
        %494 = vmatpush1.bf16.msra.mxu0 %v472
        %495 = vmatprep.subr.bf16.mxu0 0
        %496 = vmatpush1.bf16.msra.mxu0 %v473
        %497 = vmatprep.subr.bf16.mxu0 0
        %498 = vmatpush1.bf16.msra.mxu0 %v474
        %499 = vmatprep.subr.bf16.mxu0 0
        %500 = vmatpush1.bf16.msra.mxu0 0
        %501 = vmatprep.subr.bf16.mxu0 0
        %502 = vmatpush1.bf16.msra.mxu0 0
        %503 = vmatprep.subr.bf16.mxu0 0
        %504 = vmatpush1.bf16.msra.mxu0 0
        %505 = vmatprep.subr.bf16.mxu0 0
        %506 = vmatpush1.bf16.msra.mxu0 0
        %507 = vmatprep.subr.bf16.mxu0 0
        %508 = vmatpush1.bf16.msra.mxu0 0
        %509 = vmatprep.subr.bf16.mxu0 0
        %510 = vmatpush1.bf16.msra.mxu0 0
        %511 = vmatprep.subr.bf16.mxu0 0
        %512 = vmatpush1.bf16.msra.mxu0 0
        %513 = vmatprep.subr.bf16.mxu0 0
        %514 = vmatpush1.bf16.msra.mxu0 0
        %515 = vmatprep.mubr.bf16.mxu0 0
        %516 = vmatmul.mubr.bf16.gmra.mrb[0].mxu0 %v273
        %v517 = vpop.f32.mrb[0].mxu0
        %v518 = vadd.f32 %v405, %v517
        %v519 = vpop.f32.mrb[0].mxu0
        %v520 = vpop.f32.mrb[0].mxu0
        %v521 = vadd.f32 %v408, %v520
        %v522 = vpop.f32.mrb[0].mxu0
        %523 = vmatprep.mubr.bf16.mxu0 0
        %524 = vmatmul.mubr.bf16.gmra.mrb[0].mxu0 %v274
        %v525 = vpop.f32.mrb[0].mxu0
        %v526 = vadd.f32 %v413, %v525
        %v527 = vpop.f32.mrb[0].mxu0
        %v528 = vpop.f32.mrb[0].mxu0
        %v529 = vadd.f32 %v416, %v528
        %v530 = vpop.f32.mrb[0].mxu0
        %531 = vmatprep.mubr.bf16.mxu0 0
        %532 = vmatmul.mubr.bf16.gmra.mrb[0].mxu0 %v275
        %v533 = vpop.f32.mrb[0].mxu0
        %v534 = vadd.f32 %v421, %v533
        %v535 = vpop.f32.mrb[0].mxu0
        %v536 = vpop.f32.mrb[0].mxu0
        %v537 = vadd.f32 %v424, %v536
        %v538 = vpop.f32.mrb[0].mxu0
        %539 = vmatprep.mubr.bf16.mxu0 0
        %540 = vmatmul.mubr.bf16.gmra.mrb[0].mxu0 %v276
        %v541 = vpop.f32.mrb[0].mxu0
        %v542 = vadd.f32 %v429, %v541
        %v543 = vpop.f32.mrb[0].mxu0
        %v544 = vpop.f32.mrb[0].mxu0
        %v545 = vadd.f32 %v432, %v544
        %v546 = vpop.f32.mrb[0].mxu0
        %547 = vdwg.mxu0
        %s548 = scalar_lea.vmem %s236, 16
        %v549 = vld [vmem:[%s548] sm:$0xff]
        %v550 = vld [vmem:[%s548 + $0x10] sm:$0xff]
        %v551 = vld [vmem:[%s548 + $0x20] sm:$0xff]
        %v552 = vld [vmem:[%s548 + $0x30] sm:$0xff]
        %v553 = vld [vmem:[%s548 + $0x40] sm:$0xff]
        %v554 = vld [vmem:[%s548 + $0x50] sm:$0xff]
        %v555 = vld [vmem:[%s548 + $0x60] sm:$0xff]
        %v556 = vld [vmem:[%s548 + $0x70] sm:$0xff]
        %v557 = vpack.c.bf16 %v550, %v549
        %v558 = vpack.c.bf16 %v552, %v551
        %v559 = vpack.c.bf16 %v554, %v553
        %v560 = vpack.c.bf16 %v556, %v555
        %s561 = scalar_lea.vmem %s2, 128
        %v562 = vld [vmem:[%s561] sm:$0xf]
        %v563 = vld [vmem:[%s561 + $0x4] sm:$0xf]
        %v564 = vld [vmem:[%s561 + $0x8] sm:$0xf]
        %v565 = vld [vmem:[%s561 + $0xc] sm:$0xf]
        %v566 = vld [vmem:[%s561 + $0x10] sm:$0xf]
        %v567 = vld [vmem:[%s561 + $0x14] sm:$0xf]
        %v568 = vld [vmem:[%s561 + $0x18] sm:$0xf]
        %v569 = vld [vmem:[%s561 + $0x1c] sm:$0xf]
        %v570 = vld [vmem:[%s561 + $0x20] sm:$0xf]
        %v571 = vld [vmem:[%s561 + $0x24] sm:$0xf]
        %v572 = vld [vmem:[%s561 + $0x28] sm:$0xf]
        %v573 = vld [vmem:[%s561 + $0x2c] sm:$0xf]
        %v574 = vld [vmem:[%s561 + $0x30] sm:$0xf]
        %v575 = vld [vmem:[%s561 + $0x34] sm:$0xf]
        %v576 = vld [vmem:[%s561 + $0x38] sm:$0xf]
        %v577 = vld [vmem:[%s561 + $0x3c] sm:$0xf]
        %v594 = vunpack.c.l.b16 %v562
        %v595 = vunpack.c.l.b16 %v563
        %v596 = vunpack.c.l.b16 %v564
        %v597 = vunpack.c.l.b16 %v565
        %v598 = vunpack.c.l.b16 %v566
        %v599 = vunpack.c.l.b16 %v567
        %v600 = vunpack.c.l.b16 %v568
        %v601 = vunpack.c.l.b16 %v569
        %v602 = vunpack.c.l.b16 %v570
        %v603 = vunpack.c.l.b16 %v571
        %v604 = vunpack.c.l.b16 %v572
        %v605 = vunpack.c.l.b16 %v573
        %v606 = vunpack.c.l.b16 %v574
        %v607 = vunpack.c.l.b16 %v575
        %v608 = vunpack.c.l.b16 %v576
        %v609 = vunpack.c.l.b16 %v577
        %v610 = vpack.c.b16 %v595, %v594
        %v611 = vpack.c.b16 %v597, %v596
        %v612 = vpack.c.b16 %v599, %v598
        %v613 = vpack.c.b16 %v601, %v600
        %v614 = vpack.c.b16 %v603, %v602
        %v615 = vpack.c.b16 %v605, %v604
        %v616 = vpack.c.b16 %v607, %v606
        %v617 = vpack.c.b16 %v609, %v608
        %626 = vmatprep.subr.bf16.mxu0 0
        %627 = vmatpush1.bf16.msra.mxu0 %v610
        %628 = vmatprep.subr.bf16.mxu0 0
        %629 = vmatpush1.bf16.msra.mxu0 %v611
        %630 = vmatprep.subr.bf16.mxu0 0
        %631 = vmatpush1.bf16.msra.mxu0 %v612
        %632 = vmatprep.subr.bf16.mxu0 0
        %633 = vmatpush1.bf16.msra.mxu0 %v613
        %634 = vmatprep.subr.bf16.mxu0 0
        %635 = vmatpush1.bf16.msra.mxu0 %v614
        %636 = vmatprep.subr.bf16.mxu0 0
        %637 = vmatpush1.bf16.msra.mxu0 %v615
        %638 = vmatprep.subr.bf16.mxu0 0
        %639 = vmatpush1.bf16.msra.mxu0 %v616
        %640 = vmatprep.subr.bf16.mxu0 0
        %641 = vmatpush1.bf16.msra.mxu0 %v617
        %642 = vmatprep.subr.bf16.mxu0 0
        %643 = vmatpush1.bf16.msra.mxu0 0
        %644 = vmatprep.subr.bf16.mxu0 0
        %645 = vmatpush1.bf16.msra.mxu0 0
        %646 = vmatprep.subr.bf16.mxu0 0
        %647 = vmatpush1.bf16.msra.mxu0 0
        %648 = vmatprep.subr.bf16.mxu0 0
        %649 = vmatpush1.bf16.msra.mxu0 0
        %650 = vmatprep.subr.bf16.mxu0 0
        %651 = vmatpush1.bf16.msra.mxu0 0
        %652 = vmatprep.subr.bf16.mxu0 0
        %653 = vmatpush1.bf16.msra.mxu0 0
        %654 = vmatprep.subr.bf16.mxu0 0
        %655 = vmatpush1.bf16.msra.mxu0 0
        %656 = vmatprep.subr.bf16.mxu0 0
        %657 = vmatpush1.bf16.msra.mxu0 0
        %658 = vmatprep.mubr.bf16.mxu0 0
        %659 = vmatmul.mubr.bf16.gmra.mrb[0].mxu0 %v557
        %v660 = vpop.f32.mrb[0].mxu0
        %v661 = vadd.f32 0.0, %v660
        %v662 = vpop.f32.mrb[0].mxu0
        %v663 = vpop.f32.mrb[0].mxu0
        %v664 = vadd.f32 0.0, %v663
        %v665 = vpop.f32.mrb[0].mxu0
        %666 = vmatprep.mubr.bf16.mxu0 0
        %667 = vmatmul.mubr.bf16.gmra.mrb[0].mxu0 %v558
        %v668 = vpop.f32.mrb[0].mxu0
        %v669 = vadd.f32 0.0, %v668
        %v670 = vpop.f32.mrb[0].mxu0
        %v671 = vpop.f32.mrb[0].mxu0
        %v672 = vadd.f32 0.0, %v671
        %v673 = vpop.f32.mrb[0].mxu0
        %674 = vmatprep.mubr.bf16.mxu0 0
        %675 = vmatmul.mubr.bf16.gmra.mrb[0].mxu0 %v559
        %v676 = vpop.f32.mrb[0].mxu0
        %v677 = vadd.f32 0.0, %v676
        %v678 = vpop.f32.mrb[0].mxu0
        %v679 = vpop.f32.mrb[0].mxu0
        %v680 = vadd.f32 0.0, %v679
        %v681 = vpop.f32.mrb[0].mxu0
        %682 = vmatprep.mubr.bf16.mxu0 0
        %683 = vmatmul.mubr.bf16.gmra.mrb[0].mxu0 %v560
        %v684 = vpop.f32.mrb[0].mxu0
        %v685 = vadd.f32 0.0, %v684
        %v686 = vpop.f32.mrb[0].mxu0
        %v687 = vpop.f32.mrb[0].mxu0
        %v688 = vadd.f32 0.0, %v687
        %v689 = vpop.f32.mrb[0].mxu0
        %690 = vdwg.mxu0
        %v691 = vadd.f32 %v518, %v661
        %v692 = vadd.f32 %v521, %v664
        %v693 = vadd.f32 %v526, %v669
        %v694 = vadd.f32 %v529, %v672
        %v695 = vadd.f32 %v534, %v677
        %v696 = vadd.f32 %v537, %v680
        %v697 = vadd.f32 %v542, %v685
        %v698 = vadd.f32 %v545, %v688
        %v699 = vld [vmem:[%s548 + $0x1] sm:$0xff]
        %v700 = vld [vmem:[%s548 + $0x11] sm:$0xff]
        %v701 = vld [vmem:[%s548 + $0x21] sm:$0xff]
        %v702 = vld [vmem:[%s548 + $0x31] sm:$0xff]
        %v703 = vld [vmem:[%s548 + $0x41] sm:$0xff]
        %v704 = vld [vmem:[%s548 + $0x51] sm:$0xff]
        %v705 = vld [vmem:[%s548 + $0x61] sm:$0xff]
        %v706 = vld [vmem:[%s548 + $0x71] sm:$0xff]
        %v707 = vpack.c.bf16 %v700, %v699
        %v708 = vpack.c.bf16 %v702, %v701
        %v709 = vpack.c.bf16 %v704, %v703
        %v710 = vpack.c.bf16 %v706, %v705
        %s711 = scalar_lea.vmem %s2, 192
        %v712 = vld [vmem:[%s711] sm:$0xf]
        %v713 = vld [vmem:[%s711 + $0x4] sm:$0xf]
        %v714 = vld [vmem:[%s711 + $0x8] sm:$0xf]
        %v715 = vld [vmem:[%s711 + $0xc] sm:$0xf]
        %v716 = vld [vmem:[%s711 + $0x10] sm:$0xf]
        %v717 = vld [vmem:[%s711 + $0x14] sm:$0xf]
        %v718 = vld [vmem:[%s711 + $0x18] sm:$0xf]
        %v719 = vld [vmem:[%s711 + $0x1c] sm:$0xf]
        %v720 = vld [vmem:[%s711 + $0x20] sm:$0xf]
        %v721 = vld [vmem:[%s711 + $0x24] sm:$0xf]
        %v722 = vld [vmem:[%s711 + $0x28] sm:$0xf]
        %v723 = vld [vmem:[%s711 + $0x2c] sm:$0xf]
        %v724 = vld [vmem:[%s711 + $0x30] sm:$0xf]
        %v725 = vld [vmem:[%s711 + $0x34] sm:$0xf]
        %v726 = vld [vmem:[%s711 + $0x38] sm:$0xf]
        %v727 = vld [vmem:[%s711 + $0x3c] sm:$0xf]
        %v744 = vunpack.c.l.b16 %v712
        %v745 = vunpack.c.l.b16 %v713
        %v746 = vunpack.c.l.b16 %v714
        %v747 = vunpack.c.l.b16 %v715
        %v748 = vunpack.c.l.b16 %v716
        %v749 = vunpack.c.l.b16 %v717
        %v750 = vunpack.c.l.b16 %v718
        %v751 = vunpack.c.l.b16 %v719
        %v752 = vunpack.c.l.b16 %v720
        %v753 = vunpack.c.l.b16 %v721
        %v754 = vunpack.c.l.b16 %v722
        %v755 = vunpack.c.l.b16 %v723
        %v756 = vunpack.c.l.b16 %v724
        %v757 = vunpack.c.l.b16 %v725
        %v758 = vunpack.c.l.b16 %v726
        %v759 = vunpack.c.l.b16 %v727
        %v760 = vpack.c.b16 %v745, %v744
        %v761 = vpack.c.b16 %v747, %v746
        %v762 = vpack.c.b16 %v749, %v748
        %v763 = vpack.c.b16 %v751, %v750
        %v764 = vpack.c.b16 %v753, %v752
        %v765 = vpack.c.b16 %v755, %v754
        %v766 = vpack.c.b16 %v757, %v756
        %v767 = vpack.c.b16 %v759, %v758
        %776 = vmatprep.subr.bf16.mxu0 0
        %777 = vmatpush1.bf16.msra.mxu0 %v760
        %778 = vmatprep.subr.bf16.mxu0 0
        %779 = vmatpush1.bf16.msra.mxu0 %v761
        %780 = vmatprep.subr.bf16.mxu0 0
        %781 = vmatpush1.bf16.msra.mxu0 %v762
        %782 = vmatprep.subr.bf16.mxu0 0
        %783 = vmatpush1.bf16.msra.mxu0 %v763
        %784 = vmatprep.subr.bf16.mxu0 0
        %785 = vmatpush1.bf16.msra.mxu0 %v764
        %786 = vmatprep.subr.bf16.mxu0 0
        %787 = vmatpush1.bf16.msra.mxu0 %v765
        %788 = vmatprep.subr.bf16.mxu0 0
        %789 = vmatpush1.bf16.msra.mxu0 %v766
        %790 = vmatprep.subr.bf16.mxu0 0
        %791 = vmatpush1.bf16.msra.mxu0 %v767
        %792 = vmatprep.subr.bf16.mxu0 0
        %793 = vmatpush1.bf16.msra.mxu0 0
        %794 = vmatprep.subr.bf16.mxu0 0
        %795 = vmatpush1.bf16.msra.mxu0 0
        %796 = vmatprep.subr.bf16.mxu0 0
        %797 = vmatpush1.bf16.msra.mxu0 0
        %798 = vmatprep.subr.bf16.mxu0 0
        %799 = vmatpush1.bf16.msra.mxu0 0
        %800 = vmatprep.subr.bf16.mxu0 0
        %801 = vmatpush1.bf16.msra.mxu0 0
        %802 = vmatprep.subr.bf16.mxu0 0
        %803 = vmatpush1.bf16.msra.mxu0 0
        %804 = vmatprep.subr.bf16.mxu0 0
        %805 = vmatpush1.bf16.msra.mxu0 0
        %806 = vmatprep.subr.bf16.mxu0 0
        %807 = vmatpush1.bf16.msra.mxu0 0
        %808 = vmatprep.mubr.bf16.mxu0 0
        %809 = vmatmul.mubr.bf16.gmra.mrb[0].mxu0 %v707
        %v810 = vpop.f32.mrb[0].mxu0
        %v811 = vadd.f32 0.0, %v810
        %v812 = vpop.f32.mrb[0].mxu0
        %v813 = vpop.f32.mrb[0].mxu0
        %v814 = vadd.f32 0.0, %v813
        %v815 = vpop.f32.mrb[0].mxu0
        %816 = vmatprep.mubr.bf16.mxu0 0
        %817 = vmatmul.mubr.bf16.gmra.mrb[0].mxu0 %v708
        %v818 = vpop.f32.mrb[0].mxu0
        %v819 = vadd.f32 0.0, %v818
        %v820 = vpop.f32.mrb[0].mxu0
        %v821 = vpop.f32.mrb[0].mxu0
        %v822 = vadd.f32 0.0, %v821
        %v823 = vpop.f32.mrb[0].mxu0
        %824 = vmatprep.mubr.bf16.mxu0 0
        %825 = vmatmul.mubr.bf16.gmra.mrb[0].mxu0 %v709
        %v826 = vpop.f32.mrb[0].mxu0
        %v827 = vadd.f32 0.0, %v826
        %v828 = vpop.f32.mrb[0].mxu0
        %v829 = vpop.f32.mrb[0].mxu0
        %v830 = vadd.f32 0.0, %v829
        %v831 = vpop.f32.mrb[0].mxu0
        %832 = vmatprep.mubr.bf16.mxu0 0
        %833 = vmatmul.mubr.bf16.gmra.mrb[0].mxu0 %v710
        %v834 = vpop.f32.mrb[0].mxu0
        %v835 = vadd.f32 0.0, %v834
        %v836 = vpop.f32.mrb[0].mxu0
        %v837 = vpop.f32.mrb[0].mxu0
        %v838 = vadd.f32 0.0, %v837
        %v839 = vpop.f32.mrb[0].mxu0
        %840 = vdwg.mxu0
        %v841 = vadd.f32 %v691, %v811
        %v842 = vadd.f32 %v692, %v814
        %v843 = vadd.f32 %v693, %v819
        %v844 = vadd.f32 %v694, %v822
        %v845 = vadd.f32 %v695, %v827
        %v846 = vadd.f32 %v696, %v830
        %v847 = vadd.f32 %v697, %v835
        %v848 = vadd.f32 %v698, %v838
        %v849 = vld [vmem:[%s4] sm:$0x1]
        %v850 = vlaneseq
        %v851 = vshrl.u32 %v850, 7
        %v852 = vsub.s32 0, %v851
        %v853 = vrot.slane %v849, %v852
        %v854 = vadd.f32 %v841, %v853
        %v855 = vadd.f32 %v842, %v853
        %v856 = vadd.f32 %v843, %v853
        %v857 = vadd.f32 %v844, %v853
        %v858 = vadd.f32 %v845, %v853
        %v859 = vadd.f32 %v846, %v853
        %v860 = vadd.f32 %v847, %v853
        %v861 = vadd.f32 %v848, %v853
        %v862 = vmax.f32 %v854, 0.0
        %v863 = vmax.f32 %v855, 0.0
        %v864 = vmax.f32 %v856, 0.0
        %v865 = vmax.f32 %v857, 0.0
        %v866 = vmax.f32 %v858, 0.0
        %v867 = vmax.f32 %v859, 0.0
        %v868 = vmax.f32 %v860, 0.0
        %v869 = vmax.f32 %v861, 0.0
        %s870 = scalar_lea.vmem [#allocation2], 16
        %871 = vst.msk [vmem:[%s870 + $0x1] sm:$0xff] %vm243, %v862
        %872 = vst.msk [vmem:[%s870 + $0x11] sm:$0xff] %vm243, %v863
        %873 = vst.msk [vmem:[%s870 + $0x21] sm:$0xff] %vm243, %v864
        %874 = vst.msk [vmem:[%s870 + $0x31] sm:$0xff] %vm243, %v865
        %875 = vst.msk [vmem:[%s870 + $0x41] sm:$0xff] %vm243, %v866
        %876 = vst.msk [vmem:[%s870 + $0x51] sm:$0xff] %vm243, %v867
        %877 = vst.msk [vmem:[%s870 + $0x61] sm:$0xff] %vm243, %v868
        %878 = vst.msk [vmem:[%s870 + $0x71] sm:$0xff] %vm243, %v869
        %v879 = vld [vmem:[#allocation2] sm:$0xff]
        %v880 = vld [vmem:[#allocation2 + $0x10] sm:$0xff]
        %v881 = vld [vmem:[#allocation2 + $0x20] sm:$0xff]
        %v882 = vld [vmem:[#allocation2 + $0x30] sm:$0xff]
        %v883 = vld [vmem:[#allocation2 + $0x40] sm:$0xff]
        %v884 = vld [vmem:[#allocation2 + $0x50] sm:$0xff]
        %v885 = vld [vmem:[#allocation2 + $0x60] sm:$0xff]
        %v886 = vld [vmem:[#allocation2 + $0x70] sm:$0xff]
        %v887 = vpack.c.bf16 %v880, %v879
        %v888 = vpack.c.bf16 %v882, %v881
        %v889 = vpack.c.bf16 %v884, %v883
        %v890 = vpack.c.bf16 %v886, %v885
        %v891 = vld [vmem:[%s3] sm:$0xf]
        %v892 = vld [vmem:[%s3 + $0x4] sm:$0xf]
        %v893 = vld [vmem:[%s3 + $0x8] sm:$0xf]
        %v894 = vld [vmem:[%s3 + $0xc] sm:$0xf]
        %v895 = vld [vmem:[%s3 + $0x10] sm:$0xf]
        %v896 = vld [vmem:[%s3 + $0x14] sm:$0xf]
        %v897 = vld [vmem:[%s3 + $0x18] sm:$0xf]
        %v898 = vld [vmem:[%s3 + $0x1c] sm:$0xf]
        %v899 = vld [vmem:[#allocation2 + $0x1] sm:$0xff]
        %v900 = vld [vmem:[#allocation2 + $0x11] sm:$0xff]
        %v901 = vld [vmem:[#allocation2 + $0x21] sm:$0xff]
        %v902 = vld [vmem:[#allocation2 + $0x31] sm:$0xff]
        %v903 = vld [vmem:[#allocation2 + $0x41] sm:$0xff]
        %v904 = vld [vmem:[#allocation2 + $0x51] sm:$0xff]
        %v905 = vld [vmem:[#allocation2 + $0x61] sm:$0xff]
        %v906 = vld [vmem:[#allocation2 + $0x71] sm:$0xff]
        %v907 = vpack.c.bf16 %v900, %v899
        %v908 = vpack.c.bf16 %v902, %v901
        %v909 = vpack.c.bf16 %v904, %v903
        %v910 = vpack.c.bf16 %v906, %v905
        %s911 = scalar_lea.vmem %s3, 32
        %v912 = vld [vmem:[%s911] sm:$0xf]
        %v913 = vld [vmem:[%s911 + $0x4] sm:$0xf]
        %v914 = vld [vmem:[%s911 + $0x8] sm:$0xf]
        %v915 = vld [vmem:[%s911 + $0xc] sm:$0xf]
        %v916 = vld [vmem:[%s911 + $0x10] sm:$0xf]
        %v917 = vld [vmem:[%s911 + $0x14] sm:$0xf]
        %v918 = vld [vmem:[%s911 + $0x18] sm:$0xf]
        %v919 = vld [vmem:[%s911 + $0x1c] sm:$0xf]
        %v928 = vunpack.c.l.b16 %v912
        %v929 = vunpack.c.l.b16 %v913
        %v930 = vunpack.c.l.b16 %v914
        %v931 = vunpack.c.l.b16 %v915
        %v932 = vunpack.c.l.b16 %v916
        %v933 = vunpack.c.l.b16 %v917
        %v934 = vunpack.c.l.b16 %v918
        %v935 = vunpack.c.l.b16 %v919
        %v936 = vpack.c.b16 %v929, %v928
        %v937 = vpack.c.b16 %v931, %v930
        %v938 = vpack.c.b16 %v933, %v932
        %v939 = vpack.c.b16 %v935, %v934
        %v945 = vsel %vm243, %v907, 0
        %v948 = vsel %vm243, %v908, 0
        %v951 = vsel %vm243, %v909, 0
        %v954 = vsel %vm243, %v910, 0
        %956 = vmatprep.subr.bf16.mxu0 0
        %957 = vmatpush1.bf16.msra.mxu0 %v936
        %958 = vmatprep.subr.bf16.mxu0 0
        %959 = vmatpush1.bf16.msra.mxu0 %v937
        %960 = vmatprep.subr.bf16.mxu0 0
        %961 = vmatpush1.bf16.msra.mxu0 %v938
        %962 = vmatprep.subr.bf16.mxu0 0
        %963 = vmatpush1.bf16.msra.mxu0 %v939
        %964 = vmatprep.subr.bf16.mxu0 0
        %965 = vmatpush1.bf16.msra.mxu0 0
        %966 = vmatprep.subr.bf16.mxu0 0
        %967 = vmatpush1.bf16.msra.mxu0 0
        %968 = vmatprep.subr.bf16.mxu0 0
        %969 = vmatpush1.bf16.msra.mxu0 0
        %970 = vmatprep.subr.bf16.mxu0 0
        %971 = vmatpush1.bf16.msra.mxu0 0
        %972 = vmatprep.subr.bf16.mxu0 0
        %973 = vmatpush1.bf16.msra.mxu0 0
        %974 = vmatprep.subr.bf16.mxu0 0
        %975 = vmatpush1.bf16.msra.mxu0 0
        %976 = vmatprep.subr.bf16.mxu0 0
        %977 = vmatpush1.bf16.msra.mxu0 0
        %978 = vmatprep.subr.bf16.mxu0 0
        %979 = vmatpush1.bf16.msra.mxu0 0
        %980 = vmatprep.subr.bf16.mxu0 0
        %981 = vmatpush1.bf16.msra.mxu0 0
        %982 = vmatprep.subr.bf16.mxu0 0
        %983 = vmatpush1.bf16.msra.mxu0 0
        %984 = vmatprep.subr.bf16.mxu0 0
        %985 = vmatpush1.bf16.msra.mxu0 0
        %986 = vmatprep.subr.bf16.mxu0 0
        %987 = vmatpush1.bf16.msra.mxu0 0
        %988 = vmatprep.mubr.bf16.mxu0 0
        %989 = vmatmul.mubr.bf16.gmra.mrb[0].mxu0 %v945
        %v990 = vpop.f32.mrb[0].mxu0
        %v991 = vadd.f32 0.0, %v990
        %v992 = vpop.f32.mrb[0].mxu0
        %v993 = vpop.f32.mrb[0].mxu0
        %v994 = vadd.f32 0.0, %v993
        %v995 = vpop.f32.mrb[0].mxu0
        %996 = vmatprep.mubr.bf16.mxu0 0
        %997 = vmatmul.mubr.bf16.gmra.mrb[0].mxu0 %v948
        %v998 = vpop.f32.mrb[0].mxu0
        %v999 = vadd.f32 0.0, %v998
        %v1000 = vpop.f32.mrb[0].mxu0
        %v1001 = vpop.f32.mrb[0].mxu0
        %v1002 = vadd.f32 0.0, %v1001
        %v1003 = vpop.f32.mrb[0].mxu0
        %1004 = vmatprep.mubr.bf16.mxu0 0
        %1005 = vmatmul.mubr.bf16.gmra.mrb[0].mxu0 %v951
        %v1006 = vpop.f32.mrb[0].mxu0
        %v1007 = vadd.f32 0.0, %v1006
        %v1008 = vpop.f32.mrb[0].mxu0
        %v1009 = vpop.f32.mrb[0].mxu0
        %v1010 = vadd.f32 0.0, %v1009
        %v1011 = vpop.f32.mrb[0].mxu0
        %1012 = vmatprep.mubr.bf16.mxu0 0
        %1013 = vmatmul.mubr.bf16.gmra.mrb[0].mxu0 %v954
        %v1014 = vpop.f32.mrb[0].mxu0
        %v1015 = vadd.f32 0.0, %v1014
        %v1016 = vpop.f32.mrb[0].mxu0
        %v1017 = vpop.f32.mrb[0].mxu0
        %v1018 = vadd.f32 0.0, %v1017
        %v1019 = vpop.f32.mrb[0].mxu0
        %1020 = vdwg.mxu0
        %v1029 = vunpack.c.l.b16 %v891
        %v1030 = vunpack.c.l.b16 %v892
        %v1031 = vunpack.c.l.b16 %v893
        %v1032 = vunpack.c.l.b16 %v894
        %v1033 = vunpack.c.l.b16 %v895
        %v1034 = vunpack.c.l.b16 %v896
        %v1035 = vunpack.c.l.b16 %v897
        %v1036 = vunpack.c.l.b16 %v898
        %v1037 = vpack.c.b16 %v1030, %v1029
        %v1038 = vpack.c.b16 %v1032, %v1031
        %v1039 = vpack.c.b16 %v1034, %v1033
        %v1040 = vpack.c.b16 %v1036, %v1035
        %v1046 = vsel %vm243, %v887, 0
        %v1049 = vsel %vm243, %v888, 0
        %v1052 = vsel %vm243, %v889, 0
        %v1055 = vsel %vm243, %v890, 0
        %1057 = vmatprep.subr.bf16.mxu0 0
        %1058 = vmatpush1.bf16.msra.mxu0 %v1037
        %1059 = vmatprep.subr.bf16.mxu0 0
        %1060 = vmatpush1.bf16.msra.mxu0 %v1038
        %1061 = vmatprep.subr.bf16.mxu0 0
        %1062 = vmatpush1.bf16.msra.mxu0 %v1039
        %1063 = vmatprep.subr.bf16.mxu0 0
        %1064 = vmatpush1.bf16.msra.mxu0 %v1040
        %1065 = vmatprep.subr.bf16.mxu0 0
        %1066 = vmatpush1.bf16.msra.mxu0 0
        %1067 = vmatprep.subr.bf16.mxu0 0
        %1068 = vmatpush1.bf16.msra.mxu0 0
        %1069 = vmatprep.subr.bf16.mxu0 0
        %1070 = vmatpush1.bf16.msra.mxu0 0
        %1071 = vmatprep.subr.bf16.mxu0 0
        %1072 = vmatpush1.bf16.msra.mxu0 0
        %1073 = vmatprep.subr.bf16.mxu0 0
        %1074 = vmatpush1.bf16.msra.mxu0 0
        %1075 = vmatprep.subr.bf16.mxu0 0
        %1076 = vmatpush1.bf16.msra.mxu0 0
        %1077 = vmatprep.subr.bf16.mxu0 0
        %1078 = vmatpush1.bf16.msra.mxu0 0
        %1079 = vmatprep.subr.bf16.mxu0 0
        %1080 = vmatpush1.bf16.msra.mxu0 0
        %1081 = vmatprep.subr.bf16.mxu0 0
        %1082 = vmatpush1.bf16.msra.mxu0 0
        %1083 = vmatprep.subr.bf16.mxu0 0
        %1084 = vmatpush1.bf16.msra.mxu0 0
        %1085 = vmatprep.subr.bf16.mxu0 0
        %1086 = vmatpush1.bf16.msra.mxu0 0
        %1087 = vmatprep.subr.bf16.mxu0 0
        %1088 = vmatpush1.bf16.msra.mxu0 0
        %1089 = vmatprep.mubr.bf16.mxu0 0
        %1090 = vmatmul.mubr.bf16.gmra.mrb[0].mxu0 %v1046
        %v1091 = vpop.f32.mrb[0].mxu0
        %v1092 = vadd.f32 %v991, %v1091
        %v1093 = vpop.f32.mrb[0].mxu0
        %v1094 = vpop.f32.mrb[0].mxu0
        %v1095 = vadd.f32 %v994, %v1094
        %v1096 = vpop.f32.mrb[0].mxu0
        %1097 = vmatprep.mubr.bf16.mxu0 0
        %1098 = vmatmul.mubr.bf16.gmra.mrb[0].mxu0 %v1049
        %v1099 = vpop.f32.mrb[0].mxu0
        %v1100 = vadd.f32 %v999, %v1099
        %v1101 = vpop.f32.mrb[0].mxu0
        %v1102 = vpop.f32.mrb[0].mxu0
        %v1103 = vadd.f32 %v1002, %v1102
        %v1104 = vpop.f32.mrb[0].mxu0
        %1105 = vmatprep.mubr.bf16.mxu0 0
        %1106 = vmatmul.mubr.bf16.gmra.mrb[0].mxu0 %v1052
        %v1107 = vpop.f32.mrb[0].mxu0
        %v1108 = vadd.f32 %v1007, %v1107
        %v1109 = vpop.f32.mrb[0].mxu0
        %v1110 = vpop.f32.mrb[0].mxu0
        %v1111 = vadd.f32 %v1010, %v1110
        %v1112 = vpop.f32.mrb[0].mxu0
        %1113 = vmatprep.mubr.bf16.mxu0 0
        %1114 = vmatmul.mubr.bf16.gmra.mrb[0].mxu0 %v1055
        %v1115 = vpop.f32.mrb[0].mxu0
        %v1116 = vadd.f32 %v1015, %v1115
        %v1117 = vpop.f32.mrb[0].mxu0
        %v1118 = vpop.f32.mrb[0].mxu0
        %v1119 = vadd.f32 %v1018, %v1118
        %v1120 = vpop.f32.mrb[0].mxu0
        %1121 = vdwg.mxu0
        %v1122 = vld [vmem:[#allocation2 + $0x2] sm:$0xff]
        %v1123 = vld [vmem:[#allocation2 + $0x12] sm:$0xff]
        %v1124 = vld [vmem:[#allocation2 + $0x22] sm:$0xff]
        %v1125 = vld [vmem:[#allocation2 + $0x32] sm:$0xff]
        %v1126 = vld [vmem:[#allocation2 + $0x42] sm:$0xff]
        %v1127 = vld [vmem:[#allocation2 + $0x52] sm:$0xff]
        %v1128 = vld [vmem:[#allocation2 + $0x62] sm:$0xff]
        %v1129 = vld [vmem:[#allocation2 + $0x72] sm:$0xff]
        %v1130 = vpack.c.bf16 %v1123, %v1122
        %v1131 = vpack.c.bf16 %v1125, %v1124
        %v1132 = vpack.c.bf16 %v1127, %v1126
        %v1133 = vpack.c.bf16 %v1129, %v1128
        %s1134 = scalar_lea.vmem %s3, 64
        %v1135 = vld [vmem:[%s1134] sm:$0xf]
        %v1136 = vld [vmem:[%s1134 + $0x4] sm:$0xf]
        %v1137 = vld [vmem:[%s1134 + $0x8] sm:$0xf]
        %v1138 = vld [vmem:[%s1134 + $0xc] sm:$0xf]
        %v1139 = vld [vmem:[%s1134 + $0x10] sm:$0xf]
        %v1140 = vld [vmem:[%s1134 + $0x14] sm:$0xf]
        %v1141 = vld [vmem:[%s1134 + $0x18] sm:$0xf]
        %v1142 = vld [vmem:[%s1134 + $0x1c] sm:$0xf]
        %v1151 = vunpack.c.l.b16 %v1135
        %v1152 = vunpack.c.l.b16 %v1136
        %v1153 = vunpack.c.l.b16 %v1137
        %v1154 = vunpack.c.l.b16 %v1138
        %v1155 = vunpack.c.l.b16 %v1139
        %v1156 = vunpack.c.l.b16 %v1140
        %v1157 = vunpack.c.l.b16 %v1141
        %v1158 = vunpack.c.l.b16 %v1142
        %v1159 = vpack.c.b16 %v1152, %v1151
        %v1160 = vpack.c.b16 %v1154, %v1153
        %v1161 = vpack.c.b16 %v1156, %v1155
        %v1162 = vpack.c.b16 %v1158, %v1157
        %v1168 = vsel %vm243, %v1130, 0
        %v1171 = vsel %vm243, %v1131, 0
        %v1174 = vsel %vm243, %v1132, 0
        %v1177 = vsel %vm243, %v1133, 0
        %1179 = vmatprep.subr.bf16.mxu0 0
        %1180 = vmatpush1.bf16.msra.mxu0 %v1159
        %1181 = vmatprep.subr.bf16.mxu0 0
        %1182 = vmatpush1.bf16.msra.mxu0 %v1160
        %1183 = vmatprep.subr.bf16.mxu0 0
        %1184 = vmatpush1.bf16.msra.mxu0 %v1161
        %1185 = vmatprep.subr.bf16.mxu0 0
        %1186 = vmatpush1.bf16.msra.mxu0 %v1162
        %1187 = vmatprep.subr.bf16.mxu0 0
        %1188 = vmatpush1.bf16.msra.mxu0 0
        %1189 = vmatprep.subr.bf16.mxu0 0
        %1190 = vmatpush1.bf16.msra.mxu0 0
        %1191 = vmatprep.subr.bf16.mxu0 0
        %1192 = vmatpush1.bf16.msra.mxu0 0
        %1193 = vmatprep.subr.bf16.mxu0 0
        %1194 = vmatpush1.bf16.msra.mxu0 0
        %1195 = vmatprep.subr.bf16.mxu0 0
        %1196 = vmatpush1.bf16.msra.mxu0 0
        %1197 = vmatprep.subr.bf16.mxu0 0
        %1198 = vmatpush1.bf16.msra.mxu0 0
        %1199 = vmatprep.subr.bf16.mxu0 0
        %1200 = vmatpush1.bf16.msra.mxu0 0
        %1201 = vmatprep.subr.bf16.mxu0 0
        %1202 = vmatpush1.bf16.msra.mxu0 0
        %1203 = vmatprep.subr.bf16.mxu0 0
        %1204 = vmatpush1.bf16.msra.mxu0 0
        %1205 = vmatprep.subr.bf16.mxu0 0
        %1206 = vmatpush1.bf16.msra.mxu0 0
        %1207 = vmatprep.subr.bf16.mxu0 0
        %1208 = vmatpush1.bf16.msra.mxu0 0
        %1209 = vmatprep.subr.bf16.mxu0 0
        %1210 = vmatpush1.bf16.msra.mxu0 0
        %1211 = vmatprep.mubr.bf16.mxu0 0
        %1212 = vmatmul.mubr.bf16.gmra.mrb[0].mxu0 %v1168
        %v1213 = vpop.f32.mrb[0].mxu0
        %v1214 = vadd.f32 0.0, %v1213
        %v1215 = vpop.f32.mrb[0].mxu0
        %v1216 = vpop.f32.mrb[0].mxu0
        %v1217 = vadd.f32 0.0, %v1216
        %v1218 = vpop.f32.mrb[0].mxu0
        %1219 = vmatprep.mubr.bf16.mxu0 0
        %1220 = vmatmul.mubr.bf16.gmra.mrb[0].mxu0 %v1171
        %v1221 = vpop.f32.mrb[0].mxu0
        %v1222 = vadd.f32 0.0, %v1221
        %v1223 = vpop.f32.mrb[0].mxu0
        %v1224 = vpop.f32.mrb[0].mxu0
        %v1225 = vadd.f32 0.0, %v1224
        %v1226 = vpop.f32.mrb[0].mxu0
        %1227 = vmatprep.mubr.bf16.mxu0 0
        %1228 = vmatmul.mubr.bf16.gmra.mrb[0].mxu0 %v1174
        %v1229 = vpop.f32.mrb[0].mxu0
        %v1230 = vadd.f32 0.0, %v1229
        %v1231 = vpop.f32.mrb[0].mxu0
        %v1232 = vpop.f32.mrb[0].mxu0
        %v1233 = vadd.f32 0.0, %v1232
        %v1234 = vpop.f32.mrb[0].mxu0
        %1235 = vmatprep.mubr.bf16.mxu0 0
        %1236 = vmatmul.mubr.bf16.gmra.mrb[0].mxu0 %v1177
        %v1237 = vpop.f32.mrb[0].mxu0
        %v1238 = vadd.f32 0.0, %v1237
        %v1239 = vpop.f32.mrb[0].mxu0
        %v1240 = vpop.f32.mrb[0].mxu0
        %v1241 = vadd.f32 0.0, %v1240
        %v1242 = vpop.f32.mrb[0].mxu0
        %1243 = vdwg.mxu0
        %v1244 = vadd.f32 %v1092, %v1214
        %v1245 = vadd.f32 %v1095, %v1217
        %v1246 = vadd.f32 %v1100, %v1222
        %v1247 = vadd.f32 %v1103, %v1225
        %v1248 = vadd.f32 %v1108, %v1230
        %v1249 = vadd.f32 %v1111, %v1233
        %v1250 = vadd.f32 %v1116, %v1238
        %v1251 = vadd.f32 %v1119, %v1241
        %v1252 = vld [vmem:[%s870] sm:$0xff]
        %v1253 = vld [vmem:[%s870 + $0x10] sm:$0xff]
        %v1254 = vld [vmem:[%s870 + $0x20] sm:$0xff]
        %v1255 = vld [vmem:[%s870 + $0x30] sm:$0xff]
        %v1256 = vld [vmem:[%s870 + $0x40] sm:$0xff]
        %v1257 = vld [vmem:[%s870 + $0x50] sm:$0xff]
        %v1258 = vld [vmem:[%s870 + $0x60] sm:$0xff]
        %v1259 = vld [vmem:[%s870 + $0x70] sm:$0xff]
        %v1260 = vpack.c.bf16 %v1253, %v1252
        %v1261 = vpack.c.bf16 %v1255, %v1254
        %v1262 = vpack.c.bf16 %v1257, %v1256
        %v1263 = vpack.c.bf16 %v1259, %v1258
        %s1264 = scalar_lea.vmem %s3, 96
        %v1265 = vld [vmem:[%s1264] sm:$0xf]
        %v1266 = vld [vmem:[%s1264 + $0x4] sm:$0xf]
        %v1267 = vld [vmem:[%s1264 + $0x8] sm:$0xf]
        %v1268 = vld [vmem:[%s1264 + $0xc] sm:$0xf]
        %v1269 = vld [vmem:[%s1264 + $0x10] sm:$0xf]
        %v1270 = vld [vmem:[%s1264 + $0x14] sm:$0xf]
        %v1271 = vld [vmem:[%s1264 + $0x18] sm:$0xf]
        %v1272 = vld [vmem:[%s1264 + $0x1c] sm:$0xf]
        %v1281 = vunpack.c.l.b16 %v1265
        %v1282 = vunpack.c.l.b16 %v1266
        %v1283 = vunpack.c.l.b16 %v1267
        %v1284 = vunpack.c.l.b16 %v1268
        %v1285 = vunpack.c.l.b16 %v1269
        %v1286 = vunpack.c.l.b16 %v1270
        %v1287 = vunpack.c.l.b16 %v1271
        %v1288 = vunpack.c.l.b16 %v1272
        %v1289 = vpack.c.b16 %v1282, %v1281
        %v1290 = vpack.c.b16 %v1284, %v1283
        %v1291 = vpack.c.b16 %v1286, %v1285
        %v1292 = vpack.c.b16 %v1288, %v1287
        %v1298 = vsel %vm243, %v1260, 0
        %v1301 = vsel %vm243, %v1261, 0
        %v1304 = vsel %vm243, %v1262, 0
        %v1307 = vsel %vm243, %v1263, 0
        %1309 = vmatprep.subr.bf16.mxu0 0
        %1310 = vmatpush1.bf16.msra.mxu0 %v1289
        %1311 = vmatprep.subr.bf16.mxu0 0
        %1312 = vmatpush1.bf16.msra.mxu0 %v1290
        %1313 = vmatprep.subr.bf16.mxu0 0
        %1314 = vmatpush1.bf16.msra.mxu0 %v1291
        %1315 = vmatprep.subr.bf16.mxu0 0
        %1316 = vmatpush1.bf16.msra.mxu0 %v1292
        %1317 = vmatprep.subr.bf16.mxu0 0
        %1318 = vmatpush1.bf16.msra.mxu0 0
        %1319 = vmatprep.subr.bf16.mxu0 0
        %1320 = vmatpush1.bf16.msra.mxu0 0
        %1321 = vmatprep.subr.bf16.mxu0 0
        %1322 = vmatpush1.bf16.msra.mxu0 0
        %1323 = vmatprep.subr.bf16.mxu0 0
        %1324 = vmatpush1.bf16.msra.mxu0 0
        %1325 = vmatprep.subr.bf16.mxu0 0
        %1326 = vmatpush1.bf16.msra.mxu0 0
        %1327 = vmatprep.subr.bf16.mxu0 0
        %1328 = vmatpush1.bf16.msra.mxu0 0
        %1329 = vmatprep.subr.bf16.mxu0 0
        %1330 = vmatpush1.bf16.msra.mxu0 0
        %1331 = vmatprep.subr.bf16.mxu0 0
        %1332 = vmatpush1.bf16.msra.mxu0 0
        %1333 = vmatprep.subr.bf16.mxu0 0
        %1334 = vmatpush1.bf16.msra.mxu0 0
        %1335 = vmatprep.subr.bf16.mxu0 0
        %1336 = vmatpush1.bf16.msra.mxu0 0
        %1337 = vmatprep.subr.bf16.mxu0 0
        %1338 = vmatpush1.bf16.msra.mxu0 0
        %1339 = vmatprep.subr.bf16.mxu0 0
        %1340 = vmatpush1.bf16.msra.mxu0 0
        %1341 = vmatprep.mubr.bf16.mxu0 0
        %1342 = vmatmul.mubr.bf16.gmra.mrb[0].mxu0 %v1298
        %v1343 = vpop.f32.mrb[0].mxu0
        %v1344 = vadd.f32 0.0, %v1343
        %v1345 = vpop.f32.mrb[0].mxu0
        %v1346 = vpop.f32.mrb[0].mxu0
        %v1347 = vadd.f32 0.0, %v1346
        %v1348 = vpop.f32.mrb[0].mxu0
        %1349 = vmatprep.mubr.bf16.mxu0 0
        %1350 = vmatmul.mubr.bf16.gmra.mrb[0].mxu0 %v1301
        %v1351 = vpop.f32.mrb[0].mxu0
        %v1352 = vadd.f32 0.0, %v1351
        %v1353 = vpop.f32.mrb[0].mxu0
        %v1354 = vpop.f32.mrb[0].mxu0
        %v1355 = vadd.f32 0.0, %v1354
        %v1356 = vpop.f32.mrb[0].mxu0
        %1357 = vmatprep.mubr.bf16.mxu0 0
        %1358 = vmatmul.mubr.bf16.gmra.mrb[0].mxu0 %v1304
        %v1359 = vpop.f32.mrb[0].mxu0
        %v1360 = vadd.f32 0.0, %v1359
        %v1361 = vpop.f32.mrb[0].mxu0
        %v1362 = vpop.f32.mrb[0].mxu0
        %v1363 = vadd.f32 0.0, %v1362
        %v1364 = vpop.f32.mrb[0].mxu0
        %1365 = vmatprep.mubr.bf16.mxu0 0
        %1366 = vmatmul.mubr.bf16.gmra.mrb[0].mxu0 %v1307
        %v1367 = vpop.f32.mrb[0].mxu0
        %v1368 = vadd.f32 0.0, %v1367
        %v1369 = vpop.f32.mrb[0].mxu0
        %v1370 = vpop.f32.mrb[0].mxu0
        %v1371 = vadd.f32 0.0, %v1370
        %v1372 = vpop.f32.mrb[0].mxu0
        %1373 = vdwg.mxu0
        %v1374 = vadd.f32 %v1244, %v1344
        %v1375 = vadd.f32 %v1245, %v1347
        %v1376 = vadd.f32 %v1246, %v1352
        %v1377 = vadd.f32 %v1247, %v1355
        %v1378 = vadd.f32 %v1248, %v1360
        %v1379 = vadd.f32 %v1249, %v1363
        %v1380 = vadd.f32 %v1250, %v1368
        %v1381 = vadd.f32 %v1251, %v1371
        %v1382 = vld [vmem:[%s870 + $0x1] sm:$0xff]
        %v1383 = vld [vmem:[%s870 + $0x11] sm:$0xff]
        %v1384 = vld [vmem:[%s870 + $0x21] sm:$0xff]
        %v1385 = vld [vmem:[%s870 + $0x31] sm:$0xff]
        %v1386 = vld [vmem:[%s870 + $0x41] sm:$0xff]
        %v1387 = vld [vmem:[%s870 + $0x51] sm:$0xff]
        %v1388 = vld [vmem:[%s870 + $0x61] sm:$0xff]
        %v1389 = vld [vmem:[%s870 + $0x71] sm:$0xff]
        %v1390 = vpack.c.bf16 %v1383, %v1382
        %v1391 = vpack.c.bf16 %v1385, %v1384
        %v1392 = vpack.c.bf16 %v1387, %v1386
        %v1393 = vpack.c.bf16 %v1389, %v1388
        %s1394 = scalar_lea.vmem %s3, 128
        %v1395 = vld [vmem:[%s1394] sm:$0xf]
        %v1396 = vld [vmem:[%s1394 + $0x4] sm:$0xf]
        %v1397 = vld [vmem:[%s1394 + $0x8] sm:$0xf]
        %v1398 = vld [vmem:[%s1394 + $0xc] sm:$0xf]
        %v1399 = vld [vmem:[%s1394 + $0x10] sm:$0xf]
        %v1400 = vld [vmem:[%s1394 + $0x14] sm:$0xf]
        %v1401 = vld [vmem:[%s1394 + $0x18] sm:$0xf]
        %v1402 = vld [vmem:[%s1394 + $0x1c] sm:$0xf]
        %v1411 = vunpack.c.l.b16 %v1395
        %v1412 = vunpack.c.l.b16 %v1396
        %v1413 = vunpack.c.l.b16 %v1397
        %v1414 = vunpack.c.l.b16 %v1398
        %v1415 = vunpack.c.l.b16 %v1399
        %v1416 = vunpack.c.l.b16 %v1400
        %v1417 = vunpack.c.l.b16 %v1401
        %v1418 = vunpack.c.l.b16 %v1402
        %v1419 = vpack.c.b16 %v1412, %v1411
        %v1420 = vpack.c.b16 %v1414, %v1413
        %v1421 = vpack.c.b16 %v1416, %v1415
        %v1422 = vpack.c.b16 %v1418, %v1417
        %v1428 = vsel %vm243, %v1390, 0
        %v1431 = vsel %vm243, %v1391, 0
        %v1434 = vsel %vm243, %v1392, 0
        %v1437 = vsel %vm243, %v1393, 0
        %1439 = vmatprep.subr.bf16.mxu0 0
        %1440 = vmatpush1.bf16.msra.mxu0 %v1419
        %1441 = vmatprep.subr.bf16.mxu0 0
        %1442 = vmatpush1.bf16.msra.mxu0 %v1420
        %1443 = vmatprep.subr.bf16.mxu0 0
        %1444 = vmatpush1.bf16.msra.mxu0 %v1421
        %1445 = vmatprep.subr.bf16.mxu0 0
        %1446 = vmatpush1.bf16.msra.mxu0 %v1422
        %1447 = vmatprep.subr.bf16.mxu0 0
        %1448 = vmatpush1.bf16.msra.mxu0 0
        %1449 = vmatprep.subr.bf16.mxu0 0
        %1450 = vmatpush1.bf16.msra.mxu0 0
        %1451 = vmatprep.subr.bf16.mxu0 0
        %1452 = vmatpush1.bf16.msra.mxu0 0
        %1453 = vmatprep.subr.bf16.mxu0 0
        %1454 = vmatpush1.bf16.msra.mxu0 0
        %1455 = vmatprep.subr.bf16.mxu0 0
        %1456 = vmatpush1.bf16.msra.mxu0 0
        %1457 = vmatprep.subr.bf16.mxu0 0
        %1458 = vmatpush1.bf16.msra.mxu0 0
        %1459 = vmatprep.subr.bf16.mxu0 0
        %1460 = vmatpush1.bf16.msra.mxu0 0
        %1461 = vmatprep.subr.bf16.mxu0 0
        %1462 = vmatpush1.bf16.msra.mxu0 0
        %1463 = vmatprep.subr.bf16.mxu0 0
        %1464 = vmatpush1.bf16.msra.mxu0 0
        %1465 = vmatprep.subr.bf16.mxu0 0
        %1466 = vmatpush1.bf16.msra.mxu0 0
        %1467 = vmatprep.subr.bf16.mxu0 0
        %1468 = vmatpush1.bf16.msra.mxu0 0
        %1469 = vmatprep.subr.bf16.mxu0 0
        %1470 = vmatpush1.bf16.msra.mxu0 0
        %1471 = vmatprep.mubr.bf16.mxu0 0
        %1472 = vmatmul.mubr.bf16.gmra.mrb[0].mxu0 %v1428
        %v1473 = vpop.f32.mrb[0].mxu0
        %v1474 = vadd.f32 0.0, %v1473
        %v1475 = vpop.f32.mrb[0].mxu0
        %v1476 = vpop.f32.mrb[0].mxu0
        %v1477 = vadd.f32 0.0, %v1476
        %v1478 = vpop.f32.mrb[0].mxu0
        %1479 = vmatprep.mubr.bf16.mxu0 0
        %1480 = vmatmul.mubr.bf16.gmra.mrb[0].mxu0 %v1431
        %v1481 = vpop.f32.mrb[0].mxu0
        %v1482 = vadd.f32 0.0, %v1481
        %v1483 = vpop.f32.mrb[0].mxu0
        %v1484 = vpop.f32.mrb[0].mxu0
        %v1485 = vadd.f32 0.0, %v1484
        %v1486 = vpop.f32.mrb[0].mxu0
        %1487 = vmatprep.mubr.bf16.mxu0 0
        %1488 = vmatmul.mubr.bf16.gmra.mrb[0].mxu0 %v1434
        %v1489 = vpop.f32.mrb[0].mxu0
        %v1490 = vadd.f32 0.0, %v1489
        %v1491 = vpop.f32.mrb[0].mxu0
        %v1492 = vpop.f32.mrb[0].mxu0
        %v1493 = vadd.f32 0.0, %v1492
        %v1494 = vpop.f32.mrb[0].mxu0
        %1495 = vmatprep.mubr.bf16.mxu0 0
        %1496 = vmatmul.mubr.bf16.gmra.mrb[0].mxu0 %v1437
        %v1497 = vpop.f32.mrb[0].mxu0
        %v1498 = vadd.f32 0.0, %v1497
        %v1499 = vpop.f32.mrb[0].mxu0
        %v1500 = vpop.f32.mrb[0].mxu0
        %v1501 = vadd.f32 0.0, %v1500
        %v1502 = vpop.f32.mrb[0].mxu0
        %1503 = vdwg.mxu0
        %v1504 = vadd.f32 %v1374, %v1474
        %v1505 = vadd.f32 %v1375, %v1477
        %v1506 = vadd.f32 %v1376, %v1482
        %v1507 = vadd.f32 %v1377, %v1485
        %v1508 = vadd.f32 %v1378, %v1490
        %v1509 = vadd.f32 %v1379, %v1493
        %v1510 = vadd.f32 %v1380, %v1498
        %v1511 = vadd.f32 %v1381, %v1501
        %v1512 = vld [vmem:[%s870 + $0x2] sm:$0xff]
        %v1513 = vld [vmem:[%s870 + $0x12] sm:$0xff]
        %v1514 = vld [vmem:[%s870 + $0x22] sm:$0xff]
        %v1515 = vld [vmem:[%s870 + $0x32] sm:$0xff]
        %v1516 = vld [vmem:[%s870 + $0x42] sm:$0xff]
        %v1517 = vld [vmem:[%s870 + $0x52] sm:$0xff]
        %v1518 = vld [vmem:[%s870 + $0x62] sm:$0xff]
        %v1519 = vld [vmem:[%s870 + $0x72] sm:$0xff]
        %v1520 = vpack.c.bf16 %v1513, %v1512
        %v1521 = vpack.c.bf16 %v1515, %v1514
        %v1522 = vpack.c.bf16 %v1517, %v1516
        %v1523 = vpack.c.bf16 %v1519, %v1518
        %s1524 = scalar_lea.vmem %s3, 160
        %v1525 = vld [vmem:[%s1524] sm:$0xf]
        %v1526 = vld [vmem:[%s1524 + $0x4] sm:$0xf]
        %v1527 = vld [vmem:[%s1524 + $0x8] sm:$0xf]
        %v1528 = vld [vmem:[%s1524 + $0xc] sm:$0xf]
        %v1529 = vld [vmem:[%s1524 + $0x10] sm:$0xf]
        %v1530 = vld [vmem:[%s1524 + $0x14] sm:$0xf]
        %v1531 = vld [vmem:[%s1524 + $0x18] sm:$0xf]
        %v1532 = vld [vmem:[%s1524 + $0x1c] sm:$0xf]
        %v1541 = vunpack.c.l.b16 %v1525
        %v1542 = vunpack.c.l.b16 %v1526
        %v1543 = vunpack.c.l.b16 %v1527
        %v1544 = vunpack.c.l.b16 %v1528
        %v1545 = vunpack.c.l.b16 %v1529
        %v1546 = vunpack.c.l.b16 %v1530
        %v1547 = vunpack.c.l.b16 %v1531
        %v1548 = vunpack.c.l.b16 %v1532
        %v1549 = vpack.c.b16 %v1542, %v1541
        %v1550 = vpack.c.b16 %v1544, %v1543
        %v1551 = vpack.c.b16 %v1546, %v1545
        %v1552 = vpack.c.b16 %v1548, %v1547
        %v1558 = vsel %vm243, %v1520, 0
        %v1561 = vsel %vm243, %v1521, 0
        %v1564 = vsel %vm243, %v1522, 0
        %v1567 = vsel %vm243, %v1523, 0
        %1569 = vmatprep.subr.bf16.mxu0 0
        %1570 = vmatpush1.bf16.msra.mxu0 %v1549
        %1571 = vmatprep.subr.bf16.mxu0 0
        %1572 = vmatpush1.bf16.msra.mxu0 %v1550
        %1573 = vmatprep.subr.bf16.mxu0 0
        %1574 = vmatpush1.bf16.msra.mxu0 %v1551
        %1575 = vmatprep.subr.bf16.mxu0 0
        %1576 = vmatpush1.bf16.msra.mxu0 %v1552
        %1577 = vmatprep.subr.bf16.mxu0 0
        %1578 = vmatpush1.bf16.msra.mxu0 0
        %1579 = vmatprep.subr.bf16.mxu0 0
        %1580 = vmatpush1.bf16.msra.mxu0 0
        %1581 = vmatprep.subr.bf16.mxu0 0
        %1582 = vmatpush1.bf16.msra.mxu0 0
        %1583 = vmatprep.subr.bf16.mxu0 0
        %1584 = vmatpush1.bf16.msra.mxu0 0
        %1585 = vmatprep.subr.bf16.mxu0 0
        %1586 = vmatpush1.bf16.msra.mxu0 0
        %1587 = vmatprep.subr.bf16.mxu0 0
        %1588 = vmatpush1.bf16.msra.mxu0 0
        %1589 = vmatprep.subr.bf16.mxu0 0
        %1590 = vmatpush1.bf16.msra.mxu0 0
        %1591 = vmatprep.subr.bf16.mxu0 0
        %1592 = vmatpush1.bf16.msra.mxu0 0
        %1593 = vmatprep.subr.bf16.mxu0 0
        %1594 = vmatpush1.bf16.msra.mxu0 0
        %1595 = vmatprep.subr.bf16.mxu0 0
        %1596 = vmatpush1.bf16.msra.mxu0 0
        %1597 = vmatprep.subr.bf16.mxu0 0
        %1598 = vmatpush1.bf16.msra.mxu0 0
        %1599 = vmatprep.subr.bf16.mxu0 0
        %1600 = vmatpush1.bf16.msra.mxu0 0
        %1601 = vmatprep.mubr.bf16.mxu0 0
        %1602 = vmatmul.mubr.bf16.gmra.mrb[0].mxu0 %v1558
        %v1603 = vpop.f32.mrb[0].mxu0
        %v1604 = vadd.f32 0.0, %v1603
        %v1605 = vpop.f32.mrb[0].mxu0
        %v1606 = vpop.f32.mrb[0].mxu0
        %v1607 = vadd.f32 0.0, %v1606
        %v1608 = vpop.f32.mrb[0].mxu0
        %1609 = vmatprep.mubr.bf16.mxu0 0
        %1610 = vmatmul.mubr.bf16.gmra.mrb[0].mxu0 %v1561
        %v1611 = vpop.f32.mrb[0].mxu0
        %v1612 = vadd.f32 0.0, %v1611
        %v1613 = vpop.f32.mrb[0].mxu0
        %v1614 = vpop.f32.mrb[0].mxu0
        %v1615 = vadd.f32 0.0, %v1614
        %v1616 = vpop.f32.mrb[0].mxu0
        %1617 = vmatprep.mubr.bf16.mxu0 0
        %1618 = vmatmul.mubr.bf16.gmra.mrb[0].mxu0 %v1564
        %v1619 = vpop.f32.mrb[0].mxu0
        %v1620 = vadd.f32 0.0, %v1619
        %v1621 = vpop.f32.mrb[0].mxu0
        %v1622 = vpop.f32.mrb[0].mxu0
        %v1623 = vadd.f32 0.0, %v1622
        %v1624 = vpop.f32.mrb[0].mxu0
        %1625 = vmatprep.mubr.bf16.mxu0 0
        %1626 = vmatmul.mubr.bf16.gmra.mrb[0].mxu0 %v1567
        %v1627 = vpop.f32.mrb[0].mxu0
        %v1628 = vadd.f32 0.0, %v1627
        %v1629 = vpop.f32.mrb[0].mxu0
        %v1630 = vpop.f32.mrb[0].mxu0
        %v1631 = vadd.f32 0.0, %v1630
        %v1632 = vpop.f32.mrb[0].mxu0
        %1633 = vdwg.mxu0
        %v1634 = vadd.f32 %v1504, %v1604
        %v1635 = vadd.f32 %v1505, %v1607
        %v1636 = vadd.f32 %v1506, %v1612
        %v1637 = vadd.f32 %v1507, %v1615
        %v1638 = vadd.f32 %v1508, %v1620
        %v1639 = vadd.f32 %v1509, %v1623
        %v1640 = vadd.f32 %v1510, %v1628
        %v1641 = vadd.f32 %v1511, %v1631
        %s1642 = scalar_lea.vmem [#allocation2], 32
        %v1643 = vld [vmem:[%s1642] sm:$0xff]
        %v1644 = vld [vmem:[%s1642 + $0x10] sm:$0xff]
        %v1645 = vld [vmem:[%s1642 + $0x20] sm:$0xff]
        %v1646 = vld [vmem:[%s1642 + $0x30] sm:$0xff]
        %v1647 = vld [vmem:[%s1642 + $0x40] sm:$0xff]
        %v1648 = vld [vmem:[%s1642 + $0x50] sm:$0xff]
        %v1649 = vld [vmem:[%s1642 + $0x60] sm:$0xff]
        %v1650 = vld [vmem:[%s1642 + $0x70] sm:$0xff]
        %v1651 = vpack.c.bf16 %v1644, %v1643
        %v1652 = vpack.c.bf16 %v1646, %v1645
        %v1653 = vpack.c.bf16 %v1648, %v1647
        %v1654 = vpack.c.bf16 %v1650, %v1649
        %s1655 = scalar_lea.vmem %s3, 192
        %v1656 = vld [vmem:[%s1655] sm:$0xf]
        %v1657 = vld [vmem:[%s1655 + $0x4] sm:$0xf]
        %v1658 = vld [vmem:[%s1655 + $0x8] sm:$0xf]
        %v1659 = vld [vmem:[%s1655 + $0xc] sm:$0xf]
        %v1660 = vld [vmem:[%s1655 + $0x10] sm:$0xf]
        %v1661 = vld [vmem:[%s1655 + $0x14] sm:$0xf]
        %v1662 = vld [vmem:[%s1655 + $0x18] sm:$0xf]
        %v1663 = vld [vmem:[%s1655 + $0x1c] sm:$0xf]
        %v1672 = vunpack.c.l.b16 %v1656
        %v1673 = vunpack.c.l.b16 %v1657
        %v1674 = vunpack.c.l.b16 %v1658
        %v1675 = vunpack.c.l.b16 %v1659
        %v1676 = vunpack.c.l.b16 %v1660
        %v1677 = vunpack.c.l.b16 %v1661
        %v1678 = vunpack.c.l.b16 %v1662
        %v1679 = vunpack.c.l.b16 %v1663
        %v1680 = vpack.c.b16 %v1673, %v1672
        %v1681 = vpack.c.b16 %v1675, %v1674
        %v1682 = vpack.c.b16 %v1677, %v1676
        %v1683 = vpack.c.b16 %v1679, %v1678
        %v1689 = vsel %vm243, %v1651, 0
        %v1692 = vsel %vm243, %v1652, 0
        %v1695 = vsel %vm243, %v1653, 0
        %v1698 = vsel %vm243, %v1654, 0
        %1700 = vmatprep.subr.bf16.mxu0 0
        %1701 = vmatpush1.bf16.msra.mxu0 %v1680
        %1702 = vmatprep.subr.bf16.mxu0 0
        %1703 = vmatpush1.bf16.msra.mxu0 %v1681
        %1704 = vmatprep.subr.bf16.mxu0 0
        %1705 = vmatpush1.bf16.msra.mxu0 %v1682
        %1706 = vmatprep.subr.bf16.mxu0 0
        %1707 = vmatpush1.bf16.msra.mxu0 %v1683
        %1708 = vmatprep.subr.bf16.mxu0 0
        %1709 = vmatpush1.bf16.msra.mxu0 0
        %1710 = vmatprep.subr.bf16.mxu0 0
        %1711 = vmatpush1.bf16.msra.mxu0 0
        %1712 = vmatprep.subr.bf16.mxu0 0
        %1713 = vmatpush1.bf16.msra.mxu0 0
        %1714 = vmatprep.subr.bf16.mxu0 0
        %1715 = vmatpush1.bf16.msra.mxu0 0
        %1716 = vmatprep.subr.bf16.mxu0 0
        %1717 = vmatpush1.bf16.msra.mxu0 0
        %1718 = vmatprep.subr.bf16.mxu0 0
        %1719 = vmatpush1.bf16.msra.mxu0 0
        %1720 = vmatprep.subr.bf16.mxu0 0
        %1721 = vmatpush1.bf16.msra.mxu0 0
        %1722 = vmatprep.subr.bf16.mxu0 0
        %1723 = vmatpush1.bf16.msra.mxu0 0
        %1724 = vmatprep.subr.bf16.mxu0 0
        %1725 = vmatpush1.bf16.msra.mxu0 0
        %1726 = vmatprep.subr.bf16.mxu0 0
        %1727 = vmatpush1.bf16.msra.mxu0 0
        %1728 = vmatprep.subr.bf16.mxu0 0
        %1729 = vmatpush1.bf16.msra.mxu0 0
        %1730 = vmatprep.subr.bf16.mxu0 0
        %1731 = vmatpush1.bf16.msra.mxu0 0
        %1732 = vmatprep.mubr.bf16.mxu0 0
        %1733 = vmatmul.mubr.bf16.gmra.mrb[0].mxu0 %v1689
        %v1734 = vpop.f32.mrb[0].mxu0
        %v1735 = vadd.f32 0.0, %v1734
        %v1736 = vpop.f32.mrb[0].mxu0
        %v1737 = vpop.f32.mrb[0].mxu0
        %v1738 = vadd.f32 0.0, %v1737
        %v1739 = vpop.f32.mrb[0].mxu0
        %1740 = vmatprep.mubr.bf16.mxu0 0
        %1741 = vmatmul.mubr.bf16.gmra.mrb[0].mxu0 %v1692
        %v1742 = vpop.f32.mrb[0].mxu0
        %v1743 = vadd.f32 0.0, %v1742
        %v1744 = vpop.f32.mrb[0].mxu0
        %v1745 = vpop.f32.mrb[0].mxu0
        %v1746 = vadd.f32 0.0, %v1745
        %v1747 = vpop.f32.mrb[0].mxu0
        %1748 = vmatprep.mubr.bf16.mxu0 0
        %1749 = vmatmul.mubr.bf16.gmra.mrb[0].mxu0 %v1695
        %v1750 = vpop.f32.mrb[0].mxu0
        %v1751 = vadd.f32 0.0, %v1750
        %v1752 = vpop.f32.mrb[0].mxu0
        %v1753 = vpop.f32.mrb[0].mxu0
        %v1754 = vadd.f32 0.0, %v1753
        %v1755 = vpop.f32.mrb[0].mxu0
        %1756 = vmatprep.mubr.bf16.mxu0 0
        %1757 = vmatmul.mubr.bf16.gmra.mrb[0].mxu0 %v1698
        %v1758 = vpop.f32.mrb[0].mxu0
        %v1759 = vadd.f32 0.0, %v1758
        %v1760 = vpop.f32.mrb[0].mxu0
        %v1761 = vpop.f32.mrb[0].mxu0
        %v1762 = vadd.f32 0.0, %v1761
        %v1763 = vpop.f32.mrb[0].mxu0
        %1764 = vdwg.mxu0
        %v1765 = vadd.f32 %v1634, %v1735
        %v1766 = vadd.f32 %v1635, %v1738
        %v1767 = vadd.f32 %v1636, %v1743
        %v1768 = vadd.f32 %v1637, %v1746
        %v1769 = vadd.f32 %v1638, %v1751
        %v1770 = vadd.f32 %v1639, %v1754
        %v1771 = vadd.f32 %v1640, %v1759
        %v1772 = vadd.f32 %v1641, %v1762
        %v1773 = vld [vmem:[%s1642 + $0x1] sm:$0xff]
        %v1774 = vld [vmem:[%s1642 + $0x11] sm:$0xff]
        %v1775 = vld [vmem:[%s1642 + $0x21] sm:$0xff]
        %v1776 = vld [vmem:[%s1642 + $0x31] sm:$0xff]
        %v1777 = vld [vmem:[%s1642 + $0x41] sm:$0xff]
        %v1778 = vld [vmem:[%s1642 + $0x51] sm:$0xff]
        %v1779 = vld [vmem:[%s1642 + $0x61] sm:$0xff]
        %v1780 = vld [vmem:[%s1642 + $0x71] sm:$0xff]
        %v1781 = vpack.c.bf16 %v1774, %v1773
        %v1782 = vpack.c.bf16 %v1776, %v1775
        %v1783 = vpack.c.bf16 %v1778, %v1777
        %v1784 = vpack.c.bf16 %v1780, %v1779
        %s1785 = scalar_lea.vmem %s3, 224
        %v1786 = vld [vmem:[%s1785] sm:$0xf]
        %v1787 = vld [vmem:[%s1785 + $0x4] sm:$0xf]
        %v1788 = vld [vmem:[%s1785 + $0x8] sm:$0xf]
        %v1789 = vld [vmem:[%s1785 + $0xc] sm:$0xf]
        %v1790 = vld [vmem:[%s1785 + $0x10] sm:$0xf]
        %v1791 = vld [vmem:[%s1785 + $0x14] sm:$0xf]
        %v1792 = vld [vmem:[%s1785 + $0x18] sm:$0xf]
        %v1793 = vld [vmem:[%s1785 + $0x1c] sm:$0xf]
        %v1802 = vunpack.c.l.b16 %v1786
        %v1803 = vunpack.c.l.b16 %v1787
        %v1804 = vunpack.c.l.b16 %v1788
        %v1805 = vunpack.c.l.b16 %v1789
        %v1806 = vunpack.c.l.b16 %v1790
        %v1807 = vunpack.c.l.b16 %v1791
        %v1808 = vunpack.c.l.b16 %v1792
        %v1809 = vunpack.c.l.b16 %v1793
        %v1810 = vpack.c.b16 %v1803, %v1802
        %v1811 = vpack.c.b16 %v1805, %v1804
        %v1812 = vpack.c.b16 %v1807, %v1806
        %v1813 = vpack.c.b16 %v1809, %v1808
        %v1819 = vsel %vm243, %v1781, 0
        %v1822 = vsel %vm243, %v1782, 0
        %v1825 = vsel %vm243, %v1783, 0
        %v1828 = vsel %vm243, %v1784, 0
        %1830 = vmatprep.subr.bf16.mxu0 0
        %1831 = vmatpush1.bf16.msra.mxu0 %v1810
        %1832 = vmatprep.subr.bf16.mxu0 0
        %1833 = vmatpush1.bf16.msra.mxu0 %v1811
        %1834 = vmatprep.subr.bf16.mxu0 0
        %1835 = vmatpush1.bf16.msra.mxu0 %v1812
        %1836 = vmatprep.subr.bf16.mxu0 0
        %1837 = vmatpush1.bf16.msra.mxu0 %v1813
        %1838 = vmatprep.subr.bf16.mxu0 0
        %1839 = vmatpush1.bf16.msra.mxu0 0
        %1840 = vmatprep.subr.bf16.mxu0 0
        %1841 = vmatpush1.bf16.msra.mxu0 0
        %1842 = vmatprep.subr.bf16.mxu0 0
        %1843 = vmatpush1.bf16.msra.mxu0 0
        %1844 = vmatprep.subr.bf16.mxu0 0
        %1845 = vmatpush1.bf16.msra.mxu0 0
        %1846 = vmatprep.subr.bf16.mxu0 0
        %1847 = vmatpush1.bf16.msra.mxu0 0
        %1848 = vmatprep.subr.bf16.mxu0 0
        %1849 = vmatpush1.bf16.msra.mxu0 0
        %1850 = vmatprep.subr.bf16.mxu0 0
        %1851 = vmatpush1.bf16.msra.mxu0 0
        %1852 = vmatprep.subr.bf16.mxu0 0
        %1853 = vmatpush1.bf16.msra.mxu0 0
        %1854 = vmatprep.subr.bf16.mxu0 0
        %1855 = vmatpush1.bf16.msra.mxu0 0
        %1856 = vmatprep.subr.bf16.mxu0 0
        %1857 = vmatpush1.bf16.msra.mxu0 0
        %1858 = vmatprep.subr.bf16.mxu0 0
        %1859 = vmatpush1.bf16.msra.mxu0 0
        %1860 = vmatprep.subr.bf16.mxu0 0
        %1861 = vmatpush1.bf16.msra.mxu0 0
        %1862 = vmatprep.mubr.bf16.mxu0 0
        %1863 = vmatmul.mubr.bf16.gmra.mrb[0].mxu0 %v1819
        %v1864 = vpop.f32.mrb[0].mxu0
        %v1865 = vadd.f32 0.0, %v1864
        %v1866 = vpop.f32.mrb[0].mxu0
        %v1867 = vpop.f32.mrb[0].mxu0
        %v1868 = vadd.f32 0.0, %v1867
        %v1869 = vpop.f32.mrb[0].mxu0
        %1870 = vmatprep.mubr.bf16.mxu0 0
        %1871 = vmatmul.mubr.bf16.gmra.mrb[0].mxu0 %v1822
        %v1872 = vpop.f32.mrb[0].mxu0
        %v1873 = vadd.f32 0.0, %v1872
        %v1874 = vpop.f32.mrb[0].mxu0
        %v1875 = vpop.f32.mrb[0].mxu0
        %v1876 = vadd.f32 0.0, %v1875
        %v1877 = vpop.f32.mrb[0].mxu0
        %1878 = vmatprep.mubr.bf16.mxu0 0
        %1879 = vmatmul.mubr.bf16.gmra.mrb[0].mxu0 %v1825
        %v1880 = vpop.f32.mrb[0].mxu0
        %v1881 = vadd.f32 0.0, %v1880
        %v1882 = vpop.f32.mrb[0].mxu0
        %v1883 = vpop.f32.mrb[0].mxu0
        %v1884 = vadd.f32 0.0, %v1883
        %v1885 = vpop.f32.mrb[0].mxu0
        %1886 = vmatprep.mubr.bf16.mxu0 0
        %1887 = vmatmul.mubr.bf16.gmra.mrb[0].mxu0 %v1828
        %v1888 = vpop.f32.mrb[0].mxu0
        %v1889 = vadd.f32 0.0, %v1888
        %v1890 = vpop.f32.mrb[0].mxu0
        %v1891 = vpop.f32.mrb[0].mxu0
        %v1892 = vadd.f32 0.0, %v1891
        %v1893 = vpop.f32.mrb[0].mxu0
        %1894 = vdwg.mxu0
        %v1895 = vadd.f32 %v1765, %v1865
        %v1896 = vadd.f32 %v1766, %v1868
        %v1897 = vadd.f32 %v1767, %v1873
        %v1898 = vadd.f32 %v1768, %v1876
        %v1899 = vadd.f32 %v1769, %v1881
        %v1900 = vadd.f32 %v1770, %v1884
        %v1901 = vadd.f32 %v1771, %v1889
        %v1902 = vadd.f32 %v1772, %v1892
        %v1903 = vld [vmem:[%s1642 + $0x2] sm:$0xff]
        %v1904 = vld [vmem:[%s1642 + $0x12] sm:$0xff]
        %v1905 = vld [vmem:[%s1642 + $0x22] sm:$0xff]
        %v1906 = vld [vmem:[%s1642 + $0x32] sm:$0xff]
        %v1907 = vld [vmem:[%s1642 + $0x42] sm:$0xff]
        %v1908 = vld [vmem:[%s1642 + $0x52] sm:$0xff]
        %v1909 = vld [vmem:[%s1642 + $0x62] sm:$0xff]
        %v1910 = vld [vmem:[%s1642 + $0x72] sm:$0xff]
        %v1911 = vpack.c.bf16 %v1904, %v1903
        %v1912 = vpack.c.bf16 %v1906, %v1905
        %v1913 = vpack.c.bf16 %v1908, %v1907
        %v1914 = vpack.c.bf16 %v1910, %v1909
        %s1915 = scalar_lea.vmem %s3, 256
        %v1916 = vld [vmem:[%s1915] sm:$0xf]
        %v1917 = vld [vmem:[%s1915 + $0x4] sm:$0xf]
        %v1918 = vld [vmem:[%s1915 + $0x8] sm:$0xf]
        %v1919 = vld [vmem:[%s1915 + $0xc] sm:$0xf]
        %v1920 = vld [vmem:[%s1915 + $0x10] sm:$0xf]
        %v1921 = vld [vmem:[%s1915 + $0x14] sm:$0xf]
        %v1922 = vld [vmem:[%s1915 + $0x18] sm:$0xf]
        %v1923 = vld [vmem:[%s1915 + $0x1c] sm:$0xf]
        %v1932 = vunpack.c.l.b16 %v1916
        %v1933 = vunpack.c.l.b16 %v1917
        %v1934 = vunpack.c.l.b16 %v1918
        %v1935 = vunpack.c.l.b16 %v1919
        %v1936 = vunpack.c.l.b16 %v1920
        %v1937 = vunpack.c.l.b16 %v1921
        %v1938 = vunpack.c.l.b16 %v1922
        %v1939 = vunpack.c.l.b16 %v1923
        %v1940 = vpack.c.b16 %v1933, %v1932
        %v1941 = vpack.c.b16 %v1935, %v1934
        %v1942 = vpack.c.b16 %v1937, %v1936
        %v1943 = vpack.c.b16 %v1939, %v1938
        %v1949 = vsel %vm243, %v1911, 0
        %v1952 = vsel %vm243, %v1912, 0
        %v1955 = vsel %vm243, %v1913, 0
        %v1958 = vsel %vm243, %v1914, 0
        %1960 = vmatprep.subr.bf16.mxu0 0
        %1961 = vmatpush1.bf16.msra.mxu0 %v1940
        %1962 = vmatprep.subr.bf16.mxu0 0
        %1963 = vmatpush1.bf16.msra.mxu0 %v1941
        %1964 = vmatprep.subr.bf16.mxu0 0
        %1965 = vmatpush1.bf16.msra.mxu0 %v1942
        %1966 = vmatprep.subr.bf16.mxu0 0
        %1967 = vmatpush1.bf16.msra.mxu0 %v1943
        %1968 = vmatprep.subr.bf16.mxu0 0
        %1969 = vmatpush1.bf16.msra.mxu0 0
        %1970 = vmatprep.subr.bf16.mxu0 0
        %1971 = vmatpush1.bf16.msra.mxu0 0
        %1972 = vmatprep.subr.bf16.mxu0 0
        %1973 = vmatpush1.bf16.msra.mxu0 0
        %1974 = vmatprep.subr.bf16.mxu0 0
        %1975 = vmatpush1.bf16.msra.mxu0 0
        %1976 = vmatprep.subr.bf16.mxu0 0
        %1977 = vmatpush1.bf16.msra.mxu0 0
        %1978 = vmatprep.subr.bf16.mxu0 0
        %1979 = vmatpush1.bf16.msra.mxu0 0
        %1980 = vmatprep.subr.bf16.mxu0 0
        %1981 = vmatpush1.bf16.msra.mxu0 0
        %1982 = vmatprep.subr.bf16.mxu0 0
        %1983 = vmatpush1.bf16.msra.mxu0 0
        %1984 = vmatprep.subr.bf16.mxu0 0
        %1985 = vmatpush1.bf16.msra.mxu0 0
        %1986 = vmatprep.subr.bf16.mxu0 0
        %1987 = vmatpush1.bf16.msra.mxu0 0
        %1988 = vmatprep.subr.bf16.mxu0 0
        %1989 = vmatpush1.bf16.msra.mxu0 0
        %1990 = vmatprep.subr.bf16.mxu0 0
        %1991 = vmatpush1.bf16.msra.mxu0 0
        %1992 = vmatprep.mubr.bf16.mxu0 0
        %1993 = vmatmul.mubr.bf16.gmra.mrb[0].mxu0 %v1949
        %v1994 = vpop.f32.mrb[0].mxu0
        %v1995 = vadd.f32 0.0, %v1994
        %v1996 = vpop.f32.mrb[0].mxu0
        %v1997 = vpop.f32.mrb[0].mxu0
        %v1998 = vadd.f32 0.0, %v1997
        %v1999 = vpop.f32.mrb[0].mxu0
        %2000 = vmatprep.mubr.bf16.mxu0 0
        %2001 = vmatmul.mubr.bf16.gmra.mrb[0].mxu0 %v1952
        %v2002 = vpop.f32.mrb[0].mxu0
        %v2003 = vadd.f32 0.0, %v2002
        %v2004 = vpop.f32.mrb[0].mxu0
        %v2005 = vpop.f32.mrb[0].mxu0
        %v2006 = vadd.f32 0.0, %v2005
        %v2007 = vpop.f32.mrb[0].mxu0
        %2008 = vmatprep.mubr.bf16.mxu0 0
        %2009 = vmatmul.mubr.bf16.gmra.mrb[0].mxu0 %v1955
        %v2010 = vpop.f32.mrb[0].mxu0
        %v2011 = vadd.f32 0.0, %v2010
        %v2012 = vpop.f32.mrb[0].mxu0
        %v2013 = vpop.f32.mrb[0].mxu0
        %v2014 = vadd.f32 0.0, %v2013
        %v2015 = vpop.f32.mrb[0].mxu0
        %2016 = vmatprep.mubr.bf16.mxu0 0
        %2017 = vmatmul.mubr.bf16.gmra.mrb[0].mxu0 %v1958
        %v2018 = vpop.f32.mrb[0].mxu0
        %v2019 = vadd.f32 0.0, %v2018
        %v2020 = vpop.f32.mrb[0].mxu0
        %v2021 = vpop.f32.mrb[0].mxu0
        %v2022 = vadd.f32 0.0, %v2021
        %v2023 = vpop.f32.mrb[0].mxu0
        %2024 = vdwg.mxu0
        %v2025 = vadd.f32 %v1895, %v1995
        %v2026 = vadd.f32 %v1896, %v1998
        %v2027 = vadd.f32 %v1897, %v2003
        %v2028 = vadd.f32 %v1898, %v2006
        %v2029 = vadd.f32 %v1899, %v2011
        %v2030 = vadd.f32 %v1900, %v2014
        %v2031 = vadd.f32 %v1901, %v2019
        %v2032 = vadd.f32 %v1902, %v2022
        %v2033 = vld [vmem:[%s4 + $0x1] sm:$0x1]
        %v2034 = vlaneseq
        %v2035 = vshrl.u32 %v2034, 7
        %v2036 = vsub.s32 0, %v2035
        %v2037 = vrot.slane %v2033, %v2036
        %v2038 = vadd.f32 %v2025, %v2037
        %v2039 = vadd.f32 %v2026, %v2037
        %v2040 = vadd.f32 %v2027, %v2037
        %v2041 = vadd.f32 %v2028, %v2037
        %v2042 = vadd.f32 %v2029, %v2037
        %v2043 = vadd.f32 %v2030, %v2037
        %v2044 = vadd.f32 %v2031, %v2037
        %v2045 = vadd.f32 %v2032, %v2037
        %v2046 = vld [vmem:[%s241] sm:$0xff]
        %v2047 = vld [vmem:[%s241 + $0x8] sm:$0xff]
        %v2048 = vld [vmem:[%s241 + $0x10] sm:$0xff]
        %v2049 = vld [vmem:[%s241 + $0x18] sm:$0xff]
        %v2050 = vld [vmem:[%s241 + $0x20] sm:$0xff]
        %v2051 = vld [vmem:[%s241 + $0x28] sm:$0xff]
        %v2052 = vld [vmem:[%s241 + $0x30] sm:$0xff]
        %v2053 = vld [vmem:[%s241 + $0x38] sm:$0xff]
        %v2054 = vadd.f32 %v2038, %v2046
        %v2055 = vadd.f32 %v2039, %v2047
        %v2056 = vadd.f32 %v2040, %v2048
        %v2057 = vadd.f32 %v2041, %v2049
        %v2058 = vadd.f32 %v2042, %v2050
        %v2059 = vadd.f32 %v2043, %v2051
        %v2060 = vadd.f32 %v2044, %v2052
        %v2061 = vadd.f32 %v2045, %v2053
        %v2062 = vmax.f32 %v2054, 0.0
        %v2063 = vmax.f32 %v2055, 0.0
        %v2064 = vmax.f32 %v2056, 0.0
        %v2065 = vmax.f32 %v2057, 0.0
        %v2066 = vmax.f32 %v2058, 0.0
        %v2067 = vmax.f32 %v2059, 0.0
        %v2068 = vmax.f32 %v2060, 0.0
        %v2069 = vmax.f32 %v2061, 0.0
        %2070 = vst.msk [vmem:[%s870 + $0x1] sm:$0xff] %vm243, %v2062
        %2071 = vst.msk [vmem:[%s870 + $0x11] sm:$0xff] %vm243, %v2063
        %2072 = vst.msk [vmem:[%s870 + $0x21] sm:$0xff] %vm243, %v2064
        %2073 = vst.msk [vmem:[%s870 + $0x31] sm:$0xff] %vm243, %v2065
        %2074 = vst.msk [vmem:[%s870 + $0x41] sm:$0xff] %vm243, %v2066
        %2075 = vst.msk [vmem:[%s870 + $0x51] sm:$0xff] %vm243, %v2067
        %2076 = vst.msk [vmem:[%s870 + $0x61] sm:$0xff] %vm243, %v2068
        %2077 = vst.msk [vmem:[%s870 + $0x71] sm:$0xff] %vm243, %v2069
        %v2078 = vld [vmem:[#allocation2] sm:$0xff]
        %v2079 = vld [vmem:[#allocation2 + $0x10] sm:$0xff]
        %v2080 = vld [vmem:[#allocation2 + $0x20] sm:$0xff]
        %v2081 = vld [vmem:[#allocation2 + $0x30] sm:$0xff]
        %v2082 = vld [vmem:[#allocation2 + $0x40] sm:$0xff]
        %v2083 = vld [vmem:[#allocation2 + $0x50] sm:$0xff]
        %v2084 = vld [vmem:[#allocation2 + $0x60] sm:$0xff]
        %v2085 = vld [vmem:[#allocation2 + $0x70] sm:$0xff]
        %v2086 = vpack.c.bf16 %v2079, %v2078
        %v2087 = vpack.c.bf16 %v2081, %v2080
        %v2088 = vpack.c.bf16 %v2083, %v2082
        %v2089 = vpack.c.bf16 %v2085, %v2084
        %s2090 = scalar_lea.vmem %s3, 288
        %v2091 = vld [vmem:[%s2090] sm:$0xf]
        %v2092 = vld [vmem:[%s2090 + $0x4] sm:$0xf]
        %v2093 = vld [vmem:[%s2090 + $0x8] sm:$0xf]
        %v2094 = vld [vmem:[%s2090 + $0xc] sm:$0xf]
        %v2095 = vld [vmem:[%s2090 + $0x10] sm:$0xf]
        %v2096 = vld [vmem:[%s2090 + $0x14] sm:$0xf]
        %v2097 = vld [vmem:[%s2090 + $0x18] sm:$0xf]
        %v2098 = vld [vmem:[%s2090 + $0x1c] sm:$0xf]
        %v2099 = vld [vmem:[#allocation2 + $0x1] sm:$0xff]
        %v2100 = vld [vmem:[#allocation2 + $0x11] sm:$0xff]
        %v2101 = vld [vmem:[#allocation2 + $0x21] sm:$0xff]
        %v2102 = vld [vmem:[#allocation2 + $0x31] sm:$0xff]
        %v2103 = vld [vmem:[#allocation2 + $0x41] sm:$0xff]
        %v2104 = vld [vmem:[#allocation2 + $0x51] sm:$0xff]
        %v2105 = vld [vmem:[#allocation2 + $0x61] sm:$0xff]
        %v2106 = vld [vmem:[#allocation2 + $0x71] sm:$0xff]
        %v2107 = vpack.c.bf16 %v2100, %v2099
        %v2108 = vpack.c.bf16 %v2102, %v2101
        %v2109 = vpack.c.bf16 %v2104, %v2103
        %v2110 = vpack.c.bf16 %v2106, %v2105
        %s2111 = scalar_lea.vmem %s3, 320
        %v2112 = vld [vmem:[%s2111] sm:$0xf]
        %v2113 = vld [vmem:[%s2111 + $0x4] sm:$0xf]
        %v2114 = vld [vmem:[%s2111 + $0x8] sm:$0xf]
        %v2115 = vld [vmem:[%s2111 + $0xc] sm:$0xf]
        %v2116 = vld [vmem:[%s2111 + $0x10] sm:$0xf]
        %v2117 = vld [vmem:[%s2111 + $0x14] sm:$0xf]
        %v2118 = vld [vmem:[%s2111 + $0x18] sm:$0xf]
        %v2119 = vld [vmem:[%s2111 + $0x1c] sm:$0xf]
        %v2128 = vunpack.c.l.b16 %v2112
        %v2129 = vunpack.c.l.b16 %v2113
        %v2130 = vunpack.c.l.b16 %v2114
        %v2131 = vunpack.c.l.b16 %v2115
        %v2132 = vunpack.c.l.b16 %v2116
        %v2133 = vunpack.c.l.b16 %v2117
        %v2134 = vunpack.c.l.b16 %v2118
        %v2135 = vunpack.c.l.b16 %v2119
        %v2136 = vpack.c.b16 %v2129, %v2128
        %v2137 = vpack.c.b16 %v2131, %v2130
        %v2138 = vpack.c.b16 %v2133, %v2132
        %v2139 = vpack.c.b16 %v2135, %v2134
        %v2145 = vsel %vm243, %v2107, 0
        %v2148 = vsel %vm243, %v2108, 0
        %v2151 = vsel %vm243, %v2109, 0
        %v2154 = vsel %vm243, %v2110, 0
        %2156 = vmatprep.subr.bf16.mxu0 0
        %2157 = vmatpush1.bf16.msra.mxu0 %v2136
        %2158 = vmatprep.subr.bf16.mxu0 0
        %2159 = vmatpush1.bf16.msra.mxu0 %v2137
        %2160 = vmatprep.subr.bf16.mxu0 0
        %2161 = vmatpush1.bf16.msra.mxu0 %v2138
        %2162 = vmatprep.subr.bf16.mxu0 0
        %2163 = vmatpush1.bf16.msra.mxu0 %v2139
        %2164 = vmatprep.subr.bf16.mxu0 0
        %2165 = vmatpush1.bf16.msra.mxu0 0
        %2166 = vmatprep.subr.bf16.mxu0 0
        %2167 = vmatpush1.bf16.msra.mxu0 0
        %2168 = vmatprep.subr.bf16.mxu0 0
        %2169 = vmatpush1.bf16.msra.mxu0 0
        %2170 = vmatprep.subr.bf16.mxu0 0
        %2171 = vmatpush1.bf16.msra.mxu0 0
        %2172 = vmatprep.subr.bf16.mxu0 0
        %2173 = vmatpush1.bf16.msra.mxu0 0
        %2174 = vmatprep.subr.bf16.mxu0 0
        %2175 = vmatpush1.bf16.msra.mxu0 0
        %2176 = vmatprep.subr.bf16.mxu0 0
        %2177 = vmatpush1.bf16.msra.mxu0 0
        %2178 = vmatprep.subr.bf16.mxu0 0
        %2179 = vmatpush1.bf16.msra.mxu0 0
        %2180 = vmatprep.subr.bf16.mxu0 0
        %2181 = vmatpush1.bf16.msra.mxu0 0
        %2182 = vmatprep.subr.bf16.mxu0 0
        %2183 = vmatpush1.bf16.msra.mxu0 0
        %2184 = vmatprep.subr.bf16.mxu0 0
        %2185 = vmatpush1.bf16.msra.mxu0 0
        %2186 = vmatprep.subr.bf16.mxu0 0
        %2187 = vmatpush1.bf16.msra.mxu0 0
        %2188 = vmatprep.mubr.bf16.mxu0 0
        %2189 = vmatmul.mubr.bf16.gmra.mrb[0].mxu0 %v2145
        %v2190 = vpop.f32.mrb[0].mxu0
        %v2191 = vadd.f32 0.0, %v2190
        %v2192 = vpop.f32.mrb[0].mxu0
        %v2193 = vpop.f32.mrb[0].mxu0
        %v2194 = vadd.f32 0.0, %v2193
        %v2195 = vpop.f32.mrb[0].mxu0
        %2196 = vmatprep.mubr.bf16.mxu0 0
        %2197 = vmatmul.mubr.bf16.gmra.mrb[0].mxu0 %v2148
        %v2198 = vpop.f32.mrb[0].mxu0
        %v2199 = vadd.f32 0.0, %v2198
        %v2200 = vpop.f32.mrb[0].mxu0
        %v2201 = vpop.f32.mrb[0].mxu0
        %v2202 = vadd.f32 0.0, %v2201
        %v2203 = vpop.f32.mrb[0].mxu0
        %2204 = vmatprep.mubr.bf16.mxu0 0
        %2205 = vmatmul.mubr.bf16.gmra.mrb[0].mxu0 %v2151
        %v2206 = vpop.f32.mrb[0].mxu0
        %v2207 = vadd.f32 0.0, %v2206
        %v2208 = vpop.f32.mrb[0].mxu0
        %v2209 = vpop.f32.mrb[0].mxu0
        %v2210 = vadd.f32 0.0, %v2209
        %v2211 = vpop.f32.mrb[0].mxu0
        %2212 = vmatprep.mubr.bf16.mxu0 0
        %2213 = vmatmul.mubr.bf16.gmra.mrb[0].mxu0 %v2154
        %v2214 = vpop.f32.mrb[0].mxu0
        %v2215 = vadd.f32 0.0, %v2214
        %v2216 = vpop.f32.mrb[0].mxu0
        %v2217 = vpop.f32.mrb[0].mxu0
        %v2218 = vadd.f32 0.0, %v2217
        %v2219 = vpop.f32.mrb[0].mxu0
        %2220 = vdwg.mxu0
        %v2229 = vunpack.c.l.b16 %v2091
        %v2230 = vunpack.c.l.b16 %v2092
        %v2231 = vunpack.c.l.b16 %v2093
        %v2232 = vunpack.c.l.b16 %v2094
        %v2233 = vunpack.c.l.b16 %v2095
        %v2234 = vunpack.c.l.b16 %v2096
        %v2235 = vunpack.c.l.b16 %v2097
        %v2236 = vunpack.c.l.b16 %v2098
        %v2237 = vpack.c.b16 %v2230, %v2229
        %v2238 = vpack.c.b16 %v2232, %v2231
        %v2239 = vpack.c.b16 %v2234, %v2233
        %v2240 = vpack.c.b16 %v2236, %v2235
        %v2246 = vsel %vm243, %v2086, 0
        %v2249 = vsel %vm243, %v2087, 0
        %v2252 = vsel %vm243, %v2088, 0
        %v2255 = vsel %vm243, %v2089, 0
        %2257 = vmatprep.subr.bf16.mxu0 0
        %2258 = vmatpush1.bf16.msra.mxu0 %v2237
        %2259 = vmatprep.subr.bf16.mxu0 0
        %2260 = vmatpush1.bf16.msra.mxu0 %v2238
        %2261 = vmatprep.subr.bf16.mxu0 0
        %2262 = vmatpush1.bf16.msra.mxu0 %v2239
        %2263 = vmatprep.subr.bf16.mxu0 0
        %2264 = vmatpush1.bf16.msra.mxu0 %v2240
        %2265 = vmatprep.subr.bf16.mxu0 0
        %2266 = vmatpush1.bf16.msra.mxu0 0
        %2267 = vmatprep.subr.bf16.mxu0 0
        %2268 = vmatpush1.bf16.msra.mxu0 0
        %2269 = vmatprep.subr.bf16.mxu0 0
        %2270 = vmatpush1.bf16.msra.mxu0 0
        %2271 = vmatprep.subr.bf16.mxu0 0
        %2272 = vmatpush1.bf16.msra.mxu0 0
        %2273 = vmatprep.subr.bf16.mxu0 0
        %2274 = vmatpush1.bf16.msra.mxu0 0
        %2275 = vmatprep.subr.bf16.mxu0 0
        %2276 = vmatpush1.bf16.msra.mxu0 0
        %2277 = vmatprep.subr.bf16.mxu0 0
        %2278 = vmatpush1.bf16.msra.mxu0 0
        %2279 = vmatprep.subr.bf16.mxu0 0
        %2280 = vmatpush1.bf16.msra.mxu0 0
        %2281 = vmatprep.subr.bf16.mxu0 0
        %2282 = vmatpush1.bf16.msra.mxu0 0
        %2283 = vmatprep.subr.bf16.mxu0 0
        %2284 = vmatpush1.bf16.msra.mxu0 0
        %2285 = vmatprep.subr.bf16.mxu0 0
        %2286 = vmatpush1.bf16.msra.mxu0 0
        %2287 = vmatprep.subr.bf16.mxu0 0
        %2288 = vmatpush1.bf16.msra.mxu0 0
        %2289 = vmatprep.mubr.bf16.mxu0 0
        %2290 = vmatmul.mubr.bf16.gmra.mrb[0].mxu0 %v2246
        %v2291 = vpop.f32.mrb[0].mxu0
        %v2292 = vadd.f32 %v2191, %v2291
        %v2293 = vpop.f32.mrb[0].mxu0
        %v2294 = vpop.f32.mrb[0].mxu0
        %v2295 = vadd.f32 %v2194, %v2294
        %v2296 = vpop.f32.mrb[0].mxu0
        %2297 = vmatprep.mubr.bf16.mxu0 0
        %2298 = vmatmul.mubr.bf16.gmra.mrb[0].mxu0 %v2249
        %v2299 = vpop.f32.mrb[0].mxu0
        %v2300 = vadd.f32 %v2199, %v2299
        %v2301 = vpop.f32.mrb[0].mxu0
        %v2302 = vpop.f32.mrb[0].mxu0
        %v2303 = vadd.f32 %v2202, %v2302
        %v2304 = vpop.f32.mrb[0].mxu0
        %2305 = vmatprep.mubr.bf16.mxu0 0
        %2306 = vmatmul.mubr.bf16.gmra.mrb[0].mxu0 %v2252
        %v2307 = vpop.f32.mrb[0].mxu0
        %v2308 = vadd.f32 %v2207, %v2307
        %v2309 = vpop.f32.mrb[0].mxu0
        %v2310 = vpop.f32.mrb[0].mxu0
        %v2311 = vadd.f32 %v2210, %v2310
        %v2312 = vpop.f32.mrb[0].mxu0
        %2313 = vmatprep.mubr.bf16.mxu0 0
        %2314 = vmatmul.mubr.bf16.gmra.mrb[0].mxu0 %v2255
        %v2315 = vpop.f32.mrb[0].mxu0
        %v2316 = vadd.f32 %v2215, %v2315
        %v2317 = vpop.f32.mrb[0].mxu0
        %v2318 = vpop.f32.mrb[0].mxu0
        %v2319 = vadd.f32 %v2218, %v2318
        %v2320 = vpop.f32.mrb[0].mxu0
        %2321 = vdwg.mxu0
        %v2322 = vld [vmem:[#allocation2 + $0x2] sm:$0xff]
        %v2323 = vld [vmem:[#allocation2 + $0x12] sm:$0xff]
        %v2324 = vld [vmem:[#allocation2 + $0x22] sm:$0xff]
        %v2325 = vld [vmem:[#allocation2 + $0x32] sm:$0xff]
        %v2326 = vld [vmem:[#allocation2 + $0x42] sm:$0xff]
        %v2327 = vld [vmem:[#allocation2 + $0x52] sm:$0xff]
        %v2328 = vld [vmem:[#allocation2 + $0x62] sm:$0xff]
        %v2329 = vld [vmem:[#allocation2 + $0x72] sm:$0xff]
        %v2330 = vpack.c.bf16 %v2323, %v2322
        %v2331 = vpack.c.bf16 %v2325, %v2324
        %v2332 = vpack.c.bf16 %v2327, %v2326
        %v2333 = vpack.c.bf16 %v2329, %v2328
        %s2334 = scalar_lea.vmem %s3, 352
        %v2335 = vld [vmem:[%s2334] sm:$0xf]
        %v2336 = vld [vmem:[%s2334 + $0x4] sm:$0xf]
        %v2337 = vld [vmem:[%s2334 + $0x8] sm:$0xf]
        %v2338 = vld [vmem:[%s2334 + $0xc] sm:$0xf]
        %v2339 = vld [vmem:[%s2334 + $0x10] sm:$0xf]
        %v2340 = vld [vmem:[%s2334 + $0x14] sm:$0xf]
        %v2341 = vld [vmem:[%s2334 + $0x18] sm:$0xf]
        %v2342 = vld [vmem:[%s2334 + $0x1c] sm:$0xf]
        %v2351 = vunpack.c.l.b16 %v2335
        %v2352 = vunpack.c.l.b16 %v2336
        %v2353 = vunpack.c.l.b16 %v2337
        %v2354 = vunpack.c.l.b16 %v2338
        %v2355 = vunpack.c.l.b16 %v2339
        %v2356 = vunpack.c.l.b16 %v2340
        %v2357 = vunpack.c.l.b16 %v2341
        %v2358 = vunpack.c.l.b16 %v2342
        %v2359 = vpack.c.b16 %v2352, %v2351
        %v2360 = vpack.c.b16 %v2354, %v2353
        %v2361 = vpack.c.b16 %v2356, %v2355
        %v2362 = vpack.c.b16 %v2358, %v2357
        %v2368 = vsel %vm243, %v2330, 0
        %v2371 = vsel %vm243, %v2331, 0
        %v2374 = vsel %vm243, %v2332, 0
        %v2377 = vsel %vm243, %v2333, 0
        %2379 = vmatprep.subr.bf16.mxu0 0
        %2380 = vmatpush1.bf16.msra.mxu0 %v2359
        %2381 = vmatprep.subr.bf16.mxu0 0
        %2382 = vmatpush1.bf16.msra.mxu0 %v2360
        %2383 = vmatprep.subr.bf16.mxu0 0
        %2384 = vmatpush1.bf16.msra.mxu0 %v2361
        %2385 = vmatprep.subr.bf16.mxu0 0
        %2386 = vmatpush1.bf16.msra.mxu0 %v2362
        %2387 = vmatprep.subr.bf16.mxu0 0
        %2388 = vmatpush1.bf16.msra.mxu0 0
        %2389 = vmatprep.subr.bf16.mxu0 0
        %2390 = vmatpush1.bf16.msra.mxu0 0
        %2391 = vmatprep.subr.bf16.mxu0 0
        %2392 = vmatpush1.bf16.msra.mxu0 0
        %2393 = vmatprep.subr.bf16.mxu0 0
        %2394 = vmatpush1.bf16.msra.mxu0 0
        %2395 = vmatprep.subr.bf16.mxu0 0
        %2396 = vmatpush1.bf16.msra.mxu0 0
        %2397 = vmatprep.subr.bf16.mxu0 0
        %2398 = vmatpush1.bf16.msra.mxu0 0
        %2399 = vmatprep.subr.bf16.mxu0 0
        %2400 = vmatpush1.bf16.msra.mxu0 0
        %2401 = vmatprep.subr.bf16.mxu0 0
        %2402 = vmatpush1.bf16.msra.mxu0 0
        %2403 = vmatprep.subr.bf16.mxu0 0
        %2404 = vmatpush1.bf16.msra.mxu0 0
        %2405 = vmatprep.subr.bf16.mxu0 0
        %2406 = vmatpush1.bf16.msra.mxu0 0
        %2407 = vmatprep.subr.bf16.mxu0 0
        %2408 = vmatpush1.bf16.msra.mxu0 0
        %2409 = vmatprep.subr.bf16.mxu0 0
        %2410 = vmatpush1.bf16.msra.mxu0 0
        %2411 = vmatprep.mubr.bf16.mxu0 0
        %2412 = vmatmul.mubr.bf16.gmra.mrb[0].mxu0 %v2368
        %v2413 = vpop.f32.mrb[0].mxu0
        %v2414 = vadd.f32 0.0, %v2413
        %v2415 = vpop.f32.mrb[0].mxu0
        %v2416 = vpop.f32.mrb[0].mxu0
        %v2417 = vadd.f32 0.0, %v2416
        %v2418 = vpop.f32.mrb[0].mxu0
        %2419 = vmatprep.mubr.bf16.mxu0 0
        %2420 = vmatmul.mubr.bf16.gmra.mrb[0].mxu0 %v2371
        %v2421 = vpop.f32.mrb[0].mxu0
        %v2422 = vadd.f32 0.0, %v2421
        %v2423 = vpop.f32.mrb[0].mxu0
        %v2424 = vpop.f32.mrb[0].mxu0
        %v2425 = vadd.f32 0.0, %v2424
        %v2426 = vpop.f32.mrb[0].mxu0
        %2427 = vmatprep.mubr.bf16.mxu0 0
        %2428 = vmatmul.mubr.bf16.gmra.mrb[0].mxu0 %v2374
        %v2429 = vpop.f32.mrb[0].mxu0
        %v2430 = vadd.f32 0.0, %v2429
        %v2431 = vpop.f32.mrb[0].mxu0
        %v2432 = vpop.f32.mrb[0].mxu0
        %v2433 = vadd.f32 0.0, %v2432
        %v2434 = vpop.f32.mrb[0].mxu0
        %2435 = vmatprep.mubr.bf16.mxu0 0
        %2436 = vmatmul.mubr.bf16.gmra.mrb[0].mxu0 %v2377
        %v2437 = vpop.f32.mrb[0].mxu0
        %v2438 = vadd.f32 0.0, %v2437
        %v2439 = vpop.f32.mrb[0].mxu0
        %v2440 = vpop.f32.mrb[0].mxu0
        %v2441 = vadd.f32 0.0, %v2440
        %v2442 = vpop.f32.mrb[0].mxu0
        %2443 = vdwg.mxu0
        %v2444 = vadd.f32 %v2292, %v2414
        %v2445 = vadd.f32 %v2295, %v2417
        %v2446 = vadd.f32 %v2300, %v2422
        %v2447 = vadd.f32 %v2303, %v2425
        %v2448 = vadd.f32 %v2308, %v2430
        %v2449 = vadd.f32 %v2311, %v2433
        %v2450 = vadd.f32 %v2316, %v2438
        %v2451 = vadd.f32 %v2319, %v2441
        %v2452 = vld [vmem:[%s870] sm:$0xff]
        %v2453 = vld [vmem:[%s870 + $0x10] sm:$0xff]
        %v2454 = vld [vmem:[%s870 + $0x20] sm:$0xff]
        %v2455 = vld [vmem:[%s870 + $0x30] sm:$0xff]
        %v2456 = vld [vmem:[%s870 + $0x40] sm:$0xff]
        %v2457 = vld [vmem:[%s870 + $0x50] sm:$0xff]
        %v2458 = vld [vmem:[%s870 + $0x60] sm:$0xff]
        %v2459 = vld [vmem:[%s870 + $0x70] sm:$0xff]
        %v2460 = vpack.c.bf16 %v2453, %v2452
        %v2461 = vpack.c.bf16 %v2455, %v2454
        %v2462 = vpack.c.bf16 %v2457, %v2456
        %v2463 = vpack.c.bf16 %v2459, %v2458
        %s2464 = scalar_lea.vmem %s3, 384
        %v2465 = vld [vmem:[%s2464] sm:$0xf]
        %v2466 = vld [vmem:[%s2464 + $0x4] sm:$0xf]
        %v2467 = vld [vmem:[%s2464 + $0x8] sm:$0xf]
        %v2468 = vld [vmem:[%s2464 + $0xc] sm:$0xf]
        %v2469 = vld [vmem:[%s2464 + $0x10] sm:$0xf]
        %v2470 = vld [vmem:[%s2464 + $0x14] sm:$0xf]
        %v2471 = vld [vmem:[%s2464 + $0x18] sm:$0xf]
        %v2472 = vld [vmem:[%s2464 + $0x1c] sm:$0xf]
        %v2481 = vunpack.c.l.b16 %v2465
        %v2482 = vunpack.c.l.b16 %v2466
        %v2483 = vunpack.c.l.b16 %v2467
        %v2484 = vunpack.c.l.b16 %v2468
        %v2485 = vunpack.c.l.b16 %v2469
        %v2486 = vunpack.c.l.b16 %v2470
        %v2487 = vunpack.c.l.b16 %v2471
        %v2488 = vunpack.c.l.b16 %v2472
        %v2489 = vpack.c.b16 %v2482, %v2481
        %v2490 = vpack.c.b16 %v2484, %v2483
        %v2491 = vpack.c.b16 %v2486, %v2485
        %v2492 = vpack.c.b16 %v2488, %v2487
        %v2498 = vsel %vm243, %v2460, 0
        %v2501 = vsel %vm243, %v2461, 0
        %v2504 = vsel %vm243, %v2462, 0
        %v2507 = vsel %vm243, %v2463, 0
        %2509 = vmatprep.subr.bf16.mxu0 0
        %2510 = vmatpush1.bf16.msra.mxu0 %v2489
        %2511 = vmatprep.subr.bf16.mxu0 0
        %2512 = vmatpush1.bf16.msra.mxu0 %v2490
        %2513 = vmatprep.subr.bf16.mxu0 0
        %2514 = vmatpush1.bf16.msra.mxu0 %v2491
        %2515 = vmatprep.subr.bf16.mxu0 0
        %2516 = vmatpush1.bf16.msra.mxu0 %v2492
        %2517 = vmatprep.subr.bf16.mxu0 0
        %2518 = vmatpush1.bf16.msra.mxu0 0
        %2519 = vmatprep.subr.bf16.mxu0 0
        %2520 = vmatpush1.bf16.msra.mxu0 0
        %2521 = vmatprep.subr.bf16.mxu0 0
        %2522 = vmatpush1.bf16.msra.mxu0 0
        %2523 = vmatprep.subr.bf16.mxu0 0
        %2524 = vmatpush1.bf16.msra.mxu0 0
        %2525 = vmatprep.subr.bf16.mxu0 0
        %2526 = vmatpush1.bf16.msra.mxu0 0
        %2527 = vmatprep.subr.bf16.mxu0 0
        %2528 = vmatpush1.bf16.msra.mxu0 0
        %2529 = vmatprep.subr.bf16.mxu0 0
        %2530 = vmatpush1.bf16.msra.mxu0 0
        %2531 = vmatprep.subr.bf16.mxu0 0
        %2532 = vmatpush1.bf16.msra.mxu0 0
        %2533 = vmatprep.subr.bf16.mxu0 0
        %2534 = vmatpush1.bf16.msra.mxu0 0
        %2535 = vmatprep.subr.bf16.mxu0 0
        %2536 = vmatpush1.bf16.msra.mxu0 0
        %2537 = vmatprep.subr.bf16.mxu0 0
        %2538 = vmatpush1.bf16.msra.mxu0 0
        %2539 = vmatprep.subr.bf16.mxu0 0
        %2540 = vmatpush1.bf16.msra.mxu0 0
        %2541 = vmatprep.mubr.bf16.mxu0 0
        %2542 = vmatmul.mubr.bf16.gmra.mrb[0].mxu0 %v2498
        %v2543 = vpop.f32.mrb[0].mxu0
        %v2544 = vadd.f32 0.0, %v2543
        %v2545 = vpop.f32.mrb[0].mxu0
        %v2546 = vpop.f32.mrb[0].mxu0
        %v2547 = vadd.f32 0.0, %v2546
        %v2548 = vpop.f32.mrb[0].mxu0
        %2549 = vmatprep.mubr.bf16.mxu0 0
        %2550 = vmatmul.mubr.bf16.gmra.mrb[0].mxu0 %v2501
        %v2551 = vpop.f32.mrb[0].mxu0
        %v2552 = vadd.f32 0.0, %v2551
        %v2553 = vpop.f32.mrb[0].mxu0
        %v2554 = vpop.f32.mrb[0].mxu0
        %v2555 = vadd.f32 0.0, %v2554
        %v2556 = vpop.f32.mrb[0].mxu0
        %2557 = vmatprep.mubr.bf16.mxu0 0
        %2558 = vmatmul.mubr.bf16.gmra.mrb[0].mxu0 %v2504
        %v2559 = vpop.f32.mrb[0].mxu0
        %v2560 = vadd.f32 0.0, %v2559
        %v2561 = vpop.f32.mrb[0].mxu0
        %v2562 = vpop.f32.mrb[0].mxu0
        %v2563 = vadd.f32 0.0, %v2562
        %v2564 = vpop.f32.mrb[0].mxu0
        %2565 = vmatprep.mubr.bf16.mxu0 0
        %2566 = vmatmul.mubr.bf16.gmra.mrb[0].mxu0 %v2507
        %v2567 = vpop.f32.mrb[0].mxu0
        %v2568 = vadd.f32 0.0, %v2567
        %v2569 = vpop.f32.mrb[0].mxu0
        %v2570 = vpop.f32.mrb[0].mxu0
        %v2571 = vadd.f32 0.0, %v2570
        %v2572 = vpop.f32.mrb[0].mxu0
        %2573 = vdwg.mxu0
        %v2574 = vadd.f32 %v2444, %v2544
        %v2575 = vadd.f32 %v2445, %v2547
        %v2576 = vadd.f32 %v2446, %v2552
        %v2577 = vadd.f32 %v2447, %v2555
        %v2578 = vadd.f32 %v2448, %v2560
        %v2579 = vadd.f32 %v2449, %v2563
        %v2580 = vadd.f32 %v2450, %v2568
        %v2581 = vadd.f32 %v2451, %v2571
        %v2582 = vld [vmem:[%s870 + $0x1] sm:$0xff]
        %v2583 = vld [vmem:[%s870 + $0x11] sm:$0xff]
        %v2584 = vld [vmem:[%s870 + $0x21] sm:$0xff]
        %v2585 = vld [vmem:[%s870 + $0x31] sm:$0xff]
        %v2586 = vld [vmem:[%s870 + $0x41] sm:$0xff]
        %v2587 = vld [vmem:[%s870 + $0x51] sm:$0xff]
        %v2588 = vld [vmem:[%s870 + $0x61] sm:$0xff]
        %v2589 = vld [vmem:[%s870 + $0x71] sm:$0xff]
        %v2590 = vpack.c.bf16 %v2583, %v2582
        %v2591 = vpack.c.bf16 %v2585, %v2584
        %v2592 = vpack.c.bf16 %v2587, %v2586
        %v2593 = vpack.c.bf16 %v2589, %v2588
        %s2594 = scalar_lea.vmem %s3, 416
        %v2595 = vld [vmem:[%s2594] sm:$0xf]
        %v2596 = vld [vmem:[%s2594 + $0x4] sm:$0xf]
        %v2597 = vld [vmem:[%s2594 + $0x8] sm:$0xf]
        %v2598 = vld [vmem:[%s2594 + $0xc] sm:$0xf]
        %v2599 = vld [vmem:[%s2594 + $0x10] sm:$0xf]
        %v2600 = vld [vmem:[%s2594 + $0x14] sm:$0xf]
        %v2601 = vld [vmem:[%s2594 + $0x18] sm:$0xf]
        %v2602 = vld [vmem:[%s2594 + $0x1c] sm:$0xf]
        %v2611 = vunpack.c.l.b16 %v2595
        %v2612 = vunpack.c.l.b16 %v2596
        %v2613 = vunpack.c.l.b16 %v2597
        %v2614 = vunpack.c.l.b16 %v2598
        %v2615 = vunpack.c.l.b16 %v2599
        %v2616 = vunpack.c.l.b16 %v2600
        %v2617 = vunpack.c.l.b16 %v2601
        %v2618 = vunpack.c.l.b16 %v2602
        %v2619 = vpack.c.b16 %v2612, %v2611
        %v2620 = vpack.c.b16 %v2614, %v2613
        %v2621 = vpack.c.b16 %v2616, %v2615
        %v2622 = vpack.c.b16 %v2618, %v2617
        %v2628 = vsel %vm243, %v2590, 0
        %v2631 = vsel %vm243, %v2591, 0
        %v2634 = vsel %vm243, %v2592, 0
        %v2637 = vsel %vm243, %v2593, 0
        %2639 = vmatprep.subr.bf16.mxu0 0
        %2640 = vmatpush1.bf16.msra.mxu0 %v2619
        %2641 = vmatprep.subr.bf16.mxu0 0
        %2642 = vmatpush1.bf16.msra.mxu0 %v2620
        %2643 = vmatprep.subr.bf16.mxu0 0
        %2644 = vmatpush1.bf16.msra.mxu0 %v2621
        %2645 = vmatprep.subr.bf16.mxu0 0
        %2646 = vmatpush1.bf16.msra.mxu0 %v2622
        %2647 = vmatprep.subr.bf16.mxu0 0
        %2648 = vmatpush1.bf16.msra.mxu0 0
        %2649 = vmatprep.subr.bf16.mxu0 0
        %2650 = vmatpush1.bf16.msra.mxu0 0
        %2651 = vmatprep.subr.bf16.mxu0 0
        %2652 = vmatpush1.bf16.msra.mxu0 0
        %2653 = vmatprep.subr.bf16.mxu0 0
        %2654 = vmatpush1.bf16.msra.mxu0 0
        %2655 = vmatprep.subr.bf16.mxu0 0
        %2656 = vmatpush1.bf16.msra.mxu0 0
        %2657 = vmatprep.subr.bf16.mxu0 0
        %2658 = vmatpush1.bf16.msra.mxu0 0
        %2659 = vmatprep.subr.bf16.mxu0 0
        %2660 = vmatpush1.bf16.msra.mxu0 0
        %2661 = vmatprep.subr.bf16.mxu0 0
        %2662 = vmatpush1.bf16.msra.mxu0 0
        %2663 = vmatprep.subr.bf16.mxu0 0
        %2664 = vmatpush1.bf16.msra.mxu0 0
        %2665 = vmatprep.subr.bf16.mxu0 0
        %2666 = vmatpush1.bf16.msra.mxu0 0
        %2667 = vmatprep.subr.bf16.mxu0 0
        %2668 = vmatpush1.bf16.msra.mxu0 0
        %2669 = vmatprep.subr.bf16.mxu0 0
        %2670 = vmatpush1.bf16.msra.mxu0 0
        %2671 = vmatprep.mubr.bf16.mxu0 0
        %2672 = vmatmul.mubr.bf16.gmra.mrb[0].mxu0 %v2628
        %v2673 = vpop.f32.mrb[0].mxu0
        %v2674 = vadd.f32 0.0, %v2673
        %v2675 = vpop.f32.mrb[0].mxu0
        %v2676 = vpop.f32.mrb[0].mxu0
        %v2677 = vadd.f32 0.0, %v2676
        %v2678 = vpop.f32.mrb[0].mxu0
        %2679 = vmatprep.mubr.bf16.mxu0 0
        %2680 = vmatmul.mubr.bf16.gmra.mrb[0].mxu0 %v2631
        %v2681 = vpop.f32.mrb[0].mxu0
        %v2682 = vadd.f32 0.0, %v2681
        %v2683 = vpop.f32.mrb[0].mxu0
        %v2684 = vpop.f32.mrb[0].mxu0
        %v2685 = vadd.f32 0.0, %v2684
        %v2686 = vpop.f32.mrb[0].mxu0
        %2687 = vmatprep.mubr.bf16.mxu0 0
        %2688 = vmatmul.mubr.bf16.gmra.mrb[0].mxu0 %v2634
        %v2689 = vpop.f32.mrb[0].mxu0
        %v2690 = vadd.f32 0.0, %v2689
        %v2691 = vpop.f32.mrb[0].mxu0
        %v2692 = vpop.f32.mrb[0].mxu0
        %v2693 = vadd.f32 0.0, %v2692
        %v2694 = vpop.f32.mrb[0].mxu0
        %2695 = vmatprep.mubr.bf16.mxu0 0
        %2696 = vmatmul.mubr.bf16.gmra.mrb[0].mxu0 %v2637
        %v2697 = vpop.f32.mrb[0].mxu0
        %v2698 = vadd.f32 0.0, %v2697
        %v2699 = vpop.f32.mrb[0].mxu0
        %v2700 = vpop.f32.mrb[0].mxu0
        %v2701 = vadd.f32 0.0, %v2700
        %v2702 = vpop.f32.mrb[0].mxu0
        %2703 = vdwg.mxu0
        %v2704 = vadd.f32 %v2574, %v2674
        %v2705 = vadd.f32 %v2575, %v2677
        %v2706 = vadd.f32 %v2576, %v2682
        %v2707 = vadd.f32 %v2577, %v2685
        %v2708 = vadd.f32 %v2578, %v2690
        %v2709 = vadd.f32 %v2579, %v2693
        %v2710 = vadd.f32 %v2580, %v2698
        %v2711 = vadd.f32 %v2581, %v2701
        %v2712 = vld [vmem:[%s870 + $0x2] sm:$0xff]
        %v2713 = vld [vmem:[%s870 + $0x12] sm:$0xff]
        %v2714 = vld [vmem:[%s870 + $0x22] sm:$0xff]
        %v2715 = vld [vmem:[%s870 + $0x32] sm:$0xff]
        %v2716 = vld [vmem:[%s870 + $0x42] sm:$0xff]
        %v2717 = vld [vmem:[%s870 + $0x52] sm:$0xff]
        %v2718 = vld [vmem:[%s870 + $0x62] sm:$0xff]
        %v2719 = vld [vmem:[%s870 + $0x72] sm:$0xff]
        %v2720 = vpack.c.bf16 %v2713, %v2712
        %v2721 = vpack.c.bf16 %v2715, %v2714
        %v2722 = vpack.c.bf16 %v2717, %v2716
        %v2723 = vpack.c.bf16 %v2719, %v2718
        %s2724 = scalar_lea.vmem %s3, 448
        %v2725 = vld [vmem:[%s2724] sm:$0xf]
        %v2726 = vld [vmem:[%s2724 + $0x4] sm:$0xf]
        %v2727 = vld [vmem:[%s2724 + $0x8] sm:$0xf]
        %v2728 = vld [vmem:[%s2724 + $0xc] sm:$0xf]
        %v2729 = vld [vmem:[%s2724 + $0x10] sm:$0xf]
        %v2730 = vld [vmem:[%s2724 + $0x14] sm:$0xf]
        %v2731 = vld [vmem:[%s2724 + $0x18] sm:$0xf]
        %v2732 = vld [vmem:[%s2724 + $0x1c] sm:$0xf]
        %v2741 = vunpack.c.l.b16 %v2725
        %v2742 = vunpack.c.l.b16 %v2726
        %v2743 = vunpack.c.l.b16 %v2727
        %v2744 = vunpack.c.l.b16 %v2728
        %v2745 = vunpack.c.l.b16 %v2729
        %v2746 = vunpack.c.l.b16 %v2730
        %v2747 = vunpack.c.l.b16 %v2731
        %v2748 = vunpack.c.l.b16 %v2732
        %v2749 = vpack.c.b16 %v2742, %v2741
        %v2750 = vpack.c.b16 %v2744, %v2743
        %v2751 = vpack.c.b16 %v2746, %v2745
        %v2752 = vpack.c.b16 %v2748, %v2747
        %v2758 = vsel %vm243, %v2720, 0
        %v2761 = vsel %vm243, %v2721, 0
        %v2764 = vsel %vm243, %v2722, 0
        %v2767 = vsel %vm243, %v2723, 0
        %2769 = vmatprep.subr.bf16.mxu0 0
        %2770 = vmatpush1.bf16.msra.mxu0 %v2749
        %2771 = vmatprep.subr.bf16.mxu0 0
        %2772 = vmatpush1.bf16.msra.mxu0 %v2750
        %2773 = vmatprep.subr.bf16.mxu0 0
        %2774 = vmatpush1.bf16.msra.mxu0 %v2751
        %2775 = vmatprep.subr.bf16.mxu0 0
        %2776 = vmatpush1.bf16.msra.mxu0 %v2752
        %2777 = vmatprep.subr.bf16.mxu0 0
        %2778 = vmatpush1.bf16.msra.mxu0 0
        %2779 = vmatprep.subr.bf16.mxu0 0
        %2780 = vmatpush1.bf16.msra.mxu0 0
        %2781 = vmatprep.subr.bf16.mxu0 0
        %2782 = vmatpush1.bf16.msra.mxu0 0
        %2783 = vmatprep.subr.bf16.mxu0 0
        %2784 = vmatpush1.bf16.msra.mxu0 0
        %2785 = vmatprep.subr.bf16.mxu0 0
        %2786 = vmatpush1.bf16.msra.mxu0 0
        %2787 = vmatprep.subr.bf16.mxu0 0
        %2788 = vmatpush1.bf16.msra.mxu0 0
        %2789 = vmatprep.subr.bf16.mxu0 0
        %2790 = vmatpush1.bf16.msra.mxu0 0
        %2791 = vmatprep.subr.bf16.mxu0 0
        %2792 = vmatpush1.bf16.msra.mxu0 0
        %2793 = vmatprep.subr.bf16.mxu0 0
        %2794 = vmatpush1.bf16.msra.mxu0 0
        %2795 = vmatprep.subr.bf16.mxu0 0
        %2796 = vmatpush1.bf16.msra.mxu0 0
        %2797 = vmatprep.subr.bf16.mxu0 0
        %2798 = vmatpush1.bf16.msra.mxu0 0
        %2799 = vmatprep.subr.bf16.mxu0 0
        %2800 = vmatpush1.bf16.msra.mxu0 0
        %2801 = vmatprep.mubr.bf16.mxu0 0
        %2802 = vmatmul.mubr.bf16.gmra.mrb[0].mxu0 %v2758
        %v2803 = vpop.f32.mrb[0].mxu0
        %v2804 = vadd.f32 0.0, %v2803
        %v2805 = vpop.f32.mrb[0].mxu0
        %v2806 = vpop.f32.mrb[0].mxu0
        %v2807 = vadd.f32 0.0, %v2806
        %v2808 = vpop.f32.mrb[0].mxu0
        %2809 = vmatprep.mubr.bf16.mxu0 0
        %2810 = vmatmul.mubr.bf16.gmra.mrb[0].mxu0 %v2761
        %v2811 = vpop.f32.mrb[0].mxu0
        %v2812 = vadd.f32 0.0, %v2811
        %v2813 = vpop.f32.mrb[0].mxu0
        %v2814 = vpop.f32.mrb[0].mxu0
        %v2815 = vadd.f32 0.0, %v2814
        %v2816 = vpop.f32.mrb[0].mxu0
        %2817 = vmatprep.mubr.bf16.mxu0 0
        %2818 = vmatmul.mubr.bf16.gmra.mrb[0].mxu0 %v2764
        %v2819 = vpop.f32.mrb[0].mxu0
        %v2820 = vadd.f32 0.0, %v2819
        %v2821 = vpop.f32.mrb[0].mxu0
        %v2822 = vpop.f32.mrb[0].mxu0
        %v2823 = vadd.f32 0.0, %v2822
        %v2824 = vpop.f32.mrb[0].mxu0
        %2825 = vmatprep.mubr.bf16.mxu0 0
        %2826 = vmatmul.mubr.bf16.gmra.mrb[0].mxu0 %v2767
        %v2827 = vpop.f32.mrb[0].mxu0
        %v2828 = vadd.f32 0.0, %v2827
        %v2829 = vpop.f32.mrb[0].mxu0
        %v2830 = vpop.f32.mrb[0].mxu0
        %v2831 = vadd.f32 0.0, %v2830
        %v2832 = vpop.f32.mrb[0].mxu0
        %2833 = vdwg.mxu0
        %v2834 = vadd.f32 %v2704, %v2804
        %v2835 = vadd.f32 %v2705, %v2807
        %v2836 = vadd.f32 %v2706, %v2812
        %v2837 = vadd.f32 %v2707, %v2815
        %v2838 = vadd.f32 %v2708, %v2820
        %v2839 = vadd.f32 %v2709, %v2823
        %v2840 = vadd.f32 %v2710, %v2828
        %v2841 = vadd.f32 %v2711, %v2831
        %v2842 = vld [vmem:[%s1642] sm:$0xff]
        %v2843 = vld [vmem:[%s1642 + $0x10] sm:$0xff]
        %v2844 = vld [vmem:[%s1642 + $0x20] sm:$0xff]
        %v2845 = vld [vmem:[%s1642 + $0x30] sm:$0xff]
        %v2846 = vld [vmem:[%s1642 + $0x40] sm:$0xff]
        %v2847 = vld [vmem:[%s1642 + $0x50] sm:$0xff]
        %v2848 = vld [vmem:[%s1642 + $0x60] sm:$0xff]
        %v2849 = vld [vmem:[%s1642 + $0x70] sm:$0xff]
        %v2850 = vpack.c.bf16 %v2843, %v2842
        %v2851 = vpack.c.bf16 %v2845, %v2844
        %v2852 = vpack.c.bf16 %v2847, %v2846
        %v2853 = vpack.c.bf16 %v2849, %v2848
        %s2854 = scalar_lea.vmem %s3, 480
        %v2855 = vld [vmem:[%s2854] sm:$0xf]
        %v2856 = vld [vmem:[%s2854 + $0x4] sm:$0xf]
        %v2857 = vld [vmem:[%s2854 + $0x8] sm:$0xf]
        %v2858 = vld [vmem:[%s2854 + $0xc] sm:$0xf]
        %v2859 = vld [vmem:[%s2854 + $0x10] sm:$0xf]
        %v2860 = vld [vmem:[%s2854 + $0x14] sm:$0xf]
        %v2861 = vld [vmem:[%s2854 + $0x18] sm:$0xf]
        %v2862 = vld [vmem:[%s2854 + $0x1c] sm:$0xf]
        %v2871 = vunpack.c.l.b16 %v2855
        %v2872 = vunpack.c.l.b16 %v2856
        %v2873 = vunpack.c.l.b16 %v2857
        %v2874 = vunpack.c.l.b16 %v2858
        %v2875 = vunpack.c.l.b16 %v2859
        %v2876 = vunpack.c.l.b16 %v2860
        %v2877 = vunpack.c.l.b16 %v2861
        %v2878 = vunpack.c.l.b16 %v2862
        %v2879 = vpack.c.b16 %v2872, %v2871
        %v2880 = vpack.c.b16 %v2874, %v2873
        %v2881 = vpack.c.b16 %v2876, %v2875
        %v2882 = vpack.c.b16 %v2878, %v2877
        %v2888 = vsel %vm243, %v2850, 0
        %v2891 = vsel %vm243, %v2851, 0
        %v2894 = vsel %vm243, %v2852, 0
        %v2897 = vsel %vm243, %v2853, 0
        %2899 = vmatprep.subr.bf16.mxu0 0
        %2900 = vmatpush1.bf16.msra.mxu0 %v2879
        %2901 = vmatprep.subr.bf16.mxu0 0
        %2902 = vmatpush1.bf16.msra.mxu0 %v2880
        %2903 = vmatprep.subr.bf16.mxu0 0
        %2904 = vmatpush1.bf16.msra.mxu0 %v2881
        %2905 = vmatprep.subr.bf16.mxu0 0
        %2906 = vmatpush1.bf16.msra.mxu0 %v2882
        %2907 = vmatprep.subr.bf16.mxu0 0
        %2908 = vmatpush1.bf16.msra.mxu0 0
        %2909 = vmatprep.subr.bf16.mxu0 0
        %2910 = vmatpush1.bf16.msra.mxu0 0
        %2911 = vmatprep.subr.bf16.mxu0 0
        %2912 = vmatpush1.bf16.msra.mxu0 0
        %2913 = vmatprep.subr.bf16.mxu0 0
        %2914 = vmatpush1.bf16.msra.mxu0 0
        %2915 = vmatprep.subr.bf16.mxu0 0
        %2916 = vmatpush1.bf16.msra.mxu0 0
        %2917 = vmatprep.subr.bf16.mxu0 0
        %2918 = vmatpush1.bf16.msra.mxu0 0
        %2919 = vmatprep.subr.bf16.mxu0 0
        %2920 = vmatpush1.bf16.msra.mxu0 0
        %2921 = vmatprep.subr.bf16.mxu0 0
        %2922 = vmatpush1.bf16.msra.mxu0 0
        %2923 = vmatprep.subr.bf16.mxu0 0
        %2924 = vmatpush1.bf16.msra.mxu0 0
        %2925 = vmatprep.subr.bf16.mxu0 0
        %2926 = vmatpush1.bf16.msra.mxu0 0
        %2927 = vmatprep.subr.bf16.mxu0 0
        %2928 = vmatpush1.bf16.msra.mxu0 0
        %2929 = vmatprep.subr.bf16.mxu0 0
        %2930 = vmatpush1.bf16.msra.mxu0 0
        %2931 = vmatprep.mubr.bf16.mxu0 0
        %2932 = vmatmul.mubr.bf16.gmra.mrb[0].mxu0 %v2888
        %v2933 = vpop.f32.mrb[0].mxu0
        %v2934 = vadd.f32 0.0, %v2933
        %v2935 = vpop.f32.mrb[0].mxu0
        %v2936 = vpop.f32.mrb[0].mxu0
        %v2937 = vadd.f32 0.0, %v2936
        %v2938 = vpop.f32.mrb[0].mxu0
        %2939 = vmatprep.mubr.bf16.mxu0 0
        %2940 = vmatmul.mubr.bf16.gmra.mrb[0].mxu0 %v2891
        %v2941 = vpop.f32.mrb[0].mxu0
        %v2942 = vadd.f32 0.0, %v2941
        %v2943 = vpop.f32.mrb[0].mxu0
        %v2944 = vpop.f32.mrb[0].mxu0
        %v2945 = vadd.f32 0.0, %v2944
        %v2946 = vpop.f32.mrb[0].mxu0
        %2947 = vmatprep.mubr.bf16.mxu0 0
        %2948 = vmatmul.mubr.bf16.gmra.mrb[0].mxu0 %v2894
        %v2949 = vpop.f32.mrb[0].mxu0
        %v2950 = vadd.f32 0.0, %v2949
        %v2951 = vpop.f32.mrb[0].mxu0
        %v2952 = vpop.f32.mrb[0].mxu0
        %v2953 = vadd.f32 0.0, %v2952
        %v2954 = vpop.f32.mrb[0].mxu0
        %2955 = vmatprep.mubr.bf16.mxu0 0
        %2956 = vmatmul.mubr.bf16.gmra.mrb[0].mxu0 %v2897
        %v2957 = vpop.f32.mrb[0].mxu0
        %v2958 = vadd.f32 0.0, %v2957
        %v2959 = vpop.f32.mrb[0].mxu0
        %v2960 = vpop.f32.mrb[0].mxu0
        %v2961 = vadd.f32 0.0, %v2960
        %v2962 = vpop.f32.mrb[0].mxu0
        %2963 = vdwg.mxu0
        %v2964 = vadd.f32 %v2834, %v2934
        %v2965 = vadd.f32 %v2835, %v2937
        %v2966 = vadd.f32 %v2836, %v2942
        %v2967 = vadd.f32 %v2837, %v2945
        %v2968 = vadd.f32 %v2838, %v2950
        %v2969 = vadd.f32 %v2839, %v2953
        %v2970 = vadd.f32 %v2840, %v2958
        %v2971 = vadd.f32 %v2841, %v2961
        %v2972 = vld [vmem:[%s1642 + $0x1] sm:$0xff]
        %v2973 = vld [vmem:[%s1642 + $0x11] sm:$0xff]
        %v2974 = vld [vmem:[%s1642 + $0x21] sm:$0xff]
        %v2975 = vld [vmem:[%s1642 + $0x31] sm:$0xff]
        %v2976 = vld [vmem:[%s1642 + $0x41] sm:$0xff]
        %v2977 = vld [vmem:[%s1642 + $0x51] sm:$0xff]
        %v2978 = vld [vmem:[%s1642 + $0x61] sm:$0xff]
        %v2979 = vld [vmem:[%s1642 + $0x71] sm:$0xff]
        %v2980 = vpack.c.bf16 %v2973, %v2972
        %v2981 = vpack.c.bf16 %v2975, %v2974
        %v2982 = vpack.c.bf16 %v2977, %v2976
        %v2983 = vpack.c.bf16 %v2979, %v2978
        %s2984 = scalar_lea.vmem %s3, 512
        %v2985 = vld [vmem:[%s2984] sm:$0xf]
        %v2986 = vld [vmem:[%s2984 + $0x4] sm:$0xf]
        %v2987 = vld [vmem:[%s2984 + $0x8] sm:$0xf]
        %v2988 = vld [vmem:[%s2984 + $0xc] sm:$0xf]
        %v2989 = vld [vmem:[%s2984 + $0x10] sm:$0xf]
        %v2990 = vld [vmem:[%s2984 + $0x14] sm:$0xf]
        %v2991 = vld [vmem:[%s2984 + $0x18] sm:$0xf]
        %v2992 = vld [vmem:[%s2984 + $0x1c] sm:$0xf]
        %v3001 = vunpack.c.l.b16 %v2985
        %v3002 = vunpack.c.l.b16 %v2986
        %v3003 = vunpack.c.l.b16 %v2987
        %v3004 = vunpack.c.l.b16 %v2988
        %v3005 = vunpack.c.l.b16 %v2989
        %v3006 = vunpack.c.l.b16 %v2990
        %v3007 = vunpack.c.l.b16 %v2991
        %v3008 = vunpack.c.l.b16 %v2992
        %v3009 = vpack.c.b16 %v3002, %v3001
        %v3010 = vpack.c.b16 %v3004, %v3003
        %v3011 = vpack.c.b16 %v3006, %v3005
        %v3012 = vpack.c.b16 %v3008, %v3007
        %v3018 = vsel %vm243, %v2980, 0
        %v3021 = vsel %vm243, %v2981, 0
        %v3024 = vsel %vm243, %v2982, 0
        %v3027 = vsel %vm243, %v2983, 0
        %3029 = vmatprep.subr.bf16.mxu0 0
        %3030 = vmatpush1.bf16.msra.mxu0 %v3009
        %3031 = vmatprep.subr.bf16.mxu0 0
        %3032 = vmatpush1.bf16.msra.mxu0 %v3010
        %3033 = vmatprep.subr.bf16.mxu0 0
        %3034 = vmatpush1.bf16.msra.mxu0 %v3011
        %3035 = vmatprep.subr.bf16.mxu0 0
        %3036 = vmatpush1.bf16.msra.mxu0 %v3012
        %3037 = vmatprep.subr.bf16.mxu0 0
        %3038 = vmatpush1.bf16.msra.mxu0 0
        %3039 = vmatprep.subr.bf16.mxu0 0
        %3040 = vmatpush1.bf16.msra.mxu0 0
        %3041 = vmatprep.subr.bf16.mxu0 0
        %3042 = vmatpush1.bf16.msra.mxu0 0
        %3043 = vmatprep.subr.bf16.mxu0 0
        %3044 = vmatpush1.bf16.msra.mxu0 0
        %3045 = vmatprep.subr.bf16.mxu0 0
        %3046 = vmatpush1.bf16.msra.mxu0 0
        %3047 = vmatprep.subr.bf16.mxu0 0
        %3048 = vmatpush1.bf16.msra.mxu0 0
        %3049 = vmatprep.subr.bf16.mxu0 0
        %3050 = vmatpush1.bf16.msra.mxu0 0
        %3051 = vmatprep.subr.bf16.mxu0 0
        %3052 = vmatpush1.bf16.msra.mxu0 0
        %3053 = vmatprep.subr.bf16.mxu0 0
        %3054 = vmatpush1.bf16.msra.mxu0 0
        %3055 = vmatprep.subr.bf16.mxu0 0
        %3056 = vmatpush1.bf16.msra.mxu0 0
        %3057 = vmatprep.subr.bf16.mxu0 0
        %3058 = vmatpush1.bf16.msra.mxu0 0
        %3059 = vmatprep.subr.bf16.mxu0 0
        %3060 = vmatpush1.bf16.msra.mxu0 0
        %3061 = vmatprep.mubr.bf16.mxu0 0
        %3062 = vmatmul.mubr.bf16.gmra.mrb[0].mxu0 %v3018
        %v3063 = vpop.f32.mrb[0].mxu0
        %v3064 = vadd.f32 0.0, %v3063
        %v3065 = vpop.f32.mrb[0].mxu0
        %v3066 = vpop.f32.mrb[0].mxu0
        %v3067 = vadd.f32 0.0, %v3066
        %v3068 = vpop.f32.mrb[0].mxu0
        %3069 = vmatprep.mubr.bf16.mxu0 0
        %3070 = vmatmul.mubr.bf16.gmra.mrb[0].mxu0 %v3021
        %v3071 = vpop.f32.mrb[0].mxu0
        %v3072 = vadd.f32 0.0, %v3071
        %v3073 = vpop.f32.mrb[0].mxu0
        %v3074 = vpop.f32.mrb[0].mxu0
        %v3075 = vadd.f32 0.0, %v3074
        %v3076 = vpop.f32.mrb[0].mxu0
        %3077 = vmatprep.mubr.bf16.mxu0 0
        %3078 = vmatmul.mubr.bf16.gmra.mrb[0].mxu0 %v3024
        %v3079 = vpop.f32.mrb[0].mxu0
        %v3080 = vadd.f32 0.0, %v3079
        %v3081 = vpop.f32.mrb[0].mxu0
        %v3082 = vpop.f32.mrb[0].mxu0
        %v3083 = vadd.f32 0.0, %v3082
        %v3084 = vpop.f32.mrb[0].mxu0
        %3085 = vmatprep.mubr.bf16.mxu0 0
        %3086 = vmatmul.mubr.bf16.gmra.mrb[0].mxu0 %v3027
        %v3087 = vpop.f32.mrb[0].mxu0
        %v3088 = vadd.f32 0.0, %v3087
        %v3089 = vpop.f32.mrb[0].mxu0
        %v3090 = vpop.f32.mrb[0].mxu0
        %v3091 = vadd.f32 0.0, %v3090
        %v3092 = vpop.f32.mrb[0].mxu0
        %3093 = vdwg.mxu0
        %v3094 = vadd.f32 %v2964, %v3064
        %v3095 = vadd.f32 %v2965, %v3067
        %v3096 = vadd.f32 %v2966, %v3072
        %v3097 = vadd.f32 %v2967, %v3075
        %v3098 = vadd.f32 %v2968, %v3080
        %v3099 = vadd.f32 %v2969, %v3083
        %v3100 = vadd.f32 %v2970, %v3088
        %v3101 = vadd.f32 %v2971, %v3091
        %v3102 = vld [vmem:[%s1642 + $0x2] sm:$0xff]
        %v3103 = vld [vmem:[%s1642 + $0x12] sm:$0xff]
        %v3104 = vld [vmem:[%s1642 + $0x22] sm:$0xff]
        %v3105 = vld [vmem:[%s1642 + $0x32] sm:$0xff]
        %v3106 = vld [vmem:[%s1642 + $0x42] sm:$0xff]
        %v3107 = vld [vmem:[%s1642 + $0x52] sm:$0xff]
        %v3108 = vld [vmem:[%s1642 + $0x62] sm:$0xff]
        %v3109 = vld [vmem:[%s1642 + $0x72] sm:$0xff]
        %v3110 = vpack.c.bf16 %v3103, %v3102
        %v3111 = vpack.c.bf16 %v3105, %v3104
        %v3112 = vpack.c.bf16 %v3107, %v3106
        %v3113 = vpack.c.bf16 %v3109, %v3108
        %s3114 = scalar_lea.vmem %s3, 544
        %v3115 = vld [vmem:[%s3114] sm:$0xf]
        %v3116 = vld [vmem:[%s3114 + $0x4] sm:$0xf]
        %v3117 = vld [vmem:[%s3114 + $0x8] sm:$0xf]
        %v3118 = vld [vmem:[%s3114 + $0xc] sm:$0xf]
        %v3119 = vld [vmem:[%s3114 + $0x10] sm:$0xf]
        %v3120 = vld [vmem:[%s3114 + $0x14] sm:$0xf]
        %v3121 = vld [vmem:[%s3114 + $0x18] sm:$0xf]
        %v3122 = vld [vmem:[%s3114 + $0x1c] sm:$0xf]
        %v3131 = vunpack.c.l.b16 %v3115
        %v3132 = vunpack.c.l.b16 %v3116
        %v3133 = vunpack.c.l.b16 %v3117
        %v3134 = vunpack.c.l.b16 %v3118
        %v3135 = vunpack.c.l.b16 %v3119
        %v3136 = vunpack.c.l.b16 %v3120
        %v3137 = vunpack.c.l.b16 %v3121
        %v3138 = vunpack.c.l.b16 %v3122
        %v3139 = vpack.c.b16 %v3132, %v3131
        %v3140 = vpack.c.b16 %v3134, %v3133
        %v3141 = vpack.c.b16 %v3136, %v3135
        %v3142 = vpack.c.b16 %v3138, %v3137
        %v3148 = vsel %vm243, %v3110, 0
        %v3151 = vsel %vm243, %v3111, 0
        %v3154 = vsel %vm243, %v3112, 0
        %v3157 = vsel %vm243, %v3113, 0
        %3159 = vmatprep.subr.bf16.mxu0 0
        %3160 = vmatpush1.bf16.msra.mxu0 %v3139
        %3161 = vmatprep.subr.bf16.mxu0 0
        %3162 = vmatpush1.bf16.msra.mxu0 %v3140
        %3163 = vmatprep.subr.bf16.mxu0 0
        %3164 = vmatpush1.bf16.msra.mxu0 %v3141
        %3165 = vmatprep.subr.bf16.mxu0 0
        %3166 = vmatpush1.bf16.msra.mxu0 %v3142
        %3167 = vmatprep.subr.bf16.mxu0 0
        %3168 = vmatpush1.bf16.msra.mxu0 0
        %3169 = vmatprep.subr.bf16.mxu0 0
        %3170 = vmatpush1.bf16.msra.mxu0 0
        %3171 = vmatprep.subr.bf16.mxu0 0
        %3172 = vmatpush1.bf16.msra.mxu0 0
        %3173 = vmatprep.subr.bf16.mxu0 0
        %3174 = vmatpush1.bf16.msra.mxu0 0
        %3175 = vmatprep.subr.bf16.mxu0 0
        %3176 = vmatpush1.bf16.msra.mxu0 0
        %3177 = vmatprep.subr.bf16.mxu0 0
        %3178 = vmatpush1.bf16.msra.mxu0 0
        %3179 = vmatprep.subr.bf16.mxu0 0
        %3180 = vmatpush1.bf16.msra.mxu0 0
        %3181 = vmatprep.subr.bf16.mxu0 0
        %3182 = vmatpush1.bf16.msra.mxu0 0
        %3183 = vmatprep.subr.bf16.mxu0 0
        %3184 = vmatpush1.bf16.msra.mxu0 0
        %3185 = vmatprep.subr.bf16.mxu0 0
        %3186 = vmatpush1.bf16.msra.mxu0 0
        %3187 = vmatprep.subr.bf16.mxu0 0
        %3188 = vmatpush1.bf16.msra.mxu0 0
        %3189 = vmatprep.subr.bf16.mxu0 0
        %3190 = vmatpush1.bf16.msra.mxu0 0
        %3191 = vmatprep.mubr.bf16.mxu0 0
        %3192 = vmatmul.mubr.bf16.gmra.mrb[0].mxu0 %v3148
        %v3193 = vpop.f32.mrb[0].mxu0
        %v3194 = vadd.f32 0.0, %v3193
        %v3195 = vpop.f32.mrb[0].mxu0
        %v3196 = vpop.f32.mrb[0].mxu0
        %v3197 = vadd.f32 0.0, %v3196
        %v3198 = vpop.f32.mrb[0].mxu0
        %3199 = vmatprep.mubr.bf16.mxu0 0
        %3200 = vmatmul.mubr.bf16.gmra.mrb[0].mxu0 %v3151
        %v3201 = vpop.f32.mrb[0].mxu0
        %v3202 = vadd.f32 0.0, %v3201
        %v3203 = vpop.f32.mrb[0].mxu0
        %v3204 = vpop.f32.mrb[0].mxu0
        %v3205 = vadd.f32 0.0, %v3204
        %v3206 = vpop.f32.mrb[0].mxu0
        %3207 = vmatprep.mubr.bf16.mxu0 0
        %3208 = vmatmul.mubr.bf16.gmra.mrb[0].mxu0 %v3154
        %v3209 = vpop.f32.mrb[0].mxu0
        %v3210 = vadd.f32 0.0, %v3209
        %v3211 = vpop.f32.mrb[0].mxu0
        %v3212 = vpop.f32.mrb[0].mxu0
        %v3213 = vadd.f32 0.0, %v3212
        %v3214 = vpop.f32.mrb[0].mxu0
        %3215 = vmatprep.mubr.bf16.mxu0 0
        %3216 = vmatmul.mubr.bf16.gmra.mrb[0].mxu0 %v3157
        %v3217 = vpop.f32.mrb[0].mxu0
        %v3218 = vadd.f32 0.0, %v3217
        %v3219 = vpop.f32.mrb[0].mxu0
        %v3220 = vpop.f32.mrb[0].mxu0
        %v3221 = vadd.f32 0.0, %v3220
        %v3222 = vpop.f32.mrb[0].mxu0
        %3223 = vdwg.mxu0
        %v3224 = vadd.f32 %v3094, %v3194
        %v3225 = vadd.f32 %v3095, %v3197
        %v3226 = vadd.f32 %v3096, %v3202
        %v3227 = vadd.f32 %v3097, %v3205
        %v3228 = vadd.f32 %v3098, %v3210
        %v3229 = vadd.f32 %v3099, %v3213
        %v3230 = vadd.f32 %v3100, %v3218
        %v3231 = vadd.f32 %v3101, %v3221
        %v3232 = vld [vmem:[%s4 + $0x2] sm:$0x1]
        %v3233 = vlaneseq
        %v3234 = vshrl.u32 %v3233, 7
        %v3235 = vsub.s32 0, %v3234
        %v3236 = vrot.slane %v3232, %v3235
        %v3237 = vadd.f32 %v3224, %v3236
        %v3238 = vadd.f32 %v3225, %v3236
        %v3239 = vadd.f32 %v3226, %v3236
        %v3240 = vadd.f32 %v3227, %v3236
        %v3241 = vadd.f32 %v3228, %v3236
        %v3242 = vadd.f32 %v3229, %v3236
        %v3243 = vadd.f32 %v3230, %v3236
        %v3244 = vadd.f32 %v3231, %v3236
        %v3245 = vmax.f32 %v3237, 0.0
        %v3246 = vmax.f32 %v3238, 0.0
        %v3247 = vmax.f32 %v3239, 0.0
        %v3248 = vmax.f32 %v3240, 0.0
        %v3249 = vmax.f32 %v3241, 0.0
        %v3250 = vmax.f32 %v3242, 0.0
        %v3251 = vmax.f32 %v3243, 0.0
        %v3252 = vmax.f32 %v3244, 0.0
        %3253 = vst.msk [vmem:[%s870 + $0x1] sm:$0xff] %vm243, %v3245
        %3254 = vst.msk [vmem:[%s870 + $0x11] sm:$0xff] %vm243, %v3246
        %3255 = vst.msk [vmem:[%s870 + $0x21] sm:$0xff] %vm243, %v3247
        %3256 = vst.msk [vmem:[%s870 + $0x31] sm:$0xff] %vm243, %v3248
        %3257 = vst.msk [vmem:[%s870 + $0x41] sm:$0xff] %vm243, %v3249
        %3258 = vst.msk [vmem:[%s870 + $0x51] sm:$0xff] %vm243, %v3250
        %3259 = vst.msk [vmem:[%s870 + $0x61] sm:$0xff] %vm243, %v3251
        %3260 = vst.msk [vmem:[%s870 + $0x71] sm:$0xff] %vm243, %v3252
        %v3261 = vld [vmem:[#allocation2] sm:$0xff]
        %v3262 = vld [vmem:[#allocation2 + $0x10] sm:$0xff]
        %v3263 = vld [vmem:[#allocation2 + $0x20] sm:$0xff]
        %v3264 = vld [vmem:[#allocation2 + $0x30] sm:$0xff]
        %v3265 = vld [vmem:[#allocation2 + $0x40] sm:$0xff]
        %v3266 = vld [vmem:[#allocation2 + $0x50] sm:$0xff]
        %v3267 = vld [vmem:[#allocation2 + $0x60] sm:$0xff]
        %v3268 = vld [vmem:[#allocation2 + $0x70] sm:$0xff]
        %v3269 = vpack.c.bf16 %v3262, %v3261
        %v3270 = vpack.c.bf16 %v3264, %v3263
        %v3271 = vpack.c.bf16 %v3266, %v3265
        %v3272 = vpack.c.bf16 %v3268, %v3267
        %s3273 = scalar_lea.vmem %s3, 576
        %v3274 = vld [vmem:[%s3273] sm:$0xf]
        %v3275 = vld [vmem:[%s3273 + $0x4] sm:$0xf]
        %v3276 = vld [vmem:[%s3273 + $0x8] sm:$0xf]
        %v3277 = vld [vmem:[%s3273 + $0xc] sm:$0xf]
        %v3278 = vld [vmem:[%s3273 + $0x10] sm:$0xf]
        %v3279 = vld [vmem:[%s3273 + $0x14] sm:$0xf]
        %v3280 = vld [vmem:[%s3273 + $0x18] sm:$0xf]
        %v3281 = vld [vmem:[%s3273 + $0x1c] sm:$0xf]
        %v3282 = vld [vmem:[#allocation2 + $0x1] sm:$0xff]
        %v3283 = vld [vmem:[#allocation2 + $0x11] sm:$0xff]
        %v3284 = vld [vmem:[#allocation2 + $0x21] sm:$0xff]
        %v3285 = vld [vmem:[#allocation2 + $0x31] sm:$0xff]
        %v3286 = vld [vmem:[#allocation2 + $0x41] sm:$0xff]
        %v3287 = vld [vmem:[#allocation2 + $0x51] sm:$0xff]
        %v3288 = vld [vmem:[#allocation2 + $0x61] sm:$0xff]
        %v3289 = vld [vmem:[#allocation2 + $0x71] sm:$0xff]
        %v3290 = vpack.c.bf16 %v3283, %v3282
        %v3291 = vpack.c.bf16 %v3285, %v3284
        %v3292 = vpack.c.bf16 %v3287, %v3286
        %v3293 = vpack.c.bf16 %v3289, %v3288
        %s3294 = scalar_lea.vmem %s3, 608
        %v3295 = vld [vmem:[%s3294] sm:$0xf]
        %v3296 = vld [vmem:[%s3294 + $0x4] sm:$0xf]
        %v3297 = vld [vmem:[%s3294 + $0x8] sm:$0xf]
        %v3298 = vld [vmem:[%s3294 + $0xc] sm:$0xf]
        %v3299 = vld [vmem:[%s3294 + $0x10] sm:$0xf]
        %v3300 = vld [vmem:[%s3294 + $0x14] sm:$0xf]
        %v3301 = vld [vmem:[%s3294 + $0x18] sm:$0xf]
        %v3302 = vld [vmem:[%s3294 + $0x1c] sm:$0xf]
        %v3311 = vunpack.c.l.b16 %v3295
        %v3312 = vunpack.c.l.b16 %v3296
        %v3313 = vunpack.c.l.b16 %v3297
        %v3314 = vunpack.c.l.b16 %v3298
        %v3315 = vunpack.c.l.b16 %v3299
        %v3316 = vunpack.c.l.b16 %v3300
        %v3317 = vunpack.c.l.b16 %v3301
        %v3318 = vunpack.c.l.b16 %v3302
        %v3319 = vpack.c.b16 %v3312, %v3311
        %v3320 = vpack.c.b16 %v3314, %v3313
        %v3321 = vpack.c.b16 %v3316, %v3315
        %v3322 = vpack.c.b16 %v3318, %v3317
        %v3328 = vsel %vm243, %v3290, 0
        %v3331 = vsel %vm243, %v3291, 0
        %v3334 = vsel %vm243, %v3292, 0
        %v3337 = vsel %vm243, %v3293, 0
        %3339 = vmatprep.subr.bf16.mxu0 0
        %3340 = vmatpush1.bf16.msra.mxu0 %v3319
        %3341 = vmatprep.subr.bf16.mxu0 0
        %3342 = vmatpush1.bf16.msra.mxu0 %v3320
        %3343 = vmatprep.subr.bf16.mxu0 0
        %3344 = vmatpush1.bf16.msra.mxu0 %v3321
        %3345 = vmatprep.subr.bf16.mxu0 0
        %3346 = vmatpush1.bf16.msra.mxu0 %v3322
        %3347 = vmatprep.subr.bf16.mxu0 0
        %3348 = vmatpush1.bf16.msra.mxu0 0
        %3349 = vmatprep.subr.bf16.mxu0 0
        %3350 = vmatpush1.bf16.msra.mxu0 0
        %3351 = vmatprep.subr.bf16.mxu0 0
        %3352 = vmatpush1.bf16.msra.mxu0 0
        %3353 = vmatprep.subr.bf16.mxu0 0
        %3354 = vmatpush1.bf16.msra.mxu0 0
        %3355 = vmatprep.subr.bf16.mxu0 0
        %3356 = vmatpush1.bf16.msra.mxu0 0
        %3357 = vmatprep.subr.bf16.mxu0 0
        %3358 = vmatpush1.bf16.msra.mxu0 0
        %3359 = vmatprep.subr.bf16.mxu0 0
        %3360 = vmatpush1.bf16.msra.mxu0 0
        %3361 = vmatprep.subr.bf16.mxu0 0
        %3362 = vmatpush1.bf16.msra.mxu0 0
        %3363 = vmatprep.subr.bf16.mxu0 0
        %3364 = vmatpush1.bf16.msra.mxu0 0
        %3365 = vmatprep.subr.bf16.mxu0 0
        %3366 = vmatpush1.bf16.msra.mxu0 0
        %3367 = vmatprep.subr.bf16.mxu0 0
        %3368 = vmatpush1.bf16.msra.mxu0 0
        %3369 = vmatprep.subr.bf16.mxu0 0
        %3370 = vmatpush1.bf16.msra.mxu0 0
        %3371 = vmatprep.mubr.bf16.mxu0 0
        %3372 = vmatmul.mubr.bf16.gmra.mrb[0].mxu0 %v3328
        %v3373 = vpop.f32.mrb[0].mxu0
        %v3374 = vadd.f32 0.0, %v3373
        %v3375 = vpop.f32.mrb[0].mxu0
        %v3376 = vpop.f32.mrb[0].mxu0
        %v3377 = vadd.f32 0.0, %v3376
        %v3378 = vpop.f32.mrb[0].mxu0
        %3379 = vmatprep.mubr.bf16.mxu0 0
        %3380 = vmatmul.mubr.bf16.gmra.mrb[0].mxu0 %v3331
        %v3381 = vpop.f32.mrb[0].mxu0
        %v3382 = vadd.f32 0.0, %v3381
        %v3383 = vpop.f32.mrb[0].mxu0
        %v3384 = vpop.f32.mrb[0].mxu0
        %v3385 = vadd.f32 0.0, %v3384
        %v3386 = vpop.f32.mrb[0].mxu0
        %3387 = vmatprep.mubr.bf16.mxu0 0
        %3388 = vmatmul.mubr.bf16.gmra.mrb[0].mxu0 %v3334
        %v3389 = vpop.f32.mrb[0].mxu0
        %v3390 = vadd.f32 0.0, %v3389
        %v3391 = vpop.f32.mrb[0].mxu0
        %v3392 = vpop.f32.mrb[0].mxu0
        %v3393 = vadd.f32 0.0, %v3392
        %v3394 = vpop.f32.mrb[0].mxu0
        %3395 = vmatprep.mubr.bf16.mxu0 0
        %3396 = vmatmul.mubr.bf16.gmra.mrb[0].mxu0 %v3337
        %v3397 = vpop.f32.mrb[0].mxu0
        %v3398 = vadd.f32 0.0, %v3397
        %v3399 = vpop.f32.mrb[0].mxu0
        %v3400 = vpop.f32.mrb[0].mxu0
        %v3401 = vadd.f32 0.0, %v3400
        %v3402 = vpop.f32.mrb[0].mxu0
        %3403 = vdwg.mxu0
        %v3412 = vunpack.c.l.b16 %v3274
        %v3413 = vunpack.c.l.b16 %v3275
        %v3414 = vunpack.c.l.b16 %v3276
        %v3415 = vunpack.c.l.b16 %v3277
        %v3416 = vunpack.c.l.b16 %v3278
        %v3417 = vunpack.c.l.b16 %v3279
        %v3418 = vunpack.c.l.b16 %v3280
        %v3419 = vunpack.c.l.b16 %v3281
        %v3420 = vpack.c.b16 %v3413, %v3412
        %v3421 = vpack.c.b16 %v3415, %v3414
        %v3422 = vpack.c.b16 %v3417, %v3416
        %v3423 = vpack.c.b16 %v3419, %v3418
        %v3429 = vsel %vm243, %v3269, 0
        %v3432 = vsel %vm243, %v3270, 0
        %v3435 = vsel %vm243, %v3271, 0
        %v3438 = vsel %vm243, %v3272, 0
        %3440 = vmatprep.subr.bf16.mxu0 0
        %3441 = vmatpush1.bf16.msra.mxu0 %v3420
        %3442 = vmatprep.subr.bf16.mxu0 0
        %3443 = vmatpush1.bf16.msra.mxu0 %v3421
        %3444 = vmatprep.subr.bf16.mxu0 0
        %3445 = vmatpush1.bf16.msra.mxu0 %v3422
        %3446 = vmatprep.subr.bf16.mxu0 0
        %3447 = vmatpush1.bf16.msra.mxu0 %v3423
        %3448 = vmatprep.subr.bf16.mxu0 0
        %3449 = vmatpush1.bf16.msra.mxu0 0
        %3450 = vmatprep.subr.bf16.mxu0 0
        %3451 = vmatpush1.bf16.msra.mxu0 0
        %3452 = vmatprep.subr.bf16.mxu0 0
        %3453 = vmatpush1.bf16.msra.mxu0 0
        %3454 = vmatprep.subr.bf16.mxu0 0
        %3455 = vmatpush1.bf16.msra.mxu0 0
        %3456 = vmatprep.subr.bf16.mxu0 0
        %3457 = vmatpush1.bf16.msra.mxu0 0
        %3458 = vmatprep.subr.bf16.mxu0 0
        %3459 = vmatpush1.bf16.msra.mxu0 0
        %3460 = vmatprep.subr.bf16.mxu0 0
        %3461 = vmatpush1.bf16.msra.mxu0 0
        %3462 = vmatprep.subr.bf16.mxu0 0
        %3463 = vmatpush1.bf16.msra.mxu0 0
        %3464 = vmatprep.subr.bf16.mxu0 0
        %3465 = vmatpush1.bf16.msra.mxu0 0
        %3466 = vmatprep.subr.bf16.mxu0 0
        %3467 = vmatpush1.bf16.msra.mxu0 0
        %3468 = vmatprep.subr.bf16.mxu0 0
        %3469 = vmatpush1.bf16.msra.mxu0 0
        %3470 = vmatprep.subr.bf16.mxu0 0
        %3471 = vmatpush1.bf16.msra.mxu0 0
        %3472 = vmatprep.mubr.bf16.mxu0 0
        %3473 = vmatmul.mubr.bf16.gmra.mrb[0].mxu0 %v3429
        %v3474 = vpop.f32.mrb[0].mxu0
        %v3475 = vadd.f32 %v3374, %v3474
        %v3476 = vpop.f32.mrb[0].mxu0
        %v3477 = vpop.f32.mrb[0].mxu0
        %v3478 = vadd.f32 %v3377, %v3477
        %v3479 = vpop.f32.mrb[0].mxu0
        %3480 = vmatprep.mubr.bf16.mxu0 0
        %3481 = vmatmul.mubr.bf16.gmra.mrb[0].mxu0 %v3432
        %v3482 = vpop.f32.mrb[0].mxu0
        %v3483 = vadd.f32 %v3382, %v3482
        %v3484 = vpop.f32.mrb[0].mxu0
        %v3485 = vpop.f32.mrb[0].mxu0
        %v3486 = vadd.f32 %v3385, %v3485
        %v3487 = vpop.f32.mrb[0].mxu0
        %3488 = vmatprep.mubr.bf16.mxu0 0
        %3489 = vmatmul.mubr.bf16.gmra.mrb[0].mxu0 %v3435
        %v3490 = vpop.f32.mrb[0].mxu0
        %v3491 = vadd.f32 %v3390, %v3490
        %v3492 = vpop.f32.mrb[0].mxu0
        %v3493 = vpop.f32.mrb[0].mxu0
        %v3494 = vadd.f32 %v3393, %v3493
        %v3495 = vpop.f32.mrb[0].mxu0
        %3496 = vmatprep.mubr.bf16.mxu0 0
        %3497 = vmatmul.mubr.bf16.gmra.mrb[0].mxu0 %v3438
        %v3498 = vpop.f32.mrb[0].mxu0
        %v3499 = vadd.f32 %v3398, %v3498
        %v3500 = vpop.f32.mrb[0].mxu0
        %v3501 = vpop.f32.mrb[0].mxu0
        %v3502 = vadd.f32 %v3401, %v3501
        %v3503 = vpop.f32.mrb[0].mxu0
        %3504 = vdwg.mxu0
        %v3505 = vld [vmem:[#allocation2 + $0x2] sm:$0xff]
        %v3506 = vld [vmem:[#allocation2 + $0x12] sm:$0xff]
        %v3507 = vld [vmem:[#allocation2 + $0x22] sm:$0xff]
        %v3508 = vld [vmem:[#allocation2 + $0x32] sm:$0xff]
        %v3509 = vld [vmem:[#allocation2 + $0x42] sm:$0xff]
        %v3510 = vld [vmem:[#allocation2 + $0x52] sm:$0xff]
        %v3511 = vld [vmem:[#allocation2 + $0x62] sm:$0xff]
        %v3512 = vld [vmem:[#allocation2 + $0x72] sm:$0xff]
        %v3513 = vpack.c.bf16 %v3506, %v3505
        %v3514 = vpack.c.bf16 %v3508, %v3507
        %v3515 = vpack.c.bf16 %v3510, %v3509
        %v3516 = vpack.c.bf16 %v3512, %v3511
        %s3517 = scalar_lea.vmem %s3, 640
        %v3518 = vld [vmem:[%s3517] sm:$0xf]
        %v3519 = vld [vmem:[%s3517 + $0x4] sm:$0xf]
        %v3520 = vld [vmem:[%s3517 + $0x8] sm:$0xf]
        %v3521 = vld [vmem:[%s3517 + $0xc] sm:$0xf]
        %v3522 = vld [vmem:[%s3517 + $0x10] sm:$0xf]
        %v3523 = vld [vmem:[%s3517 + $0x14] sm:$0xf]
        %v3524 = vld [vmem:[%s3517 + $0x18] sm:$0xf]
        %v3525 = vld [vmem:[%s3517 + $0x1c] sm:$0xf]
        %v3534 = vunpack.c.l.b16 %v3518
        %v3535 = vunpack.c.l.b16 %v3519
        %v3536 = vunpack.c.l.b16 %v3520
        %v3537 = vunpack.c.l.b16 %v3521
        %v3538 = vunpack.c.l.b16 %v3522
        %v3539 = vunpack.c.l.b16 %v3523
        %v3540 = vunpack.c.l.b16 %v3524
        %v3541 = vunpack.c.l.b16 %v3525
        %v3542 = vpack.c.b16 %v3535, %v3534
        %v3543 = vpack.c.b16 %v3537, %v3536
        %v3544 = vpack.c.b16 %v3539, %v3538
        %v3545 = vpack.c.b16 %v3541, %v3540
        %v3551 = vsel %vm243, %v3513, 0
        %v3554 = vsel %vm243, %v3514, 0
        %v3557 = vsel %vm243, %v3515, 0
        %v3560 = vsel %vm243, %v3516, 0
        %3562 = vmatprep.subr.bf16.mxu0 0
        %3563 = vmatpush1.bf16.msra.mxu0 %v3542
        %3564 = vmatprep.subr.bf16.mxu0 0
        %3565 = vmatpush1.bf16.msra.mxu0 %v3543
        %3566 = vmatprep.subr.bf16.mxu0 0
        %3567 = vmatpush1.bf16.msra.mxu0 %v3544
        %3568 = vmatprep.subr.bf16.mxu0 0
        %3569 = vmatpush1.bf16.msra.mxu0 %v3545
        %3570 = vmatprep.subr.bf16.mxu0 0
        %3571 = vmatpush1.bf16.msra.mxu0 0
        %3572 = vmatprep.subr.bf16.mxu0 0
        %3573 = vmatpush1.bf16.msra.mxu0 0
        %3574 = vmatprep.subr.bf16.mxu0 0
        %3575 = vmatpush1.bf16.msra.mxu0 0
        %3576 = vmatprep.subr.bf16.mxu0 0
        %3577 = vmatpush1.bf16.msra.mxu0 0
        %3578 = vmatprep.subr.bf16.mxu0 0
        %3579 = vmatpush1.bf16.msra.mxu0 0
        %3580 = vmatprep.subr.bf16.mxu0 0
        %3581 = vmatpush1.bf16.msra.mxu0 0
        %3582 = vmatprep.subr.bf16.mxu0 0
        %3583 = vmatpush1.bf16.msra.mxu0 0
        %3584 = vmatprep.subr.bf16.mxu0 0
        %3585 = vmatpush1.bf16.msra.mxu0 0
        %3586 = vmatprep.subr.bf16.mxu0 0
        %3587 = vmatpush1.bf16.msra.mxu0 0
        %3588 = vmatprep.subr.bf16.mxu0 0
        %3589 = vmatpush1.bf16.msra.mxu0 0
        %3590 = vmatprep.subr.bf16.mxu0 0
        %3591 = vmatpush1.bf16.msra.mxu0 0
        %3592 = vmatprep.subr.bf16.mxu0 0
        %3593 = vmatpush1.bf16.msra.mxu0 0
        %3594 = vmatprep.mubr.bf16.mxu0 0
        %3595 = vmatmul.mubr.bf16.gmra.mrb[0].mxu0 %v3551
        %v3596 = vpop.f32.mrb[0].mxu0
        %v3597 = vadd.f32 0.0, %v3596
        %v3598 = vpop.f32.mrb[0].mxu0
        %v3599 = vpop.f32.mrb[0].mxu0
        %v3600 = vadd.f32 0.0, %v3599
        %v3601 = vpop.f32.mrb[0].mxu0
        %3602 = vmatprep.mubr.bf16.mxu0 0
        %3603 = vmatmul.mubr.bf16.gmra.mrb[0].mxu0 %v3554
        %v3604 = vpop.f32.mrb[0].mxu0
        %v3605 = vadd.f32 0.0, %v3604
        %v3606 = vpop.f32.mrb[0].mxu0
        %v3607 = vpop.f32.mrb[0].mxu0
        %v3608 = vadd.f32 0.0, %v3607
        %v3609 = vpop.f32.mrb[0].mxu0
        %3610 = vmatprep.mubr.bf16.mxu0 0
        %3611 = vmatmul.mubr.bf16.gmra.mrb[0].mxu0 %v3557
        %v3612 = vpop.f32.mrb[0].mxu0
        %v3613 = vadd.f32 0.0, %v3612
        %v3614 = vpop.f32.mrb[0].mxu0
        %v3615 = vpop.f32.mrb[0].mxu0
        %v3616 = vadd.f32 0.0, %v3615
        %v3617 = vpop.f32.mrb[0].mxu0
        %3618 = vmatprep.mubr.bf16.mxu0 0
        %3619 = vmatmul.mubr.bf16.gmra.mrb[0].mxu0 %v3560
        %v3620 = vpop.f32.mrb[0].mxu0
        %v3621 = vadd.f32 0.0, %v3620
        %v3622 = vpop.f32.mrb[0].mxu0
        %v3623 = vpop.f32.mrb[0].mxu0
        %v3624 = vadd.f32 0.0, %v3623
        %v3625 = vpop.f32.mrb[0].mxu0
        %3626 = vdwg.mxu0
        %v3627 = vadd.f32 %v3475, %v3597
        %v3628 = vadd.f32 %v3478, %v3600
        %v3629 = vadd.f32 %v3483, %v3605
        %v3630 = vadd.f32 %v3486, %v3608
        %v3631 = vadd.f32 %v3491, %v3613
        %v3632 = vadd.f32 %v3494, %v3616
        %v3633 = vadd.f32 %v3499, %v3621
        %v3634 = vadd.f32 %v3502, %v3624
        %v3635 = vld [vmem:[%s870] sm:$0xff]
        %v3636 = vld [vmem:[%s870 + $0x10] sm:$0xff]
        %v3637 = vld [vmem:[%s870 + $0x20] sm:$0xff]
        %v3638 = vld [vmem:[%s870 + $0x30] sm:$0xff]
        %v3639 = vld [vmem:[%s870 + $0x40] sm:$0xff]
        %v3640 = vld [vmem:[%s870 + $0x50] sm:$0xff]
        %v3641 = vld [vmem:[%s870 + $0x60] sm:$0xff]
        %v3642 = vld [vmem:[%s870 + $0x70] sm:$0xff]
        %v3643 = vpack.c.bf16 %v3636, %v3635
        %v3644 = vpack.c.bf16 %v3638, %v3637
        %v3645 = vpack.c.bf16 %v3640, %v3639
        %v3646 = vpack.c.bf16 %v3642, %v3641
        %s3647 = scalar_lea.vmem %s3, 672
        %v3648 = vld [vmem:[%s3647] sm:$0xf]
        %v3649 = vld [vmem:[%s3647 + $0x4] sm:$0xf]
        %v3650 = vld [vmem:[%s3647 + $0x8] sm:$0xf]
        %v3651 = vld [vmem:[%s3647 + $0xc] sm:$0xf]
        %v3652 = vld [vmem:[%s3647 + $0x10] sm:$0xf]
        %v3653 = vld [vmem:[%s3647 + $0x14] sm:$0xf]
        %v3654 = vld [vmem:[%s3647 + $0x18] sm:$0xf]
        %v3655 = vld [vmem:[%s3647 + $0x1c] sm:$0xf]
        %v3664 = vunpack.c.l.b16 %v3648
        %v3665 = vunpack.c.l.b16 %v3649
        %v3666 = vunpack.c.l.b16 %v3650
        %v3667 = vunpack.c.l.b16 %v3651
        %v3668 = vunpack.c.l.b16 %v3652
        %v3669 = vunpack.c.l.b16 %v3653
        %v3670 = vunpack.c.l.b16 %v3654
        %v3671 = vunpack.c.l.b16 %v3655
        %v3672 = vpack.c.b16 %v3665, %v3664
        %v3673 = vpack.c.b16 %v3667, %v3666
        %v3674 = vpack.c.b16 %v3669, %v3668
        %v3675 = vpack.c.b16 %v3671, %v3670
        %v3681 = vsel %vm243, %v3643, 0
        %v3684 = vsel %vm243, %v3644, 0
        %v3687 = vsel %vm243, %v3645, 0
        %v3690 = vsel %vm243, %v3646, 0
        %3692 = vmatprep.subr.bf16.mxu0 0
        %3693 = vmatpush1.bf16.msra.mxu0 %v3672
        %3694 = vmatprep.subr.bf16.mxu0 0
        %3695 = vmatpush1.bf16.msra.mxu0 %v3673
        %3696 = vmatprep.subr.bf16.mxu0 0
        %3697 = vmatpush1.bf16.msra.mxu0 %v3674
        %3698 = vmatprep.subr.bf16.mxu0 0
        %3699 = vmatpush1.bf16.msra.mxu0 %v3675
        %3700 = vmatprep.subr.bf16.mxu0 0
        %3701 = vmatpush1.bf16.msra.mxu0 0
        %3702 = vmatprep.subr.bf16.mxu0 0
        %3703 = vmatpush1.bf16.msra.mxu0 0
        %3704 = vmatprep.subr.bf16.mxu0 0
        %3705 = vmatpush1.bf16.msra.mxu0 0
        %3706 = vmatprep.subr.bf16.mxu0 0
        %3707 = vmatpush1.bf16.msra.mxu0 0
        %3708 = vmatprep.subr.bf16.mxu0 0
        %3709 = vmatpush1.bf16.msra.mxu0 0
        %3710 = vmatprep.subr.bf16.mxu0 0
        %3711 = vmatpush1.bf16.msra.mxu0 0
        %3712 = vmatprep.subr.bf16.mxu0 0
        %3713 = vmatpush1.bf16.msra.mxu0 0
        %3714 = vmatprep.subr.bf16.mxu0 0
        %3715 = vmatpush1.bf16.msra.mxu0 0
        %3716 = vmatprep.subr.bf16.mxu0 0
        %3717 = vmatpush1.bf16.msra.mxu0 0
        %3718 = vmatprep.subr.bf16.mxu0 0
        %3719 = vmatpush1.bf16.msra.mxu0 0
        %3720 = vmatprep.subr.bf16.mxu0 0
        %3721 = vmatpush1.bf16.msra.mxu0 0
        %3722 = vmatprep.subr.bf16.mxu0 0
        %3723 = vmatpush1.bf16.msra.mxu0 0
        %3724 = vmatprep.mubr.bf16.mxu0 0
        %3725 = vmatmul.mubr.bf16.gmra.mrb[0].mxu0 %v3681
        %v3726 = vpop.f32.mrb[0].mxu0
        %v3727 = vadd.f32 0.0, %v3726
        %v3728 = vpop.f32.mrb[0].mxu0
        %v3729 = vpop.f32.mrb[0].mxu0
        %v3730 = vadd.f32 0.0, %v3729
        %v3731 = vpop.f32.mrb[0].mxu0
        %3732 = vmatprep.mubr.bf16.mxu0 0
        %3733 = vmatmul.mubr.bf16.gmra.mrb[0].mxu0 %v3684
        %v3734 = vpop.f32.mrb[0].mxu0
        %v3735 = vadd.f32 0.0, %v3734
        %v3736 = vpop.f32.mrb[0].mxu0
        %v3737 = vpop.f32.mrb[0].mxu0
        %v3738 = vadd.f32 0.0, %v3737
        %v3739 = vpop.f32.mrb[0].mxu0
        %3740 = vmatprep.mubr.bf16.mxu0 0
        %3741 = vmatmul.mubr.bf16.gmra.mrb[0].mxu0 %v3687
        %v3742 = vpop.f32.mrb[0].mxu0
        %v3743 = vadd.f32 0.0, %v3742
        %v3744 = vpop.f32.mrb[0].mxu0
        %v3745 = vpop.f32.mrb[0].mxu0
        %v3746 = vadd.f32 0.0, %v3745
        %v3747 = vpop.f32.mrb[0].mxu0
        %3748 = vmatprep.mubr.bf16.mxu0 0
        %3749 = vmatmul.mubr.bf16.gmra.mrb[0].mxu0 %v3690
        %v3750 = vpop.f32.mrb[0].mxu0
        %v3751 = vadd.f32 0.0, %v3750
        %v3752 = vpop.f32.mrb[0].mxu0
        %v3753 = vpop.f32.mrb[0].mxu0
        %v3754 = vadd.f32 0.0, %v3753
        %v3755 = vpop.f32.mrb[0].mxu0
        %3756 = vdwg.mxu0
        %v3757 = vadd.f32 %v3627, %v3727
        %v3758 = vadd.f32 %v3628, %v3730
        %v3759 = vadd.f32 %v3629, %v3735
        %v3760 = vadd.f32 %v3630, %v3738
        %v3761 = vadd.f32 %v3631, %v3743
        %v3762 = vadd.f32 %v3632, %v3746
        %v3763 = vadd.f32 %v3633, %v3751
        %v3764 = vadd.f32 %v3634, %v3754
        %v3765 = vld [vmem:[%s870 + $0x1] sm:$0xff]
        %v3766 = vld [vmem:[%s870 + $0x11] sm:$0xff]
        %v3767 = vld [vmem:[%s870 + $0x21] sm:$0xff]
        %v3768 = vld [vmem:[%s870 + $0x31] sm:$0xff]
        %v3769 = vld [vmem:[%s870 + $0x41] sm:$0xff]
        %v3770 = vld [vmem:[%s870 + $0x51] sm:$0xff]
        %v3771 = vld [vmem:[%s870 + $0x61] sm:$0xff]
        %v3772 = vld [vmem:[%s870 + $0x71] sm:$0xff]
        %v3773 = vpack.c.bf16 %v3766, %v3765
        %v3774 = vpack.c.bf16 %v3768, %v3767
        %v3775 = vpack.c.bf16 %v3770, %v3769
        %v3776 = vpack.c.bf16 %v3772, %v3771
        %s3777 = scalar_lea.vmem %s3, 704
        %v3778 = vld [vmem:[%s3777] sm:$0xf]
        %v3779 = vld [vmem:[%s3777 + $0x4] sm:$0xf]
        %v3780 = vld [vmem:[%s3777 + $0x8] sm:$0xf]
        %v3781 = vld [vmem:[%s3777 + $0xc] sm:$0xf]
        %v3782 = vld [vmem:[%s3777 + $0x10] sm:$0xf]
        %v3783 = vld [vmem:[%s3777 + $0x14] sm:$0xf]
        %v3784 = vld [vmem:[%s3777 + $0x18] sm:$0xf]
        %v3785 = vld [vmem:[%s3777 + $0x1c] sm:$0xf]
        %v3794 = vunpack.c.l.b16 %v3778
        %v3795 = vunpack.c.l.b16 %v3779
        %v3796 = vunpack.c.l.b16 %v3780
        %v3797 = vunpack.c.l.b16 %v3781
        %v3798 = vunpack.c.l.b16 %v3782
        %v3799 = vunpack.c.l.b16 %v3783
        %v3800 = vunpack.c.l.b16 %v3784
        %v3801 = vunpack.c.l.b16 %v3785
        %v3802 = vpack.c.b16 %v3795, %v3794
        %v3803 = vpack.c.b16 %v3797, %v3796
        %v3804 = vpack.c.b16 %v3799, %v3798
        %v3805 = vpack.c.b16 %v3801, %v3800
        %v3811 = vsel %vm243, %v3773, 0
        %v3814 = vsel %vm243, %v3774, 0
        %v3817 = vsel %vm243, %v3775, 0
        %v3820 = vsel %vm243, %v3776, 0
        %3822 = vmatprep.subr.bf16.mxu0 0
        %3823 = vmatpush1.bf16.msra.mxu0 %v3802
        %3824 = vmatprep.subr.bf16.mxu0 0
        %3825 = vmatpush1.bf16.msra.mxu0 %v3803
        %3826 = vmatprep.subr.bf16.mxu0 0
        %3827 = vmatpush1.bf16.msra.mxu0 %v3804
        %3828 = vmatprep.subr.bf16.mxu0 0
        %3829 = vmatpush1.bf16.msra.mxu0 %v3805
        %3830 = vmatprep.subr.bf16.mxu0 0
        %3831 = vmatpush1.bf16.msra.mxu0 0
        %3832 = vmatprep.subr.bf16.mxu0 0
        %3833 = vmatpush1.bf16.msra.mxu0 0
        %3834 = vmatprep.subr.bf16.mxu0 0
        %3835 = vmatpush1.bf16.msra.mxu0 0
        %3836 = vmatprep.subr.bf16.mxu0 0
        %3837 = vmatpush1.bf16.msra.mxu0 0
        %3838 = vmatprep.subr.bf16.mxu0 0
        %3839 = vmatpush1.bf16.msra.mxu0 0
        %3840 = vmatprep.subr.bf16.mxu0 0
        %3841 = vmatpush1.bf16.msra.mxu0 0
        %3842 = vmatprep.subr.bf16.mxu0 0
        %3843 = vmatpush1.bf16.msra.mxu0 0
        %3844 = vmatprep.subr.bf16.mxu0 0
        %3845 = vmatpush1.bf16.msra.mxu0 0
        %3846 = vmatprep.subr.bf16.mxu0 0
        %3847 = vmatpush1.bf16.msra.mxu0 0
        %3848 = vmatprep.subr.bf16.mxu0 0
        %3849 = vmatpush1.bf16.msra.mxu0 0
        %3850 = vmatprep.subr.bf16.mxu0 0
        %3851 = vmatpush1.bf16.msra.mxu0 0
        %3852 = vmatprep.subr.bf16.mxu0 0
        %3853 = vmatpush1.bf16.msra.mxu0 0
        %3854 = vmatprep.mubr.bf16.mxu0 0
        %3855 = vmatmul.mubr.bf16.gmra.mrb[0].mxu0 %v3811
        %v3856 = vpop.f32.mrb[0].mxu0
        %v3857 = vadd.f32 0.0, %v3856
        %v3858 = vpop.f32.mrb[0].mxu0
        %v3859 = vpop.f32.mrb[0].mxu0
        %v3860 = vadd.f32 0.0, %v3859
        %v3861 = vpop.f32.mrb[0].mxu0
        %3862 = vmatprep.mubr.bf16.mxu0 0
        %3863 = vmatmul.mubr.bf16.gmra.mrb[0].mxu0 %v3814
        %v3864 = vpop.f32.mrb[0].mxu0
        %v3865 = vadd.f32 0.0, %v3864
        %v3866 = vpop.f32.mrb[0].mxu0
        %v3867 = vpop.f32.mrb[0].mxu0
        %v3868 = vadd.f32 0.0, %v3867
        %v3869 = vpop.f32.mrb[0].mxu0
        %3870 = vmatprep.mubr.bf16.mxu0 0
        %3871 = vmatmul.mubr.bf16.gmra.mrb[0].mxu0 %v3817
        %v3872 = vpop.f32.mrb[0].mxu0
        %v3873 = vadd.f32 0.0, %v3872
        %v3874 = vpop.f32.mrb[0].mxu0
        %v3875 = vpop.f32.mrb[0].mxu0
        %v3876 = vadd.f32 0.0, %v3875
        %v3877 = vpop.f32.mrb[0].mxu0
        %3878 = vmatprep.mubr.bf16.mxu0 0
        %3879 = vmatmul.mubr.bf16.gmra.mrb[0].mxu0 %v3820
        %v3880 = vpop.f32.mrb[0].mxu0
        %v3881 = vadd.f32 0.0, %v3880
        %v3882 = vpop.f32.mrb[0].mxu0
        %v3883 = vpop.f32.mrb[0].mxu0
        %v3884 = vadd.f32 0.0, %v3883
        %v3885 = vpop.f32.mrb[0].mxu0
        %3886 = vdwg.mxu0
        %v3887 = vadd.f32 %v3757, %v3857
        %v3888 = vadd.f32 %v3758, %v3860
        %v3889 = vadd.f32 %v3759, %v3865
        %v3890 = vadd.f32 %v3760, %v3868
        %v3891 = vadd.f32 %v3761, %v3873
        %v3892 = vadd.f32 %v3762, %v3876
        %v3893 = vadd.f32 %v3763, %v3881
        %v3894 = vadd.f32 %v3764, %v3884
        %v3895 = vld [vmem:[%s870 + $0x2] sm:$0xff]
        %v3896 = vld [vmem:[%s870 + $0x12] sm:$0xff]
        %v3897 = vld [vmem:[%s870 + $0x22] sm:$0xff]
        %v3898 = vld [vmem:[%s870 + $0x32] sm:$0xff]
        %v3899 = vld [vmem:[%s870 + $0x42] sm:$0xff]
        %v3900 = vld [vmem:[%s870 + $0x52] sm:$0xff]
        %v3901 = vld [vmem:[%s870 + $0x62] sm:$0xff]
        %v3902 = vld [vmem:[%s870 + $0x72] sm:$0xff]
        %v3903 = vpack.c.bf16 %v3896, %v3895
        %v3904 = vpack.c.bf16 %v3898, %v3897
        %v3905 = vpack.c.bf16 %v3900, %v3899
        %v3906 = vpack.c.bf16 %v3902, %v3901
        %s3907 = scalar_lea.vmem %s3, 736
        %v3908 = vld [vmem:[%s3907] sm:$0xf]
        %v3909 = vld [vmem:[%s3907 + $0x4] sm:$0xf]
        %v3910 = vld [vmem:[%s3907 + $0x8] sm:$0xf]
        %v3911 = vld [vmem:[%s3907 + $0xc] sm:$0xf]
        %v3912 = vld [vmem:[%s3907 + $0x10] sm:$0xf]
        %v3913 = vld [vmem:[%s3907 + $0x14] sm:$0xf]
        %v3914 = vld [vmem:[%s3907 + $0x18] sm:$0xf]
        %v3915 = vld [vmem:[%s3907 + $0x1c] sm:$0xf]
        %v3924 = vunpack.c.l.b16 %v3908
        %v3925 = vunpack.c.l.b16 %v3909
        %v3926 = vunpack.c.l.b16 %v3910
        %v3927 = vunpack.c.l.b16 %v3911
        %v3928 = vunpack.c.l.b16 %v3912
        %v3929 = vunpack.c.l.b16 %v3913
        %v3930 = vunpack.c.l.b16 %v3914
        %v3931 = vunpack.c.l.b16 %v3915
        %v3932 = vpack.c.b16 %v3925, %v3924
        %v3933 = vpack.c.b16 %v3927, %v3926
        %v3934 = vpack.c.b16 %v3929, %v3928
        %v3935 = vpack.c.b16 %v3931, %v3930
        %v3941 = vsel %vm243, %v3903, 0
        %v3944 = vsel %vm243, %v3904, 0
        %v3947 = vsel %vm243, %v3905, 0
        %v3950 = vsel %vm243, %v3906, 0
        %3952 = vmatprep.subr.bf16.mxu0 0
        %3953 = vmatpush1.bf16.msra.mxu0 %v3932
        %3954 = vmatprep.subr.bf16.mxu0 0
        %3955 = vmatpush1.bf16.msra.mxu0 %v3933
        %3956 = vmatprep.subr.bf16.mxu0 0
        %3957 = vmatpush1.bf16.msra.mxu0 %v3934
        %3958 = vmatprep.subr.bf16.mxu0 0
        %3959 = vmatpush1.bf16.msra.mxu0 %v3935
        %3960 = vmatprep.subr.bf16.mxu0 0
        %3961 = vmatpush1.bf16.msra.mxu0 0
        %3962 = vmatprep.subr.bf16.mxu0 0
        %3963 = vmatpush1.bf16.msra.mxu0 0
        %3964 = vmatprep.subr.bf16.mxu0 0
        %3965 = vmatpush1.bf16.msra.mxu0 0
        %3966 = vmatprep.subr.bf16.mxu0 0
        %3967 = vmatpush1.bf16.msra.mxu0 0
        %3968 = vmatprep.subr.bf16.mxu0 0
        %3969 = vmatpush1.bf16.msra.mxu0 0
        %3970 = vmatprep.subr.bf16.mxu0 0
        %3971 = vmatpush1.bf16.msra.mxu0 0
        %3972 = vmatprep.subr.bf16.mxu0 0
        %3973 = vmatpush1.bf16.msra.mxu0 0
        %3974 = vmatprep.subr.bf16.mxu0 0
        %3975 = vmatpush1.bf16.msra.mxu0 0
        %3976 = vmatprep.subr.bf16.mxu0 0
        %3977 = vmatpush1.bf16.msra.mxu0 0
        %3978 = vmatprep.subr.bf16.mxu0 0
        %3979 = vmatpush1.bf16.msra.mxu0 0
        %3980 = vmatprep.subr.bf16.mxu0 0
        %3981 = vmatpush1.bf16.msra.mxu0 0
        %3982 = vmatprep.subr.bf16.mxu0 0
        %3983 = vmatpush1.bf16.msra.mxu0 0
        %3984 = vmatprep.mubr.bf16.mxu0 0
        %3985 = vmatmul.mubr.bf16.gmra.mrb[0].mxu0 %v3941
        %v3986 = vpop.f32.mrb[0].mxu0
        %v3987 = vadd.f32 0.0, %v3986
        %v3988 = vpop.f32.mrb[0].mxu0
        %v3989 = vpop.f32.mrb[0].mxu0
        %v3990 = vadd.f32 0.0, %v3989
        %v3991 = vpop.f32.mrb[0].mxu0
        %3992 = vmatprep.mubr.bf16.mxu0 0
        %3993 = vmatmul.mubr.bf16.gmra.mrb[0].mxu0 %v3944
        %v3994 = vpop.f32.mrb[0].mxu0
        %v3995 = vadd.f32 0.0, %v3994
        %v3996 = vpop.f32.mrb[0].mxu0
        %v3997 = vpop.f32.mrb[0].mxu0
        %v3998 = vadd.f32 0.0, %v3997
        %v3999 = vpop.f32.mrb[0].mxu0
        %4000 = vmatprep.mubr.bf16.mxu0 0
        %4001 = vmatmul.mubr.bf16.gmra.mrb[0].mxu0 %v3947
        %v4002 = vpop.f32.mrb[0].mxu0
        %v4003 = vadd.f32 0.0, %v4002
        %v4004 = vpop.f32.mrb[0].mxu0
        %v4005 = vpop.f32.mrb[0].mxu0
        %v4006 = vadd.f32 0.0, %v4005
        %v4007 = vpop.f32.mrb[0].mxu0
        %4008 = vmatprep.mubr.bf16.mxu0 0
        %4009 = vmatmul.mubr.bf16.gmra.mrb[0].mxu0 %v3950
        %v4010 = vpop.f32.mrb[0].mxu0
        %v4011 = vadd.f32 0.0, %v4010
        %v4012 = vpop.f32.mrb[0].mxu0
        %v4013 = vpop.f32.mrb[0].mxu0
        %v4014 = vadd.f32 0.0, %v4013
        %v4015 = vpop.f32.mrb[0].mxu0
        %4016 = vdwg.mxu0
        %v4017 = vadd.f32 %v3887, %v3987
        %v4018 = vadd.f32 %v3888, %v3990
        %v4019 = vadd.f32 %v3889, %v3995
        %v4020 = vadd.f32 %v3890, %v3998
        %v4021 = vadd.f32 %v3891, %v4003
        %v4022 = vadd.f32 %v3892, %v4006
        %v4023 = vadd.f32 %v3893, %v4011
        %v4024 = vadd.f32 %v3894, %v4014
        %v4025 = vld [vmem:[%s1642] sm:$0xff]
        %v4026 = vld [vmem:[%s1642 + $0x10] sm:$0xff]
        %v4027 = vld [vmem:[%s1642 + $0x20] sm:$0xff]
        %v4028 = vld [vmem:[%s1642 + $0x30] sm:$0xff]
        %v4029 = vld [vmem:[%s1642 + $0x40] sm:$0xff]
        %v4030 = vld [vmem:[%s1642 + $0x50] sm:$0xff]
        %v4031 = vld [vmem:[%s1642 + $0x60] sm:$0xff]
        %v4032 = vld [vmem:[%s1642 + $0x70] sm:$0xff]
        %v4033 = vpack.c.bf16 %v4026, %v4025
        %v4034 = vpack.c.bf16 %v4028, %v4027
        %v4035 = vpack.c.bf16 %v4030, %v4029
        %v4036 = vpack.c.bf16 %v4032, %v4031
        %s4037 = scalar_lea.vmem %s3, 768
        %v4038 = vld [vmem:[%s4037] sm:$0xf]
        %v4039 = vld [vmem:[%s4037 + $0x4] sm:$0xf]
        %v4040 = vld [vmem:[%s4037 + $0x8] sm:$0xf]
        %v4041 = vld [vmem:[%s4037 + $0xc] sm:$0xf]
        %v4042 = vld [vmem:[%s4037 + $0x10] sm:$0xf]
        %v4043 = vld [vmem:[%s4037 + $0x14] sm:$0xf]
        %v4044 = vld [vmem:[%s4037 + $0x18] sm:$0xf]
        %v4045 = vld [vmem:[%s4037 + $0x1c] sm:$0xf]
        %v4054 = vunpack.c.l.b16 %v4038
        %v4055 = vunpack.c.l.b16 %v4039
        %v4056 = vunpack.c.l.b16 %v4040
        %v4057 = vunpack.c.l.b16 %v4041
        %v4058 = vunpack.c.l.b16 %v4042
        %v4059 = vunpack.c.l.b16 %v4043
        %v4060 = vunpack.c.l.b16 %v4044
        %v4061 = vunpack.c.l.b16 %v4045
        %v4062 = vpack.c.b16 %v4055, %v4054
        %v4063 = vpack.c.b16 %v4057, %v4056
        %v4064 = vpack.c.b16 %v4059, %v4058
        %v4065 = vpack.c.b16 %v4061, %v4060
        %v4071 = vsel %vm243, %v4033, 0
        %v4074 = vsel %vm243, %v4034, 0
        %v4077 = vsel %vm243, %v4035, 0
        %v4080 = vsel %vm243, %v4036, 0
        %4082 = vmatprep.subr.bf16.mxu0 0
        %4083 = vmatpush1.bf16.msra.mxu0 %v4062
        %4084 = vmatprep.subr.bf16.mxu0 0
        %4085 = vmatpush1.bf16.msra.mxu0 %v4063
        %4086 = vmatprep.subr.bf16.mxu0 0
        %4087 = vmatpush1.bf16.msra.mxu0 %v4064
        %4088 = vmatprep.subr.bf16.mxu0 0
        %4089 = vmatpush1.bf16.msra.mxu0 %v4065
        %4090 = vmatprep.subr.bf16.mxu0 0
        %4091 = vmatpush1.bf16.msra.mxu0 0
        %4092 = vmatprep.subr.bf16.mxu0 0
        %4093 = vmatpush1.bf16.msra.mxu0 0
        %4094 = vmatprep.subr.bf16.mxu0 0
        %4095 = vmatpush1.bf16.msra.mxu0 0
        %4096 = vmatprep.subr.bf16.mxu0 0
        %4097 = vmatpush1.bf16.msra.mxu0 0
        %4098 = vmatprep.subr.bf16.mxu0 0
        %4099 = vmatpush1.bf16.msra.mxu0 0
        %4100 = vmatprep.subr.bf16.mxu0 0
        %4101 = vmatpush1.bf16.msra.mxu0 0
        %4102 = vmatprep.subr.bf16.mxu0 0
        %4103 = vmatpush1.bf16.msra.mxu0 0
        %4104 = vmatprep.subr.bf16.mxu0 0
        %4105 = vmatpush1.bf16.msra.mxu0 0
        %4106 = vmatprep.subr.bf16.mxu0 0
        %4107 = vmatpush1.bf16.msra.mxu0 0
        %4108 = vmatprep.subr.bf16.mxu0 0
        %4109 = vmatpush1.bf16.msra.mxu0 0
        %4110 = vmatprep.subr.bf16.mxu0 0
        %4111 = vmatpush1.bf16.msra.mxu0 0
        %4112 = vmatprep.subr.bf16.mxu0 0
        %4113 = vmatpush1.bf16.msra.mxu0 0
        %4114 = vmatprep.mubr.bf16.mxu0 0
        %4115 = vmatmul.mubr.bf16.gmra.mrb[0].mxu0 %v4071
        %v4116 = vpop.f32.mrb[0].mxu0
        %v4117 = vadd.f32 0.0, %v4116
        %v4118 = vpop.f32.mrb[0].mxu0
        %v4119 = vpop.f32.mrb[0].mxu0
        %v4120 = vadd.f32 0.0, %v4119
        %v4121 = vpop.f32.mrb[0].mxu0
        %4122 = vmatprep.mubr.bf16.mxu0 0
        %4123 = vmatmul.mubr.bf16.gmra.mrb[0].mxu0 %v4074
        %v4124 = vpop.f32.mrb[0].mxu0
        %v4125 = vadd.f32 0.0, %v4124
        %v4126 = vpop.f32.mrb[0].mxu0
        %v4127 = vpop.f32.mrb[0].mxu0
        %v4128 = vadd.f32 0.0, %v4127
        %v4129 = vpop.f32.mrb[0].mxu0
        %4130 = vmatprep.mubr.bf16.mxu0 0
        %4131 = vmatmul.mubr.bf16.gmra.mrb[0].mxu0 %v4077
        %v4132 = vpop.f32.mrb[0].mxu0
        %v4133 = vadd.f32 0.0, %v4132
        %v4134 = vpop.f32.mrb[0].mxu0
        %v4135 = vpop.f32.mrb[0].mxu0
        %v4136 = vadd.f32 0.0, %v4135
        %v4137 = vpop.f32.mrb[0].mxu0
        %4138 = vmatprep.mubr.bf16.mxu0 0
        %4139 = vmatmul.mubr.bf16.gmra.mrb[0].mxu0 %v4080
        %v4140 = vpop.f32.mrb[0].mxu0
        %v4141 = vadd.f32 0.0, %v4140
        %v4142 = vpop.f32.mrb[0].mxu0
        %v4143 = vpop.f32.mrb[0].mxu0
        %v4144 = vadd.f32 0.0, %v4143
        %v4145 = vpop.f32.mrb[0].mxu0
        %4146 = vdwg.mxu0
        %v4147 = vadd.f32 %v4017, %v4117
        %v4148 = vadd.f32 %v4018, %v4120
        %v4149 = vadd.f32 %v4019, %v4125
        %v4150 = vadd.f32 %v4020, %v4128
        %v4151 = vadd.f32 %v4021, %v4133
        %v4152 = vadd.f32 %v4022, %v4136
        %v4153 = vadd.f32 %v4023, %v4141
        %v4154 = vadd.f32 %v4024, %v4144
        %v4155 = vld [vmem:[%s1642 + $0x1] sm:$0xff]
        %v4156 = vld [vmem:[%s1642 + $0x11] sm:$0xff]
        %v4157 = vld [vmem:[%s1642 + $0x21] sm:$0xff]
        %v4158 = vld [vmem:[%s1642 + $0x31] sm:$0xff]
        %v4159 = vld [vmem:[%s1642 + $0x41] sm:$0xff]
        %v4160 = vld [vmem:[%s1642 + $0x51] sm:$0xff]
        %v4161 = vld [vmem:[%s1642 + $0x61] sm:$0xff]
        %v4162 = vld [vmem:[%s1642 + $0x71] sm:$0xff]
        %v4163 = vpack.c.bf16 %v4156, %v4155
        %v4164 = vpack.c.bf16 %v4158, %v4157
        %v4165 = vpack.c.bf16 %v4160, %v4159
        %v4166 = vpack.c.bf16 %v4162, %v4161
        %s4167 = scalar_lea.vmem %s3, 800
        %v4168 = vld [vmem:[%s4167] sm:$0xf]
        %v4169 = vld [vmem:[%s4167 + $0x4] sm:$0xf]
        %v4170 = vld [vmem:[%s4167 + $0x8] sm:$0xf]
        %v4171 = vld [vmem:[%s4167 + $0xc] sm:$0xf]
        %v4172 = vld [vmem:[%s4167 + $0x10] sm:$0xf]
        %v4173 = vld [vmem:[%s4167 + $0x14] sm:$0xf]
        %v4174 = vld [vmem:[%s4167 + $0x18] sm:$0xf]
        %v4175 = vld [vmem:[%s4167 + $0x1c] sm:$0xf]
        %v4184 = vunpack.c.l.b16 %v4168
        %v4185 = vunpack.c.l.b16 %v4169
        %v4186 = vunpack.c.l.b16 %v4170
        %v4187 = vunpack.c.l.b16 %v4171
        %v4188 = vunpack.c.l.b16 %v4172
        %v4189 = vunpack.c.l.b16 %v4173
        %v4190 = vunpack.c.l.b16 %v4174
        %v4191 = vunpack.c.l.b16 %v4175
        %v4192 = vpack.c.b16 %v4185, %v4184
        %v4193 = vpack.c.b16 %v4187, %v4186
        %v4194 = vpack.c.b16 %v4189, %v4188
        %v4195 = vpack.c.b16 %v4191, %v4190
        %v4201 = vsel %vm243, %v4163, 0
        %v4204 = vsel %vm243, %v4164, 0
        %v4207 = vsel %vm243, %v4165, 0
        %v4210 = vsel %vm243, %v4166, 0
        %4212 = vmatprep.subr.bf16.mxu0 0
        %4213 = vmatpush1.bf16.msra.mxu0 %v4192
        %4214 = vmatprep.subr.bf16.mxu0 0
        %4215 = vmatpush1.bf16.msra.mxu0 %v4193
        %4216 = vmatprep.subr.bf16.mxu0 0
        %4217 = vmatpush1.bf16.msra.mxu0 %v4194
        %4218 = vmatprep.subr.bf16.mxu0 0
        %4219 = vmatpush1.bf16.msra.mxu0 %v4195
        %4220 = vmatprep.subr.bf16.mxu0 0
        %4221 = vmatpush1.bf16.msra.mxu0 0
        %4222 = vmatprep.subr.bf16.mxu0 0
        %4223 = vmatpush1.bf16.msra.mxu0 0
        %4224 = vmatprep.subr.bf16.mxu0 0
        %4225 = vmatpush1.bf16.msra.mxu0 0
        %4226 = vmatprep.subr.bf16.mxu0 0
        %4227 = vmatpush1.bf16.msra.mxu0 0
        %4228 = vmatprep.subr.bf16.mxu0 0
        %4229 = vmatpush1.bf16.msra.mxu0 0
        %4230 = vmatprep.subr.bf16.mxu0 0
        %4231 = vmatpush1.bf16.msra.mxu0 0
        %4232 = vmatprep.subr.bf16.mxu0 0
        %4233 = vmatpush1.bf16.msra.mxu0 0
        %4234 = vmatprep.subr.bf16.mxu0 0
        %4235 = vmatpush1.bf16.msra.mxu0 0
        %4236 = vmatprep.subr.bf16.mxu0 0
        %4237 = vmatpush1.bf16.msra.mxu0 0
        %4238 = vmatprep.subr.bf16.mxu0 0
        %4239 = vmatpush1.bf16.msra.mxu0 0
        %4240 = vmatprep.subr.bf16.mxu0 0
        %4241 = vmatpush1.bf16.msra.mxu0 0
        %4242 = vmatprep.subr.bf16.mxu0 0
        %4243 = vmatpush1.bf16.msra.mxu0 0
        %4244 = vmatprep.mubr.bf16.mxu0 0
        %4245 = vmatmul.mubr.bf16.gmra.mrb[0].mxu0 %v4201
        %v4246 = vpop.f32.mrb[0].mxu0
        %v4247 = vadd.f32 0.0, %v4246
        %v4248 = vpop.f32.mrb[0].mxu0
        %v4249 = vpop.f32.mrb[0].mxu0
        %v4250 = vadd.f32 0.0, %v4249
        %v4251 = vpop.f32.mrb[0].mxu0
        %4252 = vmatprep.mubr.bf16.mxu0 0
        %4253 = vmatmul.mubr.bf16.gmra.mrb[0].mxu0 %v4204
        %v4254 = vpop.f32.mrb[0].mxu0
        %v4255 = vadd.f32 0.0, %v4254
        %v4256 = vpop.f32.mrb[0].mxu0
        %v4257 = vpop.f32.mrb[0].mxu0
        %v4258 = vadd.f32 0.0, %v4257
        %v4259 = vpop.f32.mrb[0].mxu0
        %4260 = vmatprep.mubr.bf16.mxu0 0
        %4261 = vmatmul.mubr.bf16.gmra.mrb[0].mxu0 %v4207
        %v4262 = vpop.f32.mrb[0].mxu0
        %v4263 = vadd.f32 0.0, %v4262
        %v4264 = vpop.f32.mrb[0].mxu0
        %v4265 = vpop.f32.mrb[0].mxu0
        %v4266 = vadd.f32 0.0, %v4265
        %v4267 = vpop.f32.mrb[0].mxu0
        %4268 = vmatprep.mubr.bf16.mxu0 0
        %4269 = vmatmul.mubr.bf16.gmra.mrb[0].mxu0 %v4210
        %v4270 = vpop.f32.mrb[0].mxu0
        %v4271 = vadd.f32 0.0, %v4270
        %v4272 = vpop.f32.mrb[0].mxu0
        %v4273 = vpop.f32.mrb[0].mxu0
        %v4274 = vadd.f32 0.0, %v4273
        %v4275 = vpop.f32.mrb[0].mxu0
        %4276 = vdwg.mxu0
        %v4277 = vadd.f32 %v4147, %v4247
        %v4278 = vadd.f32 %v4148, %v4250
        %v4279 = vadd.f32 %v4149, %v4255
        %v4280 = vadd.f32 %v4150, %v4258
        %v4281 = vadd.f32 %v4151, %v4263
        %v4282 = vadd.f32 %v4152, %v4266
        %v4283 = vadd.f32 %v4153, %v4271
        %v4284 = vadd.f32 %v4154, %v4274
        %v4285 = vld [vmem:[%s1642 + $0x2] sm:$0xff]
        %v4286 = vld [vmem:[%s1642 + $0x12] sm:$0xff]
        %v4287 = vld [vmem:[%s1642 + $0x22] sm:$0xff]
        %v4288 = vld [vmem:[%s1642 + $0x32] sm:$0xff]
        %v4289 = vld [vmem:[%s1642 + $0x42] sm:$0xff]
        %v4290 = vld [vmem:[%s1642 + $0x52] sm:$0xff]
        %v4291 = vld [vmem:[%s1642 + $0x62] sm:$0xff]
        %v4292 = vld [vmem:[%s1642 + $0x72] sm:$0xff]
        %v4293 = vpack.c.bf16 %v4286, %v4285
        %v4294 = vpack.c.bf16 %v4288, %v4287
        %v4295 = vpack.c.bf16 %v4290, %v4289
        %v4296 = vpack.c.bf16 %v4292, %v4291
        %s4297 = scalar_lea.vmem %s3, 832
        %v4298 = vld [vmem:[%s4297] sm:$0xf]
        %v4299 = vld [vmem:[%s4297 + $0x4] sm:$0xf]
        %v4300 = vld [vmem:[%s4297 + $0x8] sm:$0xf]
        %v4301 = vld [vmem:[%s4297 + $0xc] sm:$0xf]
        %v4302 = vld [vmem:[%s4297 + $0x10] sm:$0xf]
        %v4303 = vld [vmem:[%s4297 + $0x14] sm:$0xf]
        %v4304 = vld [vmem:[%s4297 + $0x18] sm:$0xf]
        %v4305 = vld [vmem:[%s4297 + $0x1c] sm:$0xf]
        %v4314 = vunpack.c.l.b16 %v4298
        %v4315 = vunpack.c.l.b16 %v4299
        %v4316 = vunpack.c.l.b16 %v4300
        %v4317 = vunpack.c.l.b16 %v4301
        %v4318 = vunpack.c.l.b16 %v4302
        %v4319 = vunpack.c.l.b16 %v4303
        %v4320 = vunpack.c.l.b16 %v4304
        %v4321 = vunpack.c.l.b16 %v4305
        %v4322 = vpack.c.b16 %v4315, %v4314
        %v4323 = vpack.c.b16 %v4317, %v4316
        %v4324 = vpack.c.b16 %v4319, %v4318
        %v4325 = vpack.c.b16 %v4321, %v4320
        %v4331 = vsel %vm243, %v4293, 0
        %v4334 = vsel %vm243, %v4294, 0
        %v4337 = vsel %vm243, %v4295, 0
        %v4340 = vsel %vm243, %v4296, 0
        %4342 = vmatprep.subr.bf16.mxu0 0
        %4343 = vmatpush1.bf16.msra.mxu0 %v4322
        %4344 = vmatprep.subr.bf16.mxu0 0
        %4345 = vmatpush1.bf16.msra.mxu0 %v4323
        %4346 = vmatprep.subr.bf16.mxu0 0
        %4347 = vmatpush1.bf16.msra.mxu0 %v4324
        %4348 = vmatprep.subr.bf16.mxu0 0
        %4349 = vmatpush1.bf16.msra.mxu0 %v4325
        %4350 = vmatprep.subr.bf16.mxu0 0
        %4351 = vmatpush1.bf16.msra.mxu0 0
        %4352 = vmatprep.subr.bf16.mxu0 0
        %4353 = vmatpush1.bf16.msra.mxu0 0
        %4354 = vmatprep.subr.bf16.mxu0 0
        %4355 = vmatpush1.bf16.msra.mxu0 0
        %4356 = vmatprep.subr.bf16.mxu0 0
        %4357 = vmatpush1.bf16.msra.mxu0 0
        %4358 = vmatprep.subr.bf16.mxu0 0
        %4359 = vmatpush1.bf16.msra.mxu0 0
        %4360 = vmatprep.subr.bf16.mxu0 0
        %4361 = vmatpush1.bf16.msra.mxu0 0
        %4362 = vmatprep.subr.bf16.mxu0 0
        %4363 = vmatpush1.bf16.msra.mxu0 0
        %4364 = vmatprep.subr.bf16.mxu0 0
        %4365 = vmatpush1.bf16.msra.mxu0 0
        %4366 = vmatprep.subr.bf16.mxu0 0
        %4367 = vmatpush1.bf16.msra.mxu0 0
        %4368 = vmatprep.subr.bf16.mxu0 0
        %4369 = vmatpush1.bf16.msra.mxu0 0
        %4370 = vmatprep.subr.bf16.mxu0 0
        %4371 = vmatpush1.bf16.msra.mxu0 0
        %4372 = vmatprep.subr.bf16.mxu0 0
        %4373 = vmatpush1.bf16.msra.mxu0 0
        %4374 = vmatprep.mubr.bf16.mxu0 0
        %4375 = vmatmul.mubr.bf16.gmra.mrb[0].mxu0 %v4331
        %v4376 = vpop.f32.mrb[0].mxu0
        %v4377 = vadd.f32 0.0, %v4376
        %v4378 = vpop.f32.mrb[0].mxu0
        %v4379 = vpop.f32.mrb[0].mxu0
        %v4380 = vadd.f32 0.0, %v4379
        %v4381 = vpop.f32.mrb[0].mxu0
        %4382 = vmatprep.mubr.bf16.mxu0 0
        %4383 = vmatmul.mubr.bf16.gmra.mrb[0].mxu0 %v4334
        %v4384 = vpop.f32.mrb[0].mxu0
        %v4385 = vadd.f32 0.0, %v4384
        %v4386 = vpop.f32.mrb[0].mxu0
        %v4387 = vpop.f32.mrb[0].mxu0
        %v4388 = vadd.f32 0.0, %v4387
        %v4389 = vpop.f32.mrb[0].mxu0
        %4390 = vmatprep.mubr.bf16.mxu0 0
        %4391 = vmatmul.mubr.bf16.gmra.mrb[0].mxu0 %v4337
        %v4392 = vpop.f32.mrb[0].mxu0
        %v4393 = vadd.f32 0.0, %v4392
        %v4394 = vpop.f32.mrb[0].mxu0
        %v4395 = vpop.f32.mrb[0].mxu0
        %v4396 = vadd.f32 0.0, %v4395
        %v4397 = vpop.f32.mrb[0].mxu0
        %4398 = vmatprep.mubr.bf16.mxu0 0
        %4399 = vmatmul.mubr.bf16.gmra.mrb[0].mxu0 %v4340
        %v4400 = vpop.f32.mrb[0].mxu0
        %v4401 = vadd.f32 0.0, %v4400
        %v4402 = vpop.f32.mrb[0].mxu0
        %v4403 = vpop.f32.mrb[0].mxu0
        %v4404 = vadd.f32 0.0, %v4403
        %v4405 = vpop.f32.mrb[0].mxu0
        %4406 = vdwg.mxu0
        %v4407 = vadd.f32 %v4277, %v4377
        %v4408 = vadd.f32 %v4278, %v4380
        %v4409 = vadd.f32 %v4279, %v4385
        %v4410 = vadd.f32 %v4280, %v4388
        %v4411 = vadd.f32 %v4281, %v4393
        %v4412 = vadd.f32 %v4282, %v4396
        %v4413 = vadd.f32 %v4283, %v4401
        %v4414 = vadd.f32 %v4284, %v4404
        %v4415 = vld [vmem:[%s4 + $0x3] sm:$0x1]
        %v4416 = vlaneseq
        %v4417 = vshrl.u32 %v4416, 7
        %v4418 = vsub.s32 0, %v4417
        %v4419 = vrot.slane %v4415, %v4418
        %v4420 = vadd.f32 %v4407, %v4419
        %v4421 = vadd.f32 %v4408, %v4419
        %v4422 = vadd.f32 %v4409, %v4419
        %v4423 = vadd.f32 %v4410, %v4419
        %v4424 = vadd.f32 %v4411, %v4419
        %v4425 = vadd.f32 %v4412, %v4419
        %v4426 = vadd.f32 %v4413, %v4419
        %v4427 = vadd.f32 %v4414, %v4419
        %v4428 = vadd.f32 %v4420, %v2062
        %v4429 = vadd.f32 %v4421, %v2063
        %v4430 = vadd.f32 %v4422, %v2064
        %v4431 = vadd.f32 %v4423, %v2065
        %v4432 = vadd.f32 %v4424, %v2066
        %v4433 = vadd.f32 %v4425, %v2067
        %v4434 = vadd.f32 %v4426, %v2068
        %v4435 = vadd.f32 %v4427, %v2069
        %v4436 = vmax.f32 %v4428, 0.0
        %v4437 = vmax.f32 %v4429, 0.0
        %v4438 = vmax.f32 %v4430, 0.0
        %v4439 = vmax.f32 %v4431, 0.0
        %v4440 = vmax.f32 %v4432, 0.0
        %v4441 = vmax.f32 %v4433, 0.0
        %v4442 = vmax.f32 %v4434, 0.0
        %v4443 = vmax.f32 %v4435, 0.0
        %v4444 = vsel %vm243, %v4436, 0.0
        %v4445 = vsel %vm243, %v4437, 0.0
        %v4446 = vadd.f32 %v4444, %v4445
        %v4447 = vsel %vm243, %v4438, 0.0
        %v4448 = vadd.f32 %v4446, %v4447
        %v4449 = vsel %vm243, %v4439, 0.0
        %v4450 = vadd.f32 %v4448, %v4449
        %v4451 = vsel %vm243, %v4440, 0.0
        %v4452 = vadd.f32 %v4450, %v4451
        %v4453 = vsel %vm243, %v4441, 0.0
        %v4454 = vadd.f32 %v4452, %v4453
        %v4455 = vsel %vm243, %v4442, 0.0
        %v4456 = vadd.f32 %v4454, %v4455
        %v4457 = vsel %vm243, %v4443, 0.0
        %v4458 = vadd.f32 %v4456, %v4457
        %v4459 = vrot.slane %v4458, 4
        %v4460 = vadd.f32 %v4458, %v4459
        %v4461 = vrot.slane %v4460, 2
        %v4462 = vadd.f32 %v4460, %v4461
        %v4463 = vrot.slane %v4462, 1
        %v4464 = vadd.f32 %v4462, %v4463
        %v4465 = vrcp.pop 64.0
        %v4466 = vmul.f32 %v4464, %v4465
        %vm4467 = vcmask 516096
        %4468 = vst.msk [vmem:[%s231] sm:$0x1] %vm4467, %v4466
        %s4469 = sand.u32 %s142, 1
        %s4470 = scalar_lea.sflag [#allocation4], %s4469
        %s4471 = sand.u32 %s142, 1
        %s4472 = scalar_lea.vmem [#allocation3], %s4471
        // Predicated region
        $region41: #{specialized_resnet_cifar_forward.1} parent=39 // pred_check
          %p4473 = pneg %p152
        $region42: #{specialized_resnet_cifar_forward.1} parent=39 // pred_check_branch
          %4475 = sbr.rel (%p4473) target = $region44
        $region43: #{specialized_resnet_cifar_forward.1} parent=39 // pred_region
          %s4477 = ssub.s32 16, 16
          %4478 = vsyncadd %s4470, %s4477
          %s4479 = smul.addr %s19, 16
          %s4480 = scalar_lea.hbm %s5, %s4479
          %s4482 = sshll.u32 %s4472, 4
          %s4483 = int_to_ptr.vmem [resolvable:$true] %s4482
          %4485 = dma.vmem_to_hbm [thread:$0]  %s4483, 16, %s4480, %s4470
        $region44: #{specialized_resnet_cifar_forward.1} parent=39 // pred_fallthru
          _
      $region40: #{specialized_resnet_cifar_forward.1} parent=5 // pred_fallthru
        _
      %p4486 = scmp.le.s32.totalorder 2, %s14
      // Predicated region
      $region45: #{specialized_resnet_cifar_forward.1} parent=5 // pred_check
        %p4487 = pneg %p4486
      $region46: #{specialized_resnet_cifar_forward.1} parent=5 // pred_check_branch
        %4489 = sbr.rel (%p4487) target = $region48
      $region47: #{specialized_resnet_cifar_forward.1} parent=5 // pred_region
        %s4490 = ssub.s32 %s14, 2
        // Predicated region
        $region49: #{specialized_resnet_cifar_forward.1} parent=47 // pred_check
          %p4491 = pneg %p158
        $region50: #{specialized_resnet_cifar_forward.1} parent=47 // pred_check_branch
          %4493 = sbr.rel (%p4491) target = $region52
        $region51: #{specialized_resnet_cifar_forward.1} parent=47 // pred_region
          %s4494 = sand.u32 %s143, 1
          %s4495 = scalar_lea.sflag [#allocation4], %s4494
          %s4496 = sand.u32 %s143, 1
          %s4497 = scalar_lea.vmem [#allocation3], %s4496
          %4498 = dma.done %s4495, 16
        $region52: #{specialized_resnet_cifar_forward.1} parent=47 // pred_fallthru
          _
      $region48: #{specialized_resnet_cifar_forward.1} parent=5 // pred_fallthru
        _
    $region6: #{specialized_resnet_cifar_forward.1} parent=1 // loop_footer
      %s18 = sadd.s32 1, %s14
    $region7: #{specialized_resnet_cifar_forward.1} parent=1 // loop_footer_branch
      %13 = sbr.rel target = $region3
    $region8: #{specialized_resnet_cifar_forward.1} parent=1 // loop_exit
      _
    %4499 = vsyncpa [#allocation4], 1
    %s4500 = scalar_lea.sflag [#allocation4], 1
    %4501 = vsyncpa %s4500, 1

</llo_original>
